<compile_context>
chip_gen: v5e
topology: v5e:2x2
jax: 0.10.0
libtpu: 0.0.40
codegen_flags: <defaults>
</compile_context>

<pallas_src>
import functools

import jax
import jax.numpy as jnp
from jax.experimental import pallas as pl
from jax.experimental.pallas import tpu as pltpu


def _tree_lstm_kernel(x_ref, a_ref, wih_ref, whh_ref, b_ref, wfc_ref, bfc_ref,
                      o_ref, *, hop, n_hid, matmul_dtype):
    # x_ref:   [M, n_in]   stacked node features (M = graphs_per_block * N)
    # a_ref:   [M, M]      block-diagonal dense adjacency
    # wih_ref: [n_in, 4H]  LSTMCell weight_ih^T (gate order i,f,g,o; g cols x2)
    # whh_ref: [H, 4H]     LSTMCell weight_hh^T (g cols x2)
    # b_ref:   [1, 4H]     bias_ih + bias_hh    (g cols x2)
    # wfc_ref: [H, n_out]  fc.weight^T
    # bfc_ref: [1, n_out]  fc.bias
    # o_ref:   [M, n_out]
    H = n_hid
    mm = matmul_dtype

    # MXU operands in `mm` (bf16 fast path), accumulation + elementwise in f32.
    x = x_ref[...].astype(mm)
    A = a_ref[...].astype(mm)
    w_ih = wih_ref[...].astype(mm)
    w_hh = whh_ref[...].astype(mm)
    bias = b_ref[...]  # f32

    # Hop-invariant input projection: computed once, reused every hop.
    xw = jnp.dot(x, w_ih, preferred_element_type=jnp.float32) + bias  # [M, 4H]

    def activate(gates):
        # One lane-dense sigmoid over the whole [M, 4H] slab (EUP tanh form).
        # g-gate pre-activations were pre-scaled by 2, so tanh(g)=2*sig(2g)-1.
        sig = 0.5 * jnp.tanh(0.5 * gates) + 0.5
        i_g = sig[:, 0 * H:1 * H]
        f_g = sig[:, 1 * H:2 * H]
        g_g = 2.0 * sig[:, 2 * H:3 * H] - 1.0
        o_g = sig[:, 3 * H:4 * H]
        return i_g, f_g, g_g, o_g

    def propagate(h):
        # torch.sparse.mm(A, h) for every stacked graph in one dense MXU
        # matmul (block-diagonal A => no cross-graph terms).
        return jnp.dot(A, h.astype(mm), preferred_element_type=jnp.float32)

    # --- Hop 0 peeled: h0 = c0 = 0  =>  gates = xw, f*c is dead work. ---
    i_g, _, g_g, o_g = activate(xw)
    c = i_g * g_g
    h = propagate(o_g * jnp.tanh(c))

    # --- Remaining hop-1 iterations, fully unrolled for the LLO scheduler. ---
    def body(_, carry):
        h, c = carry
        gates = xw + jnp.dot(h.astype(mm), w_hh,
                             preferred_element_type=jnp.float32)
        i_g, f_g, g_g, o_g = activate(gates)
        c_new = f_g * c + i_g * g_g
        h_new = propagate(o_g * jnp.tanh(c_new))
        return h_new, c_new

    h, _ = jax.lax.fori_loop(0, hop - 1, body, (h, c), unroll=True)

    # Fused epilogue: ReLU -> dropout2 (identity at inference) -> fc.
    h = jnp.maximum(h, 0.0)
    out = jnp.dot(h.astype(mm), wfc_ref[...].astype(mm),
                  preferred_element_type=jnp.float32) + bfc_ref[...]
    # n_out is tiny here; lane-padding the store only pays off at much larger
    # batch sizes, so the output is written as-is.
    o_ref[...] = out.astype(o_ref.dtype)


def tree_lstm_forward(x, A, params, *, hop, matmul_dtype=jnp.bfloat16,
                      graphs_per_block=None):
    """Fused TreeLSTM forward for a batch of graphs.

    x: [B, N, n_in] node features, A: [B, N, N] dense row-normalized adjacency.
    params: w_ih [n_in,4H], w_hh [H,4H], b [1,4H], w_fc [H,n_out], b_fc [1,n_out].
    """
    # TODO(synk): nn.Dropout(dropout) / nn.Dropout(dropout2) are identities
    # here (inference mode); no in-kernel RNG dropout is implemented.
    B, N, n_in = x.shape
    H = params["w_hh"].shape[0]
    n_out = params["w_fc"].shape[1]

    # Batch graphs so each gate matmul has >= 128 rows (fills the MXU).
    if graphs_per_block is None:
        graphs_per_block = min(B, max(1, -(-128 // N)))
        while B % graphs_per_block:
            graphs_per_block -= 1
    TB = graphs_per_block
    G = B // TB
    M = TB * N

    # Stack TB graphs' node features along rows; build the matching
    # block-diagonal adjacency (exactly equivalent to per-graph A @ h).
    x_stk = x.reshape(G, M, n_in).astype(jnp.float32)
    eye = jnp.eye(TB, dtype=jnp.float32)
    A_bd = jnp.einsum("gtij,tu->gtiuj",
                      A.reshape(G, TB, N, N).astype(jnp.float32),
                      eye).reshape(G, M, M)
    # TODO(synk): for large N (dense A near the VMEM limit, esp. v7x 64 MiB /
    # v5e's 16 MiB default scoped limit) switch A to row-tiled blocks or a
    # CSR gather instead of whole-array residency.

    # Pre-scale the g-gate (cell candidate) columns by 2 so the kernel can run
    # one lane-dense sigmoid over all 4H lanes and recover tanh(g) exactly.
    def scale_g(w):
        return w.astype(jnp.float32).at[..., 2 * H:3 * H].multiply(2.0)

    w_ih = scale_g(params["w_ih"])
    w_hh = scale_g(params["w_hh"])
    b = scale_g(params["b"])
    w_fc = params["w_fc"].astype(jnp.float32)
    b_fc = params["b_fc"].astype(jnp.float32)

    kernel = functools.partial(_tree_lstm_kernel, hop=hop, n_hid=H,
                               matmul_dtype=matmul_dtype)
    out = pl.pallas_call(
        kernel,
        out_shape=jax.ShapeDtypeStruct((G, M, n_out), jnp.float32),
        grid=(G,),
        in_specs=[
            pl.BlockSpec((None, M, n_in), lambda g: (g, 0, 0)),
            pl.BlockSpec((None, M, M), lambda g: (g, 0, 0)),
            pl.BlockSpec((n_in, 4 * H), lambda g: (0, 0)),
            pl.BlockSpec((H, 4 * H), lambda g: (0, 0)),
            pl.BlockSpec((1, 4 * H), lambda g: (0, 0)),
            pl.BlockSpec((H, n_out), lambda g: (0, 0)),
            pl.BlockSpec((1, n_out), lambda g: (0, 0)),
        ],
        out_specs=pl.BlockSpec((None, M, n_out), lambda g: (g, 0, 0)),
        compiler_params=pltpu.CompilerParams(
            dimension_semantics=("parallel",)),  # v7x: shard graphs over TCs
    )(x_stk, A_bd, w_ih, w_hh, b, w_fc, b_fc)
    return out.reshape(B, N, n_out)


def tree_lstm_reference(x, A, params, *, hop):
    """Pure-JAX reference mirroring the PyTorch module exactly (f32)."""
    w_ih, w_hh, b = params["w_ih"], params["w_hh"], params["b"]
    w_fc, b_fc = params["w_fc"], params["b_fc"]
    B, N, _ = x.shape
    H = w_hh.shape[0]
    hi = jax.lax.Precision.HIGHEST
    xw = jnp.einsum("bnd,dk->bnk", x, w_ih, precision=hi) + b
    h = jnp.zeros((B, N, H), jnp.float32)
    c = jnp.zeros((B, N, H), jnp.float32)
    for _ in range(hop):
        gates = xw + jnp.einsum("bnh,hk->bnk", h, w_hh, precision=hi)
        i_g = jax.nn.sigmoid(gates[..., 0 * H:1 * H])
        f_g = jax.nn.sigmoid(gates[..., 1 * H:2 * H])
        g_g = jnp.tanh(gates[..., 2 * H:3 * H])
        o_g = jax.nn.sigmoid(gates[..., 3 * H:4 * H])
        c = f_g * c + i_g * g_g
        h = o_g * jnp.tanh(c)
        h = jnp.einsum("bij,bjd->bid", A, h, precision=hi)
    h = jnp.maximum(h, 0.0)
    return jnp.einsum("bnh,ho->bno", h, w_fc, precision=hi) + b_fc


if __name__ == "__main__":
    key = jax.random.PRNGKey(0)
    kx, ksrc, kdst, k1, k2, k3, k4 = jax.random.split(key, 7)

    # Small shapes consistent with the module: n_in=16, n_hid=32, n_out=8,
    # hop=10; a batch of 8 small graphs with 32 nodes each.
    B, N, n_in, n_hid, n_out, hop = 8, 32, 16, 32, 8, 10

    x = jax.random.normal(kx, (B, N, n_in), jnp.float32)

    # Random sparse graphs stored as dense row-normalized [N, N] matrices
    # (stand-in for the torch.sparse adjacency g['A']).
    E = 96
    src = jax.random.randint(ksrc, (B, E), 0, N)
    dst = jax.random.randint(kdst, (B, E), 0, N)
    bidx = jnp.broadcast_to(jnp.arange(B)[:, None], (B, E))
    A = jnp.zeros((B, N, N), jnp.float32).at[bidx, dst, src].add(1.0)
    A = A / jnp.maximum(A.sum(axis=-1, keepdims=True), 1.0)

    # Deterministic synthetic parameters (LSTMCell default-style scale,
    # xavier*1.414 for fc per reset_parameters). Gate order: i, f, g, o.
    s = 1.0 / jnp.sqrt(jnp.float32(n_hid))
    params = dict(
        w_ih=s * jax.random.normal(k1, (n_in, 4 * n_hid), jnp.float32),
        w_hh=s * jax.random.normal(k2, (n_hid, 4 * n_hid), jnp.float32),
        b=s * jax.random.normal(k3, (1, 4 * n_hid), jnp.float32),
        w_fc=1.414 * jnp.sqrt(2.0 / (n_hid + n_out))
             * jax.random.normal(k4, (n_hid, n_out), jnp.float32),
        b_fc=jnp.zeros((1, n_out), jnp.float32),
    )

    ref = tree_lstm_reference(x, A, params, hop=hop)

    # 1) f32 matmul path: tight semantic check against the reference.
    out_f32 = tree_lstm_forward(x, A, params, hop=hop,
                                matmul_dtype=jnp.float32)
    out_f32 = jax.block_until_ready(out_f32)
    assert out_f32.shape == (B, N, n_out), out_f32.shape
    err32 = float(jnp.max(jnp.abs(out_f32 - ref)))
    assert jnp.allclose(out_f32, ref, rtol=1e-2, atol=1e-2), err32

    # 2) bf16-MXU fast path (f32 accumulation / elementwise): looser tolerance
    #    to absorb bf16 rounding compounded over hop=10 recurrent steps.
    out_bf16 = tree_lstm_forward(x, A, params, hop=hop,
                                 matmul_dtype=jnp.bfloat16)
    out_bf16 = jax.block_until_ready(out_bf16)
    errbf = float(jnp.max(jnp.abs(out_bf16 - ref)))
    assert jnp.allclose(out_bf16, ref, rtol=6e-2, atol=6e-2), errbf

    print("KERNEL_OK")
</pallas_src>

<mosaic_0001>
module attributes {stable_mosaic.version = 11 : i64} {
  func.func @_tree_lstm_kernel(%arg0: i32, %arg1: memref<1x128x16xf32, #tpu.memory_space<vmem>>, %arg2: memref<1x128x128xf32, #tpu.memory_space<vmem>>, %arg3: memref<16x128xf32, #tpu.memory_space<vmem>>, %arg4: memref<32x128xf32, #tpu.memory_space<vmem>>, %arg5: memref<1x128xf32, #tpu.memory_space<vmem>>, %arg6: memref<32x8xf32, #tpu.memory_space<vmem>>, %arg7: memref<1x8xf32, #tpu.memory_space<vmem>>, %arg8: memref<1x128x8xf32, #tpu.memory_space<vmem>>) attributes {dimension_semantics = [#tpu.dimension_semantics<parallel>], iteration_bounds = array<i64: 2>, scalar_prefetch = 0 : i64, scratch_operands = 0 : i64, tpu.core_type = #tpu.core_type<tc>, window_params = [{transform_indices = @transform_0, window_bounds = array<i64: 1, 128, 16>}, {transform_indices = @transform_1, window_bounds = array<i64: 1, 128, 128>}, {pipeline_mode = #tpu.pipeline_mode<synchronous>, transform_indices = @transform_2, window_bounds = array<i64: 16, 128>}, {pipeline_mode = #tpu.pipeline_mode<synchronous>, transform_indices = @transform_3, window_bounds = array<i64: 32, 128>}, {pipeline_mode = #tpu.pipeline_mode<synchronous>, transform_indices = @transform_4, window_bounds = array<i64: 1, 128>}, {pipeline_mode = #tpu.pipeline_mode<synchronous>, transform_indices = @transform_5, window_bounds = array<i64: 32, 8>}, {pipeline_mode = #tpu.pipeline_mode<synchronous>, transform_indices = @transform_6, window_bounds = array<i64: 1, 8>}, {transform_indices = @transform_7, window_bounds = array<i64: 1, 128, 8>}]} {
    %c0 = arith.constant 0 : index
    %c0_0 = arith.constant 0 : index
    %c0_1 = arith.constant 0 : index
    %0 = vector.load %arg1[%c0, %c0_0, %c0_1] : memref<1x128x16xf32, #tpu.memory_space<vmem>>, vector<1x128x16xf32>
    %1 = vector.shape_cast %0 : vector<1x128x16xf32> to vector<128x16xf32>
    %c0_2 = arith.constant 0 : index
    %c0_3 = arith.constant 0 : index
    %c0_4 = arith.constant 0 : index
    %2 = vector.load %arg2[%c0_2, %c0_3, %c0_4] : memref<1x128x128xf32, #tpu.memory_space<vmem>>, vector<1x128x128xf32>
    %3 = vector.shape_cast %2 : vector<1x128x128xf32> to vector<128x128xf32>
    %c0_5 = arith.constant 0 : index
    %c0_6 = arith.constant 0 : index
    %4 = vector.load %arg3[%c0_5, %c0_6] : memref<16x128xf32, #tpu.memory_space<vmem>>, vector<16x128xf32>
    %c0_7 = arith.constant 0 : index
    %c0_8 = arith.constant 0 : index
    %5 = vector.load %arg4[%c0_7, %c0_8] : memref<32x128xf32, #tpu.memory_space<vmem>>, vector<32x128xf32>
    %c0_9 = arith.constant 0 : index
    %c0_10 = arith.constant 0 : index
    %6 = vector.load %arg5[%c0_9, %c0_10] : memref<1x128xf32, #tpu.memory_space<vmem>>, vector<1x128xf32>
    %cst = arith.constant dense<0.000000e+00> : vector<128x128xf32>
    %7 = tpu.matmul %1, %4, %cst {dimension_numbers = #tpu.dot_dimension_numbers<[1], [0], [0], [1], [0, 0, 1, 1], [], []>} : vector<128x16xf32>, vector<16x128xf32>, vector<128x128xf32> -> vector<128x128xf32>
    %8 = vector.broadcast %6 : vector<1x128xf32> to vector<128x128xf32>
    %9 = arith.addf %7, %8 : vector<128x128xf32>
    %cst_11 = arith.constant 5.000000e-01 : f32
    %10 = vector.broadcast %cst_11 : f32 to vector<128x128xf32>
    %11 = arith.mulf %10, %9 : vector<128x128xf32>
    %12 = math.tanh %11 : vector<128x128xf32>
    %cst_12 = arith.constant 5.000000e-01 : f32
    %13 = vector.broadcast %cst_12 : f32 to vector<128x128xf32>
    %14 = arith.mulf %13, %12 : vector<128x128xf32>
    %cst_13 = arith.constant 5.000000e-01 : f32
    %15 = vector.broadcast %cst_13 : f32 to vector<128x128xf32>
    %16 = arith.addf %14, %15 : vector<128x128xf32>
    %17 = vector.extract_strided_slice %16 {offsets = [0, 0], sizes = [128, 32], strides = [1, 1]} : vector<128x128xf32> to vector<128x32xf32>
    %18 = vector.extract_strided_slice %16 {offsets = [0, 64], sizes = [128, 32], strides = [1, 1]} : vector<128x128xf32> to vector<128x32xf32>
    %cst_14 = arith.constant 2.000000e+00 : f32
    %19 = vector.broadcast %cst_14 : f32 to vector<128x32xf32>
    %20 = arith.mulf %19, %18 : vector<128x32xf32>
    %cst_15 = arith.constant 1.000000e+00 : f32
    %21 = vector.broadcast %cst_15 : f32 to vector<128x32xf32>
    %22 = arith.subf %20, %21 : vector<128x32xf32>
    %23 = vector.extract_strided_slice %16 {offsets = [0, 96], sizes = [128, 32], strides = [1, 1]} : vector<128x128xf32> to vector<128x32xf32>
    %24 = arith.mulf %17, %22 : vector<128x32xf32>
    %25 = math.tanh %24 : vector<128x32xf32>
    %26 = arith.mulf %23, %25 : vector<128x32xf32>
    %cst_16 = arith.constant dense<0.000000e+00> : vector<128x32xf32>
    %27 = tpu.matmul %3, %26, %cst_16 {dimension_numbers = #tpu.dot_dimension_numbers<[1], [0], [0], [1], [0, 0, 1, 1], [], []>} : vector<128x128xf32>, vector<128x32xf32>, vector<128x32xf32> -> vector<128x32xf32>
    %c0_i32 = arith.constant 0 : i32
    %cst_17 = arith.constant dense<0.000000e+00> : vector<128x128xf32>
    %28 = tpu.matmul %27, %5, %cst_17 {dimension_numbers = #tpu.dot_dimension_numbers<[1], [0], [0], [1], [0, 0, 1, 1], [], []>} : vector<128x32xf32>, vector<32x128xf32>, vector<128x128xf32> -> vector<128x128xf32>
    %29 = arith.addf %9, %28 : vector<128x128xf32>
    %cst_18 = arith.constant 5.000000e-01 : f32
    %30 = vector.broadcast %cst_18 : f32 to vector<128x128xf32>
    %31 = arith.mulf %30, %29 : vector<128x128xf32>
    %32 = math.tanh %31 : vector<128x128xf32>
    %cst_19 = arith.constant 5.000000e-01 : f32
    %33 = vector.broadcast %cst_19 : f32 to vector<128x128xf32>
    %34 = arith.mulf %33, %32 : vector<128x128xf32>
    %cst_20 = arith.constant 5.000000e-01 : f32
    %35 = vector.broadcast %cst_20 : f32 to vector<128x128xf32>
    %36 = arith.addf %34, %35 : vector<128x128xf32>
    %37 = vector.extract_strided_slice %36 {offsets = [0, 0], sizes = [128, 32], strides = [1, 1]} : vector<128x128xf32> to vector<128x32xf32>
    %38 = vector.extract_strided_slice %36 {offsets = [0, 32], sizes = [128, 32], strides = [1, 1]} : vector<128x128xf32> to vector<128x32xf32>
    %39 = vector.extract_strided_slice %36 {offsets = [0, 64], sizes = [128, 32], strides = [1, 1]} : vector<128x128xf32> to vector<128x32xf32>
    %cst_21 = arith.constant 2.000000e+00 : f32
    %40 = vector.broadcast %cst_21 : f32 to vector<128x32xf32>
    %41 = arith.mulf %40, %39 : vector<128x32xf32>
    %cst_22 = arith.constant 1.000000e+00 : f32
    %42 = vector.broadcast %cst_22 : f32 to vector<128x32xf32>
    %43 = arith.subf %41, %42 : vector<128x32xf32>
    %44 = vector.extract_strided_slice %36 {offsets = [0, 96], sizes = [128, 32], strides = [1, 1]} : vector<128x128xf32> to vector<128x32xf32>
    %45 = arith.mulf %38, %24 : vector<128x32xf32>
    %46 = arith.mulf %37, %43 : vector<128x32xf32>
    %47 = arith.addf %45, %46 : vector<128x32xf32>
    %48 = math.tanh %47 : vector<128x32xf32>
    %49 = arith.mulf %44, %48 : vector<128x32xf32>
    %cst_23 = arith.constant dense<0.000000e+00> : vector<128x32xf32>
    %50 = tpu.matmul %3, %49, %cst_23 {dimension_numbers = #tpu.dot_dimension_numbers<[1], [0], [0], [1], [0, 0, 1, 1], [], []>} : vector<128x128xf32>, vector<128x32xf32>, vector<128x32xf32> -> vector<128x32xf32>
    %c1_i32 = arith.constant 1 : i32
    %cst_24 = arith.constant dense<0.000000e+00> : vector<128x128xf32>
    %51 = tpu.matmul %50, %5, %cst_24 {dimension_numbers = #tpu.dot_dimension_numbers<[1], [0], [0], [1], [0, 0, 1, 1], [], []>} : vector<128x32xf32>, vector<32x128xf32>, vector<128x128xf32> -> vector<128x128xf32>
    %52 = arith.addf %9, %51 : vector<128x128xf32>
    %cst_25 = arith.constant 5.000000e-01 : f32
    %53 = vector.broadcast %cst_25 : f32 to vector<128x128xf32>
    %54 = arith.mulf %53, %52 : vector<128x128xf32>
    %55 = math.tanh %54 : vector<128x128xf32>
    %cst_26 = arith.constant 5.000000e-01 : f32
    %56 = vector.broadcast %cst_26 : f32 to vector<128x128xf32>
    %57 = arith.mulf %56, %55 : vector<128x128xf32>
    %cst_27 = arith.constant 5.000000e-01 : f32
    %58 = vector.broadcast %cst_27 : f32 to vector<128x128xf32>
    %59 = arith.addf %57, %58 : vector<128x128xf32>
    %60 = vector.extract_strided_slice %59 {offsets = [0, 0], sizes = [128, 32], strides = [1, 1]} : vector<128x128xf32> to vector<128x32xf32>
    %61 = vector.extract_strided_slice %59 {offsets = [0, 32], sizes = [128, 32], strides = [1, 1]} : vector<128x128xf32> to vector<128x32xf32>
    %62 = vector.extract_strided_slice %59 {offsets = [0, 64], sizes = [128, 32], strides = [1, 1]} : vector<128x128xf32> to vector<128x32xf32>
    %cst_28 = arith.constant 2.000000e+00 : f32
    %63 = vector.broadcast %cst_28 : f32 to vector<128x32xf32>
    %64 = arith.mulf %63, %62 : vector<128x32xf32>
    %cst_29 = arith.constant 1.000000e+00 : f32
    %65 = vector.broadcast %cst_29 : f32 to vector<128x32xf32>
    %66 = arith.subf %64, %65 : vector<128x32xf32>
    %67 = vector.extract_strided_slice %59 {offsets = [0, 96], sizes = [128, 32], strides = [1, 1]} : vector<128x128xf32> to vector<128x32xf32>
    %68 = arith.mulf %61, %47 : vector<128x32xf32>
    %69 = arith.mulf %60, %66 : vector<128x32xf32>
    %70 = arith.addf %68, %69 : vector<128x32xf32>
    %71 = math.tanh %70 : vector<128x32xf32>
    %72 = arith.mulf %67, %71 : vector<128x32xf32>
    %cst_30 = arith.constant dense<0.000000e+00> : vector<128x32xf32>
    %73 = tpu.matmul %3, %72, %cst_30 {dimension_numbers = #tpu.dot_dimension_numbers<[1], [0], [0], [1], [0, 0, 1, 1], [], []>} : vector<128x128xf32>, vector<128x32xf32>, vector<128x32xf32> -> vector<128x32xf32>
    %c2_i32 = arith.constant 2 : i32
    %cst_31 = arith.constant dense<0.000000e+00> : vector<128x128xf32>
    %74 = tpu.matmul %73, %5, %cst_31 {dimension_numbers = #tpu.dot_dimension_numbers<[1], [0], [0], [1], [0, 0, 1, 1], [], []>} : vector<128x32xf32>, vector<32x128xf32>, vector<128x128xf32> -> vector<128x128xf32>
    %75 = arith.addf %9, %74 : vector<128x128xf32>
    %cst_32 = arith.constant 5.000000e-01 : f32
    %76 = vector.broadcast %cst_32 : f32 to vector<128x128xf32>
    %77 = arith.mulf %76, %75 : vector<128x128xf32>
    %78 = math.tanh %77 : vector<128x128xf32>
    %cst_33 = arith.constant 5.000000e-01 : f32
    %79 = vector.broadcast %cst_33 : f32 to vector<128x128xf32>
    %80 = arith.mulf %79, %78 : vector<128x128xf32>
    %cst_34 = arith.constant 5.000000e-01 : f32
    %81 = vector.broadcast %cst_34 : f32 to vector<128x128xf32>
    %82 = arith.addf %80, %81 : vector<128x128xf32>
    %83 = vector.extract_strided_slice %82 {offsets = [0, 0], sizes = [128, 32], strides = [1, 1]} : vector<128x128xf32> to vector<128x32xf32>
    %84 = vector.extract_strided_slice %82 {offsets = [0, 32], sizes = [128, 32], strides = [1, 1]} : vector<128x128xf32> to vector<128x32xf32>
    %85 = vector.extract_strided_slice %82 {offsets = [0, 64], sizes = [128, 32], strides = [1, 1]} : vector<128x128xf32> to vector<128x32xf32>
    %cst_35 = arith.constant 2.000000e+00 : f32
    %86 = vector.broadcast %cst_35 : f32 to vector<128x32xf32>
    %87 = arith.mulf %86, %85 : vector<128x32xf32>
    %cst_36 = arith.constant 1.000000e+00 : f32
    %88 = vector.broadcast %cst_36 : f32 to vector<128x32xf32>
    %89 = arith.subf %87, %88 : vector<128x32xf32>
    %90 = vector.extract_strided_slice %82 {offsets = [0, 96], sizes = [128, 32], strides = [1, 1]} : vector<128x128xf32> to vector<128x32xf32>
    %91 = arith.mulf %84, %70 : vector<128x32xf32>
    %92 = arith.mulf %83, %89 : vector<128x32xf32>
    %93 = arith.addf %91, %92 : vector<128x32xf32>
    %94 = math.tanh %93 : vector<128x32xf32>
    %95 = arith.mulf %90, %94 : vector<128x32xf32>
    %cst_37 = arith.constant dense<0.000000e+00> : vector<128x32xf32>
    %96 = tpu.matmul %3, %95, %cst_37 {dimension_numbers = #tpu.dot_dimension_numbers<[1], [0], [0], [1], [0, 0, 1, 1], [], []>} : vector<128x128xf32>, vector<128x32xf32>, vector<128x32xf32> -> vector<128x32xf32>
    %c3_i32 = arith.constant 3 : i32
    %cst_38 = arith.constant dense<0.000000e+00> : vector<128x128xf32>
    %97 = tpu.matmul %96, %5, %cst_38 {dimension_numbers = #tpu.dot_dimension_numbers<[1], [0], [0], [1], [0, 0, 1, 1], [], []>} : vector<128x32xf32>, vector<32x128xf32>, vector<128x128xf32> -> vector<128x128xf32>
    %98 = arith.addf %9, %97 : vector<128x128xf32>
    %cst_39 = arith.constant 5.000000e-01 : f32
    %99 = vector.broadcast %cst_39 : f32 to vector<128x128xf32>
    %100 = arith.mulf %99, %98 : vector<128x128xf32>
    %101 = math.tanh %100 : vector<128x128xf32>
    %cst_40 = arith.constant 5.000000e-01 : f32
    %102 = vector.broadcast %cst_40 : f32 to vector<128x128xf32>
    %103 = arith.mulf %102, %101 : vector<128x128xf32>
    %cst_41 = arith.constant 5.000000e-01 : f32
    %104 = vector.broadcast %cst_41 : f32 to vector<128x128xf32>
    %105 = arith.addf %103, %104 : vector<128x128xf32>
    %106 = vector.extract_strided_slice %105 {offsets = [0, 0], sizes = [128, 32], strides = [1, 1]} : vector<128x128xf32> to vector<128x32xf32>
    %107 = vector.extract_strided_slice %105 {offsets = [0, 32], sizes = [128, 32], strides = [1, 1]} : vector<128x128xf32> to vector<128x32xf32>
    %108 = vector.extract_strided_slice %105 {offsets = [0, 64], sizes = [128, 32], strides = [1, 1]} : vector<128x128xf32> to vector<128x32xf32>
    %cst_42 = arith.constant 2.000000e+00 : f32
    %109 = vector.broadcast %cst_42 : f32 to vector<128x32xf32>
    %110 = arith.mulf %109, %108 : vector<128x32xf32>
    %cst_43 = arith.constant 1.000000e+00 : f32
    %111 = vector.broadcast %cst_43 : f32 to vector<128x32xf32>
    %112 = arith.subf %110, %111 : vector<128x32xf32>
    %113 = vector.extract_strided_slice %105 {offsets = [0, 96], sizes = [128, 32], strides = [1, 1]} : vector<128x128xf32> to vector<128x32xf32>
    %114 = arith.mulf %107, %93 : vector<128x32xf32>
    %115 = arith.mulf %106, %112 : vector<128x32xf32>
    %116 = arith.addf %114, %115 : vector<128x32xf32>
    %117 = math.tanh %116 : vector<128x32xf32>
    %118 = arith.mulf %113, %117 : vector<128x32xf32>
    %cst_44 = arith.constant dense<0.000000e+00> : vector<128x32xf32>
    %119 = tpu.matmul %3, %118, %cst_44 {dimension_numbers = #tpu.dot_dimension_numbers<[1], [0], [0], [1], [0, 0, 1, 1], [], []>} : vector<128x128xf32>, vector<128x32xf32>, vector<128x32xf32> -> vector<128x32xf32>
    %c4_i32 = arith.constant 4 : i32
    %cst_45 = arith.constant dense<0.000000e+00> : vector<128x128xf32>
    %120 = tpu.matmul %119, %5, %cst_45 {dimension_numbers = #tpu.dot_dimension_numbers<[1], [0], [0], [1], [0, 0, 1, 1], [], []>} : vector<128x32xf32>, vector<32x128xf32>, vector<128x128xf32> -> vector<128x128xf32>
    %121 = arith.addf %9, %120 : vector<128x128xf32>
    %cst_46 = arith.constant 5.000000e-01 : f32
    %122 = vector.broadcast %cst_46 : f32 to vector<128x128xf32>
    %123 = arith.mulf %122, %121 : vector<128x128xf32>
    %124 = math.tanh %123 : vector<128x128xf32>
    %cst_47 = arith.constant 5.000000e-01 : f32
    %125 = vector.broadcast %cst_47 : f32 to vector<128x128xf32>
    %126 = arith.mulf %125, %124 : vector<128x128xf32>
    %cst_48 = arith.constant 5.000000e-01 : f32
    %127 = vector.broadcast %cst_48 : f32 to vector<128x128xf32>
    %128 = arith.addf %126, %127 : vector<128x128xf32>
    %129 = vector.extract_strided_slice %128 {offsets = [0, 0], sizes = [128, 32], strides = [1, 1]} : vector<128x128xf32> to vector<128x32xf32>
    %130 = vector.extract_strided_slice %128 {offsets = [0, 32], sizes = [128, 32], strides = [1, 1]} : vector<128x128xf32> to vector<128x32xf32>
    %131 = vector.extract_strided_slice %128 {offsets = [0, 64], sizes = [128, 32], strides = [1, 1]} : vector<128x128xf32> to vector<128x32xf32>
    %cst_49 = arith.constant 2.000000e+00 : f32
    %132 = vector.broadcast %cst_49 : f32 to vector<128x32xf32>
    %133 = arith.mulf %132, %131 : vector<128x32xf32>
    %cst_50 = arith.constant 1.000000e+00 : f32
    %134 = vector.broadcast %cst_50 : f32 to vector<128x32xf32>
    %135 = arith.subf %133, %134 : vector<128x32xf32>
    %136 = vector.extract_strided_slice %128 {offsets = [0, 96], sizes = [128, 32], strides = [1, 1]} : vector<128x128xf32> to vector<128x32xf32>
    %137 = arith.mulf %130, %116 : vector<128x32xf32>
    %138 = arith.mulf %129, %135 : vector<128x32xf32>
    %139 = arith.addf %137, %138 : vector<128x32xf32>
    %140 = math.tanh %139 : vector<128x32xf32>
    %141 = arith.mulf %136, %140 : vector<128x32xf32>
    %cst_51 = arith.constant dense<0.000000e+00> : vector<128x32xf32>
    %142 = tpu.matmul %3, %141, %cst_51 {dimension_numbers = #tpu.dot_dimension_numbers<[1], [0], [0], [1], [0, 0, 1, 1], [], []>} : vector<128x128xf32>, vector<128x32xf32>, vector<128x32xf32> -> vector<128x32xf32>
    %c5_i32 = arith.constant 5 : i32
    %cst_52 = arith.constant dense<0.000000e+00> : vector<128x128xf32>
    %143 = tpu.matmul %142, %5, %cst_52 {dimension_numbers = #tpu.dot_dimension_numbers<[1], [0], [0], [1], [0, 0, 1, 1], [], []>} : vector<128x32xf32>, vector<32x128xf32>, vector<128x128xf32> -> vector<128x128xf32>
    %144 = arith.addf %9, %143 : vector<128x128xf32>
    %cst_53 = arith.constant 5.000000e-01 : f32
    %145 = vector.broadcast %cst_53 : f32 to vector<128x128xf32>
    %146 = arith.mulf %145, %144 : vector<128x128xf32>
    %147 = math.tanh %146 : vector<128x128xf32>
    %cst_54 = arith.constant 5.000000e-01 : f32
    %148 = vector.broadcast %cst_54 : f32 to vector<128x128xf32>
    %149 = arith.mulf %148, %147 : vector<128x128xf32>
    %cst_55 = arith.constant 5.000000e-01 : f32
    %150 = vector.broadcast %cst_55 : f32 to vector<128x128xf32>
    %151 = arith.addf %149, %150 : vector<128x128xf32>
    %152 = vector.extract_strided_slice %151 {offsets = [0, 0], sizes = [128, 32], strides = [1, 1]} : vector<128x128xf32> to vector<128x32xf32>
    %153 = vector.extract_strided_slice %151 {offsets = [0, 32], sizes = [128, 32], strides = [1, 1]} : vector<128x128xf32> to vector<128x32xf32>
    %154 = vector.extract_strided_slice %151 {offsets = [0, 64], sizes = [128, 32], strides = [1, 1]} : vector<128x128xf32> to vector<128x32xf32>
    %cst_56 = arith.constant 2.000000e+00 : f32
    %155 = vector.broadcast %cst_56 : f32 to vector<128x32xf32>
    %156 = arith.mulf %155, %154 : vector<128x32xf32>
    %cst_57 = arith.constant 1.000000e+00 : f32
    %157 = vector.broadcast %cst_57 : f32 to vector<128x32xf32>
    %158 = arith.subf %156, %157 : vector<128x32xf32>
    %159 = vector.extract_strided_slice %151 {offsets = [0, 96], sizes = [128, 32], strides = [1, 1]} : vector<128x128xf32> to vector<128x32xf32>
    %160 = arith.mulf %153, %139 : vector<128x32xf32>
    %161 = arith.mulf %152, %158 : vector<128x32xf32>
    %162 = arith.addf %160, %161 : vector<128x32xf32>
    %163 = math.tanh %162 : vector<128x32xf32>
    %164 = arith.mulf %159, %163 : vector<128x32xf32>
    %cst_58 = arith.constant dense<0.000000e+00> : vector<128x32xf32>
    %165 = tpu.matmul %3, %164, %cst_58 {dimension_numbers = #tpu.dot_dimension_numbers<[1], [0], [0], [1], [0, 0, 1, 1], [], []>} : vector<128x128xf32>, vector<128x32xf32>, vector<128x32xf32> -> vector<128x32xf32>
    %c6_i32 = arith.constant 6 : i32
    %cst_59 = arith.constant dense<0.000000e+00> : vector<128x128xf32>
    %166 = tpu.matmul %165, %5, %cst_59 {dimension_numbers = #tpu.dot_dimension_numbers<[1], [0], [0], [1], [0, 0, 1, 1], [], []>} : vector<128x32xf32>, vector<32x128xf32>, vector<128x128xf32> -> vector<128x128xf32>
    %167 = arith.addf %9, %166 : vector<128x128xf32>
    %cst_60 = arith.constant 5.000000e-01 : f32
    %168 = vector.broadcast %cst_60 : f32 to vector<128x128xf32>
    %169 = arith.mulf %168, %167 : vector<128x128xf32>
    %170 = math.tanh %169 : vector<128x128xf32>
    %cst_61 = arith.constant 5.000000e-01 : f32
    %171 = vector.broadcast %cst_61 : f32 to vector<128x128xf32>
    %172 = arith.mulf %171, %170 : vector<128x128xf32>
    %cst_62 = arith.constant 5.000000e-01 : f32
    %173 = vector.broadcast %cst_62 : f32 to vector<128x128xf32>
    %174 = arith.addf %172, %173 : vector<128x128xf32>
    %175 = vector.extract_strided_slice %174 {offsets = [0, 0], sizes = [128, 32], strides = [1, 1]} : vector<128x128xf32> to vector<128x32xf32>
    %176 = vector.extract_strided_slice %174 {offsets = [0, 32], sizes = [128, 32], strides = [1, 1]} : vector<128x128xf32> to vector<128x32xf32>
    %177 = vector.extract_strided_slice %174 {offsets = [0, 64], sizes = [128, 32], strides = [1, 1]} : vector<128x128xf32> to vector<128x32xf32>
    %cst_63 = arith.constant 2.000000e+00 : f32
    %178 = vector.broadcast %cst_63 : f32 to vector<128x32xf32>
    %179 = arith.mulf %178, %177 : vector<128x32xf32>
    %cst_64 = arith.constant 1.000000e+00 : f32
    %180 = vector.broadcast %cst_64 : f32 to vector<128x32xf32>
    %181 = arith.subf %179, %180 : vector<128x32xf32>
    %182 = vector.extract_strided_slice %174 {offsets = [0, 96], sizes = [128, 32], strides = [1, 1]} : vector<128x128xf32> to vector<128x32xf32>
    %183 = arith.mulf %176, %162 : vector<128x32xf32>
    %184 = arith.mulf %175, %181 : vector<128x32xf32>
    %185 = arith.addf %183, %184 : vector<128x32xf32>
    %186 = math.tanh %185 : vector<128x32xf32>
    %187 = arith.mulf %182, %186 : vector<128x32xf32>
    %cst_65 = arith.constant dense<0.000000e+00> : vector<128x32xf32>
    %188 = tpu.matmul %3, %187, %cst_65 {dimension_numbers = #tpu.dot_dimension_numbers<[1], [0], [0], [1], [0, 0, 1, 1], [], []>} : vector<128x128xf32>, vector<128x32xf32>, vector<128x32xf32> -> vector<128x32xf32>
    %c7_i32 = arith.constant 7 : i32
    %cst_66 = arith.constant dense<0.000000e+00> : vector<128x128xf32>
    %189 = tpu.matmul %188, %5, %cst_66 {dimension_numbers = #tpu.dot_dimension_numbers<[1], [0], [0], [1], [0, 0, 1, 1], [], []>} : vector<128x32xf32>, vector<32x128xf32>, vector<128x128xf32> -> vector<128x128xf32>
    %190 = arith.addf %9, %189 : vector<128x128xf32>
    %cst_67 = arith.constant 5.000000e-01 : f32
    %191 = vector.broadcast %cst_67 : f32 to vector<128x128xf32>
    %192 = arith.mulf %191, %190 : vector<128x128xf32>
    %193 = math.tanh %192 : vector<128x128xf32>
    %cst_68 = arith.constant 5.000000e-01 : f32
    %194 = vector.broadcast %cst_68 : f32 to vector<128x128xf32>
    %195 = arith.mulf %194, %193 : vector<128x128xf32>
    %cst_69 = arith.constant 5.000000e-01 : f32
    %196 = vector.broadcast %cst_69 : f32 to vector<128x128xf32>
    %197 = arith.addf %195, %196 : vector<128x128xf32>
    %198 = vector.extract_strided_slice %197 {offsets = [0, 0], sizes = [128, 32], strides = [1, 1]} : vector<128x128xf32> to vector<128x32xf32>
    %199 = vector.extract_strided_slice %197 {offsets = [0, 32], sizes = [128, 32], strides = [1, 1]} : vector<128x128xf32> to vector<128x32xf32>
    %200 = vector.extract_strided_slice %197 {offsets = [0, 64], sizes = [128, 32], strides = [1, 1]} : vector<128x128xf32> to vector<128x32xf32>
    %cst_70 = arith.constant 2.000000e+00 : f32
    %201 = vector.broadcast %cst_70 : f32 to vector<128x32xf32>
    %202 = arith.mulf %201, %200 : vector<128x32xf32>
    %cst_71 = arith.constant 1.000000e+00 : f32
    %203 = vector.broadcast %cst_71 : f32 to vector<128x32xf32>
    %204 = arith.subf %202, %203 : vector<128x32xf32>
    %205 = vector.extract_strided_slice %197 {offsets = [0, 96], sizes = [128, 32], strides = [1, 1]} : vector<128x128xf32> to vector<128x32xf32>
    %206 = arith.mulf %199, %185 : vector<128x32xf32>
    %207 = arith.mulf %198, %204 : vector<128x32xf32>
    %208 = arith.addf %206, %207 : vector<128x32xf32>
    %209 = math.tanh %208 : vector<128x32xf32>
    %210 = arith.mulf %205, %209 : vector<128x32xf32>
    %cst_72 = arith.constant dense<0.000000e+00> : vector<128x32xf32>
    %211 = tpu.matmul %3, %210, %cst_72 {dimension_numbers = #tpu.dot_dimension_numbers<[1], [0], [0], [1], [0, 0, 1, 1], [], []>} : vector<128x128xf32>, vector<128x32xf32>, vector<128x32xf32> -> vector<128x32xf32>
    %c8_i32 = arith.constant 8 : i32
    %cst_73 = arith.constant dense<0.000000e+00> : vector<128x128xf32>
    %212 = tpu.matmul %211, %5, %cst_73 {dimension_numbers = #tpu.dot_dimension_numbers<[1], [0], [0], [1], [0, 0, 1, 1], [], []>} : vector<128x32xf32>, vector<32x128xf32>, vector<128x128xf32> -> vector<128x128xf32>
    %213 = arith.addf %9, %212 : vector<128x128xf32>
    %cst_74 = arith.constant 5.000000e-01 : f32
    %214 = vector.broadcast %cst_74 : f32 to vector<128x128xf32>
    %215 = arith.mulf %214, %213 : vector<128x128xf32>
    %216 = math.tanh %215 : vector<128x128xf32>
    %cst_75 = arith.constant 5.000000e-01 : f32
    %217 = vector.broadcast %cst_75 : f32 to vector<128x128xf32>
    %218 = arith.mulf %217, %216 : vector<128x128xf32>
    %cst_76 = arith.constant 5.000000e-01 : f32
    %219 = vector.broadcast %cst_76 : f32 to vector<128x128xf32>
    %220 = arith.addf %218, %219 : vector<128x128xf32>
    %221 = vector.extract_strided_slice %220 {offsets = [0, 0], sizes = [128, 32], strides = [1, 1]} : vector<128x128xf32> to vector<128x32xf32>
    %222 = vector.extract_strided_slice %220 {offsets = [0, 32], sizes = [128, 32], strides = [1, 1]} : vector<128x128xf32> to vector<128x32xf32>
    %223 = vector.extract_strided_slice %220 {offsets = [0, 64], sizes = [128, 32], strides = [1, 1]} : vector<128x128xf32> to vector<128x32xf32>
    %cst_77 = arith.constant 2.000000e+00 : f32
    %224 = vector.broadcast %cst_77 : f32 to vector<128x32xf32>
    %225 = arith.mulf %224, %223 : vector<128x32xf32>
    %cst_78 = arith.constant 1.000000e+00 : f32
    %226 = vector.broadcast %cst_78 : f32 to vector<128x32xf32>
    %227 = arith.subf %225, %226 : vector<128x32xf32>
    %228 = vector.extract_strided_slice %220 {offsets = [0, 96], sizes = [128, 32], strides = [1, 1]} : vector<128x128xf32> to vector<128x32xf32>
    %229 = arith.mulf %222, %208 : vector<128x32xf32>
    %230 = arith.mulf %221, %227 : vector<128x32xf32>
    %231 = arith.addf %229, %230 : vector<128x32xf32>
    %232 = math.tanh %231 : vector<128x32xf32>
    %233 = arith.mulf %228, %232 : vector<128x32xf32>
    %cst_79 = arith.constant dense<0.000000e+00> : vector<128x32xf32>
    %234 = tpu.matmul %3, %233, %cst_79 {dimension_numbers = #tpu.dot_dimension_numbers<[1], [0], [0], [1], [0, 0, 1, 1], [], []>} : vector<128x128xf32>, vector<128x32xf32>, vector<128x32xf32> -> vector<128x32xf32>
    %cst_80 = arith.constant 0.000000e+00 : f32
    %235 = vector.broadcast %cst_80 : f32 to vector<128x32xf32>
    %236 = arith.maximumf %234, %235 : vector<128x32xf32>
    %c0_81 = arith.constant 0 : index
    %c0_82 = arith.constant 0 : index
    %237 = vector.load %arg6[%c0_81, %c0_82] : memref<32x8xf32, #tpu.memory_space<vmem>>, vector<32x8xf32>
    %cst_83 = arith.constant dense<0.000000e+00> : vector<128x8xf32>
    %238 = tpu.matmul %236, %237, %cst_83 {dimension_numbers = #tpu.dot_dimension_numbers<[1], [0], [0], [1], [0, 0, 1, 1], [], []>} : vector<128x32xf32>, vector<32x8xf32>, vector<128x8xf32> -> vector<128x8xf32>
    %c0_84 = arith.constant 0 : index
    %c0_85 = arith.constant 0 : index
    %239 = vector.load %arg7[%c0_84, %c0_85] : memref<1x8xf32, #tpu.memory_space<vmem>>, vector<1x8xf32>
    %240 = vector.broadcast %239 : vector<1x8xf32> to vector<128x8xf32>
    %241 = arith.addf %238, %240 : vector<128x8xf32>
    %c0_86 = arith.constant 0 : index
    %c0_87 = arith.constant 0 : index
    %c0_88 = arith.constant 0 : index
    %242 = vector.load %arg8[%c0_86, %c0_87, %c0_88] : memref<1x128x8xf32, #tpu.memory_space<vmem>>, vector<1x128x8xf32>
    %243 = vector.shape_cast %242 : vector<1x128x8xf32> to vector<128x8xf32>
    %244 = vector.shape_cast %241 : vector<128x8xf32> to vector<1x128x8xf32>
    tpu.vector_store %arg8[%c0_86, %c0_87, %c0_88], %244 {strides = array<i32>} : memref<1x128x8xf32, #tpu.memory_space<vmem>>, vector<1x128x8xf32>,
    return
  }
  func.func @transform_0(%arg0: i32) -> (i32, i32, i32) {
    %c0_i32 = arith.constant 0 : i32
    %c0_i32_0 = arith.constant 0 : i32
    %c0_i32_1 = arith.constant 0 : i32
    return %arg0, %c0_i32, %c0_i32_0 : i32, i32, i32
  }
  func.func @transform_1(%arg0: i32) -> (i32, i32, i32) {
    %c0_i32 = arith.constant 0 : i32
    %c0_i32_0 = arith.constant 0 : i32
    %c0_i32_1 = arith.constant 0 : i32
    return %arg0, %c0_i32, %c0_i32_0 : i32, i32, i32
  }
  func.func @transform_2(%arg0: i32) -> (i32, i32) {
    %c0_i32 = arith.constant 0 : i32
    %c0_i32_0 = arith.constant 0 : i32
    %c0_i32_1 = arith.constant 0 : i32
    return %c0_i32, %c0_i32_0 : i32, i32
  }
  func.func @transform_3(%arg0: i32) -> (i32, i32) {
    %c0_i32 = arith.constant 0 : i32
    %c0_i32_0 = arith.constant 0 : i32
    %c0_i32_1 = arith.constant 0 : i32
    return %c0_i32, %c0_i32_0 : i32, i32
  }
  func.func @transform_4(%arg0: i32) -> (i32, i32) {
    %c0_i32 = arith.constant 0 : i32
    %c0_i32_0 = arith.constant 0 : i32
    %c0_i32_1 = arith.constant 0 : i32
    return %c0_i32, %c0_i32_0 : i32, i32
  }
  func.func @transform_5(%arg0: i32) -> (i32, i32) {
    %c0_i32 = arith.constant 0 : i32
    %c0_i32_0 = arith.constant 0 : i32
    %c0_i32_1 = arith.constant 0 : i32
    return %c0_i32, %c0_i32_0 : i32, i32
  }
  func.func @transform_6(%arg0: i32) -> (i32, i32) {
    %c0_i32 = arith.constant 0 : i32
    %c0_i32_0 = arith.constant 0 : i32
    %c0_i32_1 = arith.constant 0 : i32
    return %c0_i32, %c0_i32_0 : i32, i32
  }
  func.func @transform_7(%arg0: i32) -> (i32, i32, i32) {
    %c0_i32 = arith.constant 0 : i32
    %c0_i32_0 = arith.constant 0 : i32
    %c0_i32_1 = arith.constant 0 : i32
    return %arg0, %c0_i32, %c0_i32_0 : i32, i32, i32
  }
}

</mosaic_0001>

<llo_original>
// kernel: tpu_custom_call.1
$region0: #{tpu_custom_call.1}
  #allocation0 [shape = 'u32[]', space=smem, size = 0x4, offset = 0x4, fixed_abs, tag = 'smem constant byte address 0x4 - core index']
  #allocation1 [shape = 'u32[72,128]{1,0:T(1,128)}', space=vmem, size = 0x9000, scoped, tag = 'internal scratch']
  %s0 = inlined_call_operand.vmem [shape: f32[2,128,16], index: 0, kind: input, shape index: {}]
  %s1 = inlined_call_operand.vmem [shape: f32[2,128,128], index: 1, kind: input, shape index: {}]
  %s2 = inlined_call_operand.hbm [shape: f32[16,128], index: 2, kind: input, shape index: {}]
  %s3 = inlined_call_operand.vmem [shape: f32[32,128], index: 3, kind: input, shape index: {}]
  %s4 = inlined_call_operand.vmem [shape: f32[1,128], index: 4, kind: input, shape index: {}]
  %s5 = inlined_call_operand.vmem [shape: f32[32,8], index: 5, kind: input, shape index: {}]
  %s6 = inlined_call_operand.vmem [shape: f32[1,8], index: 6, kind: input, shape index: {}]
  %s7 = inlined_call_operand.vmem [shape: f32[2,128,8], index: 7, kind: output, shape index: {}]
  %s8 = sld [smem:[#allocation0]]
  $region65: #{tpu_custom_call.1} parent=0
    _
  %s10 = ssub.s32 1, %s8
  %s11 = scalar_select 0, %s10, %s8
  $region1: #{tpu_custom_call.1} parent=0
    #allocation2 [shape = 'u8[8192]{0}', space=vmem, size = 0x2000, scoped, tag = 'input window, operand 2, single buffered']
    #allocation3 [shape = 's32[2]{0}', space=sflag, size = 0x8, scoped, tag = 'scoped memory for tpu_custom_call.1']
    %12 = vsyncpa [#allocation3], 0
    loop: start=0, step=1, limit=4
    $region2: #{tpu_custom_call.1} parent=1 // loop_pre_header
      _
    $region3: #{tpu_custom_call.1} parent=1 // loop_header
      %s14 = sphi 0, %s18
      %p15 = scmp.ge.s32.totalorder %s14, 4
      %s24 = sphi 0, %s26
      %s27 = sphi 0, %s24
      %s28 = sphi 0, %s27
      %s44 = sphi 0, %s28
      %s50 = sphi 0, %s52
      %s53 = sphi 0, %s50
      %s54 = sphi 0, %s53
      %s70 = sphi 0, %s54
      %s74 = sphi 0, %s74
      %s76 = sphi 0, %s74
      %s77 = sphi 0, %s76
      %s91 = sphi 0, %s77
      %s95 = sphi 0, %s95
      %s97 = sphi 0, %s95
      %s98 = sphi 0, %s97
      %s112 = sphi 0, %s98
      %s116 = sphi 0, %s116
      %s118 = sphi 0, %s116
      %s119 = sphi 0, %s118
      %s133 = sphi 0, %s119
      %s137 = sphi 0, %s137
      %s139 = sphi 0, %s137
      %s140 = sphi 0, %s139
      %s154 = sphi 0, %s140
      %s158 = sphi 0, %s158
      %s160 = sphi 0, %s158
      %s161 = sphi 0, %s160
      %s175 = sphi 0, %s161
      %s181 = sphi 0, %s183
      %s184 = sphi 0, %s181
      %s185 = sphi 0, %s184
      %s201 = sphi 0, %s185
    $region4: #{tpu_custom_call.1} parent=1 // loop_header_branch
      %17 = sbr.rel (%p15) target = $region8
    $region5: #{tpu_custom_call.1} parent=1 // loop_body
      %s19 = ssub.s32 %s14, 1
      %s20 = ssub.s32 %s14, 2
      %s21 = sadd.s32 %s14, 1
      %s22 = ssub.s32 %s14, %s21
      %p23 = scmp.eq.s32.totalorder %s22, 0
      %s25 = sadd.s32 %s24, 1
      %s26 = scalar_select %p23, %s24, %s25
      %p29 = pneg %p23
      %p30 = scmp.eq.s32.totalorder %s14, 1
      %p31 = por %p29, %p30
      %p32 = scmp.ne.s32.totalorder %s24, %s27
      %p33 = scmp.eq.s32.totalorder %s14, 0
      %p34 = por %p32, %p33
      %p35 = scmp.ne.s32.totalorder %s24, %s27
      %p36 = scmp.eq.s32.totalorder %s19, 1
      %p37 = por %p35, %p36
      %p38 = scmp.ne.s32.totalorder %s27, %s28
      %p39 = scmp.eq.s32.totalorder %s19, 0
      %p40 = por %p38, %p39
      %p41 = scmp.ne.s32.totalorder %s27, %s28
      %p42 = scmp.eq.s32.totalorder %s20, 1
      %p43 = por %p41, %p42
      %p45 = scmp.ne.s32.totalorder %s28, %s44
      %p46 = scmp.eq.s32.totalorder %s20, 0
      %p47 = por %p45, %p46
      %s48 = ssub.s32 %s14, %s21
      %p49 = scmp.eq.s32.totalorder %s48, 0
      %s51 = sadd.s32 %s50, 1
      %s52 = scalar_select %p49, %s50, %s51
      %p55 = pneg %p49
      %p56 = scmp.eq.s32.totalorder %s14, 1
      %p57 = por %p55, %p56
      %p58 = scmp.ne.s32.totalorder %s50, %s53
      %p59 = scmp.eq.s32.totalorder %s14, 0
      %p60 = por %p58, %p59
      %p61 = scmp.ne.s32.totalorder %s50, %s53
      %p62 = scmp.eq.s32.totalorder %s19, 1
      %p63 = por %p61, %p62
      %p64 = scmp.ne.s32.totalorder %s53, %s54
      %p65 = scmp.eq.s32.totalorder %s19, 0
      %p66 = por %p64, %p65
      %p67 = scmp.ne.s32.totalorder %s53, %s54
      %p68 = scmp.eq.s32.totalorder %s20, 1
      %p69 = por %p67, %p68
      %p71 = scmp.ne.s32.totalorder %s54, %s70
      %p72 = scmp.eq.s32.totalorder %s20, 0
      %p73 = por %p71, %p72
      %s75 = sadd.s32 %s74, 1
      %p78 = scmp.eq.s32.totalorder %s14, 1
      %p79 = scmp.ne.s32.totalorder %s74, %s76
      %p80 = scmp.eq.s32.totalorder %s14, 0
      %p81 = por %p79, %p80
      %p82 = scmp.ne.s32.totalorder %s74, %s76
      %p83 = scmp.eq.s32.totalorder %s19, 1
      %p84 = por %p82, %p83
      %p85 = scmp.ne.s32.totalorder %s76, %s77
      %p86 = scmp.eq.s32.totalorder %s19, 0
      %p87 = por %p85, %p86
      %p88 = scmp.ne.s32.totalorder %s76, %s77
      %p89 = scmp.eq.s32.totalorder %s20, 1
      %p90 = por %p88, %p89
      %p92 = scmp.ne.s32.totalorder %s77, %s91
      %p93 = scmp.eq.s32.totalorder %s20, 0
      %p94 = por %p92, %p93
      %s96 = sadd.s32 %s95, 1
      %p99 = scmp.eq.s32.totalorder %s14, 1
      %p100 = scmp.ne.s32.totalorder %s95, %s97
      %p101 = scmp.eq.s32.totalorder %s14, 0
      %p102 = por %p100, %p101
      %p103 = scmp.ne.s32.totalorder %s95, %s97
      %p104 = scmp.eq.s32.totalorder %s19, 1
      %p105 = por %p103, %p104
      %p106 = scmp.ne.s32.totalorder %s97, %s98
      %p107 = scmp.eq.s32.totalorder %s19, 0
      %p108 = por %p106, %p107
      %p109 = scmp.ne.s32.totalorder %s97, %s98
      %p110 = scmp.eq.s32.totalorder %s20, 1
      %p111 = por %p109, %p110
      %p113 = scmp.ne.s32.totalorder %s98, %s112
      %p114 = scmp.eq.s32.totalorder %s20, 0
      %p115 = por %p113, %p114
      %s117 = sadd.s32 %s116, 1
      %p120 = scmp.eq.s32.totalorder %s14, 1
      %p121 = scmp.ne.s32.totalorder %s116, %s118
      %p122 = scmp.eq.s32.totalorder %s14, 0
      %p123 = por %p121, %p122
      %p124 = scmp.ne.s32.totalorder %s116, %s118
      %p125 = scmp.eq.s32.totalorder %s19, 1
      %p126 = por %p124, %p125
      %p127 = scmp.ne.s32.totalorder %s118, %s119
      %p128 = scmp.eq.s32.totalorder %s19, 0
      %p129 = por %p127, %p128
      %p130 = scmp.ne.s32.totalorder %s118, %s119
      %p131 = scmp.eq.s32.totalorder %s20, 1
      %p132 = por %p130, %p131
      %p134 = scmp.ne.s32.totalorder %s119, %s133
      %p135 = scmp.eq.s32.totalorder %s20, 0
      %p136 = por %p134, %p135
      %s138 = sadd.s32 %s137, 1
      %p141 = scmp.eq.s32.totalorder %s14, 1
      %p142 = scmp.ne.s32.totalorder %s137, %s139
      %p143 = scmp.eq.s32.totalorder %s14, 0
      %p144 = por %p142, %p143
      %p145 = scmp.ne.s32.totalorder %s137, %s139
      %p146 = scmp.eq.s32.totalorder %s19, 1
      %p147 = por %p145, %p146
      %p148 = scmp.ne.s32.totalorder %s139, %s140
      %p149 = scmp.eq.s32.totalorder %s19, 0
      %p150 = por %p148, %p149
      %p151 = scmp.ne.s32.totalorder %s139, %s140
      %p152 = scmp.eq.s32.totalorder %s20, 1
      %p153 = por %p151, %p152
      %p155 = scmp.ne.s32.totalorder %s140, %s154
      %p156 = scmp.eq.s32.totalorder %s20, 0
      %p157 = por %p155, %p156
      %s159 = sadd.s32 %s158, 1
      %p162 = scmp.eq.s32.totalorder %s14, 1
      %p163 = scmp.ne.s32.totalorder %s158, %s160
      %p164 = scmp.eq.s32.totalorder %s14, 0
      %p165 = por %p163, %p164
      %p166 = scmp.ne.s32.totalorder %s158, %s160
      %p167 = scmp.eq.s32.totalorder %s19, 1
      %p168 = por %p166, %p167
      %p169 = scmp.ne.s32.totalorder %s160, %s161
      %p170 = scmp.eq.s32.totalorder %s19, 0
      %p171 = por %p169, %p170
      %p172 = scmp.ne.s32.totalorder %s160, %s161
      %p173 = scmp.eq.s32.totalorder %s20, 1
      %p174 = por %p172, %p173
      %p176 = scmp.ne.s32.totalorder %s161, %s175
      %p177 = scmp.eq.s32.totalorder %s20, 0
      %p178 = por %p176, %p177
      %s179 = ssub.s32 %s14, %s21
      %p180 = scmp.eq.s32.totalorder %s179, 0
      %s182 = sadd.s32 %s181, 1
      %s183 = scalar_select %p180, %s181, %s182
      %p186 = pneg %p180
      %p187 = scmp.eq.s32.totalorder %s14, 1
      %p188 = por %p186, %p187
      %p189 = scmp.ne.s32.totalorder %s181, %s184
      %p190 = scmp.eq.s32.totalorder %s14, 0
      %p191 = por %p189, %p190
      %p192 = scmp.ne.s32.totalorder %s181, %s184
      %p193 = scmp.eq.s32.totalorder %s19, 1
      %p194 = por %p192, %p193
      %p195 = scmp.ne.s32.totalorder %s184, %s185
      %p196 = scmp.eq.s32.totalorder %s19, 0
      %p197 = por %p195, %p196
      %p198 = scmp.ne.s32.totalorder %s184, %s185
      %p199 = scmp.eq.s32.totalorder %s20, 1
      %p200 = por %p198, %p199
      %p202 = scmp.ne.s32.totalorder %s185, %s201
      %p203 = scmp.eq.s32.totalorder %s20, 0
      %p204 = por %p202, %p203
      %p205 = scmp.le.s32.totalorder 1, %s14
      %p206 = scmp.lt.s32.totalorder %s14, 3
      %p207 = pnand %p205, %p206
      %p208 = pneg %p207
      // Predicated region
      $region9: #{tpu_custom_call.1} parent=5 // pred_check
        _
      $region10: #{tpu_custom_call.1} parent=5 // pred_check_branch
        %210 = sbr.rel (%p207) target = $region12
      $region11: #{tpu_custom_call.1} parent=5 // pred_region
        %s211 = ssub.s32 %s14, 1
        // Predicated region
        $region13: #{tpu_custom_call.1} parent=11 // pred_check
          %p212 = pneg %p87
        $region14: #{tpu_custom_call.1} parent=11 // pred_check_branch
          %214 = sbr.rel (%p212) target = $region16
        $region15: #{tpu_custom_call.1} parent=11 // pred_region
          %216 = vsyncadd [#allocation3], 0
          %s217 = sshll.u32 %s2, 4
          %s218 = int_to_ptr.hbm [resolvable:$true] %s217
          %s219 = sshll.u32 [#allocation2], 4
          %s220 = int_to_ptr.vmem [resolvable:$true] %s219
          %225 = dma.hbm_to_vmem [thread:$0]  %s218, 256, %s220, [#allocation3], 128, 128, 8
        $region16: #{tpu_custom_call.1} parent=11 // pred_fallthru
          _
        // Predicated region
        $region17: #{tpu_custom_call.1} parent=11 // pred_check
          %p226 = pneg %p108
        $region18: #{tpu_custom_call.1} parent=11 // pred_check_branch
          %228 = sbr.rel (%p226) target = $region20
        $region19: #{tpu_custom_call.1} parent=11 // pred_region
          _
        $region20: #{tpu_custom_call.1} parent=11 // pred_fallthru
          _
        // Predicated region
        $region21: #{tpu_custom_call.1} parent=11 // pred_check
          %p229 = pneg %p129
        $region22: #{tpu_custom_call.1} parent=11 // pred_check_branch
          %231 = sbr.rel (%p229) target = $region24
        $region23: #{tpu_custom_call.1} parent=11 // pred_region
          _
        $region24: #{tpu_custom_call.1} parent=11 // pred_fallthru
          _
        // Predicated region
        $region25: #{tpu_custom_call.1} parent=11 // pred_check
          %p232 = pneg %p150
        $region26: #{tpu_custom_call.1} parent=11 // pred_check_branch
          %234 = sbr.rel (%p232) target = $region28
        $region27: #{tpu_custom_call.1} parent=11 // pred_region
          _
        $region28: #{tpu_custom_call.1} parent=11 // pred_fallthru
          _
        // Predicated region
        $region29: #{tpu_custom_call.1} parent=11 // pred_check
          %p235 = pneg %p171
        $region30: #{tpu_custom_call.1} parent=11 // pred_check_branch
          %237 = sbr.rel (%p235) target = $region32
        $region31: #{tpu_custom_call.1} parent=11 // pred_region
          _
        $region32: #{tpu_custom_call.1} parent=11 // pred_fallthru
          _
      $region12: #{tpu_custom_call.1} parent=5 // pred_fallthru
        _
      %p238 = scmp.lt.s32.totalorder %s14, 2
      // Predicated region
      $region33: #{tpu_custom_call.1} parent=5 // pred_check
        %p239 = pneg %p238
      $region34: #{tpu_custom_call.1} parent=5 // pred_check_branch
        %241 = sbr.rel (%p239) target = $region36
      $region35: #{tpu_custom_call.1} parent=5 // pred_region
        // Predicated region
        $region37: #{tpu_custom_call.1} parent=35 // pred_check
          %p242 = pneg %p34
        $region38: #{tpu_custom_call.1} parent=35 // pred_check_branch
          %244 = sbr.rel (%p242) target = $region40
        $region39: #{tpu_custom_call.1} parent=35 // pred_region
          %p245 = scmp.lt.s32.totalorder %s14, 1
          %s246 = scalar_select %p245, %s14, 1
          %s247 = smul.addr %s246, 16
          %s248 = smul.addr %s247, 8
          %s249 = scalar_lea.vmem %s0, %s248
        $region40: #{tpu_custom_call.1} parent=35 // pred_fallthru
          _
        // Predicated region
        $region41: #{tpu_custom_call.1} parent=35 // pred_check
          %p250 = pneg %p60
        $region42: #{tpu_custom_call.1} parent=35 // pred_check_branch
          %252 = sbr.rel (%p250) target = $region44
        $region43: #{tpu_custom_call.1} parent=35 // pred_region
          %p253 = scmp.lt.s32.totalorder %s14, 1
          %s254 = scalar_select %p253, %s14, 1
          %s255 = smul.addr %s254, 16
          %s256 = smul.addr %s255, 8
          %s257 = scalar_lea.vmem %s1, %s256
        $region44: #{tpu_custom_call.1} parent=35 // pred_fallthru
          _
      $region36: #{tpu_custom_call.1} parent=5 // pred_fallthru
        _
      %p258 = scmp.le.s32.totalorder 1, %s14
      %p259 = scmp.lt.s32.totalorder %s14, 3
      %p260 = pnand %p258, %p259
      %p261 = pneg %p260
      // Predicated region
      $region45: #{tpu_custom_call.1} parent=5 // pred_check
        _
      $region46: #{tpu_custom_call.1} parent=5 // pred_check_branch
        %263 = sbr.rel (%p260) target = $region48
      $region47: #{tpu_custom_call.1} parent=5 // pred_region
        %s264 = ssub.s32 %s14, 1
        // Predicated region
        $region49: #{tpu_custom_call.1} parent=47 // pred_check
          %p265 = pneg %p87
        $region50: #{tpu_custom_call.1} parent=47 // pred_check_branch
          %267 = sbr.rel (%p265) target = $region52
        $region51: #{tpu_custom_call.1} parent=47 // pred_region
          %269 = dma.done [#allocation3], 256
        $region52: #{tpu_custom_call.1} parent=47 // pred_fallthru
          _
        %p270 = scmp.lt.s32.totalorder %s19, 1
        %s271 = scalar_select %p270, %s19, 1
        %s272 = smul.addr %s271, 16
        %s273 = smul.addr %s272, 8
        %s274 = scalar_lea.vmem %s0, %s273
        %p275 = pneg %p40
        %p276 = pneg %p37
        %p277 = scmp.lt.s32.totalorder %s19, 1
        %s278 = scalar_select %p277, %s19, 1
        %s279 = smul.addr %s278, 16
        %s280 = smul.addr %s279, 8
        %s281 = scalar_lea.vmem %s1, %s280
        %p282 = pneg %p66
        %p283 = pneg %p63
        %p284 = pneg %p87
        %p285 = pneg %p84
        %p286 = pneg %p108
        %p287 = pneg %p105
        %p288 = pneg %p129
        %p289 = pneg %p126
        %p290 = pneg %p150
        %p291 = pneg %p147
        %p292 = pneg %p171
        %p293 = pneg %p168
        %p294 = pneg %p197
        %p295 = pneg %p194
        %p296 = scmp.lt.s32.totalorder %s19, 1
        %s297 = scalar_select %p296, %s19, 1
        %s298 = smul.addr %s297, 16
        %s299 = smul.addr %s298, 8
        %s300 = scalar_lea.vmem %s7, %s299
        %p301 = scmp.lt.s32.totalorder %s19, 1
        %s302 = scalar_select %p301, %s19, 1
        %s303 = smul.addr %s302, 16
        %s304 = smul.addr %s303, 8
        %s305 = scalar_lea.vmem %s0, %s304
        %p306 = scmp.lt.s32.totalorder %s19, 1
        %s307 = scalar_select %p306, %s19, 1
        %s308 = smul.addr %s307, 16
        %s309 = smul.addr %s308, 8
        %s310 = scalar_lea.vmem %s1, %s309
        %p311 = scmp.lt.s32.totalorder %s19, 1
        %s312 = scalar_select %p311, %s19, 1
        %s313 = smul.addr %s312, 16
        %s314 = smul.addr %s313, 8
        %s315 = scalar_lea.vmem %s7, %s314
        %v316 = vld [vmem:[%s305] sm:$0xff]
        %v317 = vld [vmem:[%s305 + $0x8] sm:$0xff]
        %v318 = vld [vmem:[%s305 + $0x10] sm:$0xff]
        %v319 = vld [vmem:[%s305 + $0x18] sm:$0xff]
        %v320 = vld [vmem:[%s305 + $0x20] sm:$0xff]
        %v321 = vld [vmem:[%s305 + $0x28] sm:$0xff]
        %v322 = vld [vmem:[%s305 + $0x30] sm:$0xff]
        %v323 = vld [vmem:[%s305 + $0x38] sm:$0xff]
        %v324 = vld [vmem:[%s305 + $0x40] sm:$0xff]
        %v325 = vld [vmem:[%s305 + $0x48] sm:$0xff]
        %v326 = vld [vmem:[%s305 + $0x50] sm:$0xff]
        %v327 = vld [vmem:[%s305 + $0x58] sm:$0xff]
        %v328 = vld [vmem:[%s305 + $0x60] sm:$0xff]
        %v329 = vld [vmem:[%s305 + $0x68] sm:$0xff]
        %v330 = vld [vmem:[%s305 + $0x70] sm:$0xff]
        %v331 = vld [vmem:[%s305 + $0x78] sm:$0xff]
        %v332 = vld [vmem:[%s310] sm:$0xff]
        %v333 = vld [vmem:[%s310 + $0x8] sm:$0xff]
        %v334 = vld [vmem:[%s310 + $0x10] sm:$0xff]
        %v335 = vld [vmem:[%s310 + $0x18] sm:$0xff]
        %v336 = vld [vmem:[%s310 + $0x20] sm:$0xff]
        %v337 = vld [vmem:[%s310 + $0x28] sm:$0xff]
        %v338 = vld [vmem:[%s310 + $0x30] sm:$0xff]
        %v339 = vld [vmem:[%s310 + $0x38] sm:$0xff]
        %v340 = vld [vmem:[%s310 + $0x40] sm:$0xff]
        %v341 = vld [vmem:[%s310 + $0x48] sm:$0xff]
        %v342 = vld [vmem:[%s310 + $0x50] sm:$0xff]
        %v343 = vld [vmem:[%s310 + $0x58] sm:$0xff]
        %v344 = vld [vmem:[%s310 + $0x60] sm:$0xff]
        %v345 = vld [vmem:[%s310 + $0x68] sm:$0xff]
        %v346 = vld [vmem:[%s310 + $0x70] sm:$0xff]
        %v347 = vld [vmem:[%s310 + $0x78] sm:$0xff]
        %v348 = vld [vmem:[#allocation2] sm:$0xff]
        %v349 = vld [vmem:[#allocation2 + $0x8] sm:$0xff]
        %v350 = vld [vmem:[%s3] sm:$0xff]
        %v351 = vld [vmem:[%s3 + $0x8] sm:$0xff]
        %v352 = vld [vmem:[%s3 + $0x10] sm:$0xff]
        %v353 = vld [vmem:[%s3 + $0x18] sm:$0xff]
        %v354 = vld [vmem:[%s4] sm:$0x1]
        %v356 = vperm.slane %v354, 0
        %vm358 = vcmask 130048
        %v360 = vsel %vm358, %v316, 0
        %v363 = vsel %vm358, %v317, 0
        %v366 = vsel %vm358, %v318, 0
        %v369 = vsel %vm358, %v319, 0
        %v372 = vsel %vm358, %v320, 0
        %v375 = vsel %vm358, %v321, 0
        %v378 = vsel %vm358, %v322, 0
        %v381 = vsel %vm358, %v323, 0
        %v384 = vsel %vm358, %v324, 0
        %v387 = vsel %vm358, %v325, 0
        %v390 = vsel %vm358, %v326, 0
        %v393 = vsel %vm358, %v327, 0
        %v396 = vsel %vm358, %v328, 0
        %v399 = vsel %vm358, %v329, 0
        %v402 = vsel %vm358, %v330, 0
        %v405 = vsel %vm358, %v331, 0
        %407 = vmatpush.msra.mxu0 0.0
        %408 = vmatpush.msra.mxu0 0.0
        %409 = vmatpush.msra.mxu0 0.0
        %410 = vmatpush.msra.mxu0 0.0
        %411 = vmatpush.msra.mxu0 0.0
        %412 = vmatpush.msra.mxu0 0.0
        %413 = vmatpush.msra.mxu0 0.0
        %414 = vmatpush.msra.mxu0 0.0
        %415 = vmatpush.msra.mxu0 0.0
        %416 = vmatpush.msra.mxu0 0.0
        %417 = vmatpush.msra.mxu0 0.0
        %418 = vmatpush.msra.mxu0 0.0
        %419 = vmatpush.msra.mxu0 0.0
        %420 = vmatpush.msra.mxu0 0.0
        %421 = vmatpush.msra.mxu0 %v349
        %422 = vmatpush.msra.mxu0 %v348
        %423 = vmatmul.f32.gmra.mxu0 %v360
        %v424 = vpop.f32.mrf.mxu0
        %v425 = vadd.f32 %v356, %v424
        %426 = vmatmul.f32.gmra.mxu0 %v363
        %v427 = vpop.f32.mrf.mxu0
        %v428 = vadd.f32 %v356, %v427
        %429 = vmatmul.f32.gmra.mxu0 %v366
        %v430 = vpop.f32.mrf.mxu0
        %v431 = vadd.f32 %v356, %v430
        %432 = vmatmul.f32.gmra.mxu0 %v369
        %v433 = vpop.f32.mrf.mxu0
        %v434 = vadd.f32 %v356, %v433
        %435 = vmatmul.f32.gmra.mxu0 %v372
        %v436 = vpop.f32.mrf.mxu0
        %v437 = vadd.f32 %v356, %v436
        %438 = vmatmul.f32.gmra.mxu0 %v375
        %v439 = vpop.f32.mrf.mxu0
        %v440 = vadd.f32 %v356, %v439
        %441 = vmatmul.f32.gmra.mxu0 %v378
        %v442 = vpop.f32.mrf.mxu0
        %v443 = vadd.f32 %v356, %v442
        %444 = vmatmul.f32.gmra.mxu0 %v381
        %v445 = vpop.f32.mrf.mxu0
        %v446 = vadd.f32 %v356, %v445
        %447 = vmatmul.f32.gmra.mxu0 %v384
        %v448 = vpop.f32.mrf.mxu0
        %v449 = vadd.f32 %v356, %v448
        %450 = vmatmul.f32.gmra.mxu0 %v387
        %v451 = vpop.f32.mrf.mxu0
        %v452 = vadd.f32 %v356, %v451
        %453 = vmatmul.f32.gmra.mxu0 %v390
        %v454 = vpop.f32.mrf.mxu0
        %v455 = vadd.f32 %v356, %v454
        %456 = vmatmul.f32.gmra.mxu0 %v393
        %v457 = vpop.f32.mrf.mxu0
        %v458 = vadd.f32 %v356, %v457
        %459 = vmatmul.f32.gmra.mxu0 %v396
        %v460 = vpop.f32.mrf.mxu0
        %v461 = vadd.f32 %v356, %v460
        %462 = vmatmul.f32.gmra.mxu0 %v399
        %v463 = vpop.f32.mrf.mxu0
        %v464 = vadd.f32 %v356, %v463
        %465 = vmatmul.f32.gmra.mxu0 %v402
        %v466 = vpop.f32.mrf.mxu0
        %v467 = vadd.f32 %v356, %v466
        %468 = vmatmul.f32.gmra.mxu0 %v405
        %v469 = vpop.f32.mrf.mxu0
        %v470 = vadd.f32 %v356, %v469
        %471 = vdwg.mxu0
        %v472 = vmul.f32 %v425, 0.5
        %v473 = vmul.f32 %v428, 0.5
        %v474 = vmul.f32 %v431, 0.5
        %v475 = vmul.f32 %v434, 0.5
        %v476 = vmul.f32 %v437, 0.5
        %v477 = vmul.f32 %v440, 0.5
        %v478 = vmul.f32 %v443, 0.5
        %v479 = vmul.f32 %v446, 0.5
        %v480 = vmul.f32 %v449, 0.5
        %v481 = vmul.f32 %v452, 0.5
        %v482 = vmul.f32 %v455, 0.5
        %v483 = vmul.f32 %v458, 0.5
        %v484 = vmul.f32 %v461, 0.5
        %v485 = vmul.f32 %v464, 0.5
        %v486 = vmul.f32 %v467, 0.5
        %v487 = vmul.f32 %v470, 0.5
        %v488 = vtanh.pop %v472
        %v489 = vtanh.pop %v473
        %v490 = vtanh.pop %v474
        %v491 = vtanh.pop %v475
        %v492 = vtanh.pop %v476
        %v493 = vtanh.pop %v477
        %v494 = vtanh.pop %v478
        %v495 = vtanh.pop %v479
        %v496 = vtanh.pop %v480
        %v497 = vtanh.pop %v481
        %v498 = vtanh.pop %v482
        %v499 = vtanh.pop %v483
        %v500 = vtanh.pop %v484
        %v501 = vtanh.pop %v485
        %v502 = vtanh.pop %v486
        %v503 = vtanh.pop %v487
        %v504 = vmul.f32 %v488, 0.5
        %v505 = vmul.f32 %v489, 0.5
        %v506 = vmul.f32 %v490, 0.5
        %v507 = vmul.f32 %v491, 0.5
        %v508 = vmul.f32 %v492, 0.5
        %v509 = vmul.f32 %v493, 0.5
        %v510 = vmul.f32 %v494, 0.5
        %v511 = vmul.f32 %v495, 0.5
        %v512 = vmul.f32 %v496, 0.5
        %v513 = vmul.f32 %v497, 0.5
        %v514 = vmul.f32 %v498, 0.5
        %v515 = vmul.f32 %v499, 0.5
        %v516 = vmul.f32 %v500, 0.5
        %v517 = vmul.f32 %v501, 0.5
        %v518 = vmul.f32 %v502, 0.5
        %v519 = vmul.f32 %v503, 0.5
        %v520 = vadd.f32 %v504, 0.5
        %v521 = vadd.f32 %v505, 0.5
        %v522 = vadd.f32 %v506, 0.5
        %v523 = vadd.f32 %v507, 0.5
        %v524 = vadd.f32 %v508, 0.5
        %v525 = vadd.f32 %v509, 0.5
        %v526 = vadd.f32 %v510, 0.5
        %v527 = vadd.f32 %v511, 0.5
        %v528 = vadd.f32 %v512, 0.5
        %v529 = vadd.f32 %v513, 0.5
        %v530 = vadd.f32 %v514, 0.5
        %v531 = vadd.f32 %v515, 0.5
        %v532 = vadd.f32 %v516, 0.5
        %v533 = vadd.f32 %v517, 0.5
        %v534 = vadd.f32 %v518, 0.5
        %v535 = vadd.f32 %v519, 0.5
        %v536 = vmul.f32 %v520, 2.0
        %v537 = vmul.f32 %v521, 2.0
        %v538 = vmul.f32 %v522, 2.0
        %v539 = vmul.f32 %v523, 2.0
        %v540 = vmul.f32 %v524, 2.0
        %v541 = vmul.f32 %v525, 2.0
        %v542 = vmul.f32 %v526, 2.0
        %v543 = vmul.f32 %v527, 2.0
        %v544 = vmul.f32 %v528, 2.0
        %v545 = vmul.f32 %v529, 2.0
        %v546 = vmul.f32 %v530, 2.0
        %v547 = vmul.f32 %v531, 2.0
        %v548 = vmul.f32 %v532, 2.0
        %v549 = vmul.f32 %v533, 2.0
        %v550 = vmul.f32 %v534, 2.0
        %v551 = vmul.f32 %v535, 2.0
        %v552 = vsub.f32 %v536, 1.0
        %v553 = vsub.f32 %v537, 1.0
        %v554 = vsub.f32 %v538, 1.0
        %v555 = vsub.f32 %v539, 1.0
        %v556 = vsub.f32 %v540, 1.0
        %v557 = vsub.f32 %v541, 1.0
        %v558 = vsub.f32 %v542, 1.0
        %v559 = vsub.f32 %v543, 1.0
        %v560 = vsub.f32 %v544, 1.0
        %v561 = vsub.f32 %v545, 1.0
        %v562 = vsub.f32 %v546, 1.0
        %v563 = vsub.f32 %v547, 1.0
        %v564 = vsub.f32 %v548, 1.0
        %v565 = vsub.f32 %v549, 1.0
        %v566 = vsub.f32 %v550, 1.0
        %v567 = vsub.f32 %v551, 1.0
        %584 = vrot.lane.b32.xlu0 %v552, 64
        %v585 = vpop.permute.xlu0 %584
        %586 = vrot.lane.b32.xlu0 %v553, 64
        %v587 = vpop.permute.xlu0 %586
        %588 = vrot.lane.b32.xlu0 %v554, 64
        %v589 = vpop.permute.xlu0 %588
        %590 = vrot.lane.b32.xlu0 %v555, 64
        %v591 = vpop.permute.xlu0 %590
        %592 = vrot.lane.b32.xlu0 %v556, 64
        %v593 = vpop.permute.xlu0 %592
        %594 = vrot.lane.b32.xlu0 %v557, 64
        %v595 = vpop.permute.xlu0 %594
        %596 = vrot.lane.b32.xlu0 %v558, 64
        %v597 = vpop.permute.xlu0 %596
        %598 = vrot.lane.b32.xlu0 %v559, 64
        %v599 = vpop.permute.xlu0 %598
        %600 = vrot.lane.b32.xlu0 %v560, 64
        %v601 = vpop.permute.xlu0 %600
        %602 = vrot.lane.b32.xlu0 %v561, 64
        %v603 = vpop.permute.xlu0 %602
        %604 = vrot.lane.b32.xlu0 %v562, 64
        %v605 = vpop.permute.xlu0 %604
        %606 = vrot.lane.b32.xlu0 %v563, 64
        %v607 = vpop.permute.xlu0 %606
        %608 = vrot.lane.b32.xlu0 %v564, 64
        %v609 = vpop.permute.xlu0 %608
        %610 = vrot.lane.b32.xlu0 %v565, 64
        %v611 = vpop.permute.xlu0 %610
        %612 = vrot.lane.b32.xlu0 %v566, 64
        %v613 = vpop.permute.xlu0 %612
        %614 = vrot.lane.b32.xlu0 %v567, 64
        %v615 = vpop.permute.xlu0 %614
        %v632 = vmul.f32 %v520, %v585
        %v633 = vmul.f32 %v521, %v587
        %v634 = vmul.f32 %v522, %v589
        %v635 = vmul.f32 %v523, %v591
        %v636 = vmul.f32 %v524, %v593
        %v637 = vmul.f32 %v525, %v595
        %v638 = vmul.f32 %v526, %v597
        %v639 = vmul.f32 %v527, %v599
        %v640 = vmul.f32 %v528, %v601
        %v641 = vmul.f32 %v529, %v603
        %v642 = vmul.f32 %v530, %v605
        %v643 = vmul.f32 %v531, %v607
        %v644 = vmul.f32 %v532, %v609
        %v645 = vmul.f32 %v533, %v611
        %v646 = vmul.f32 %v534, %v613
        %v647 = vmul.f32 %v535, %v615
        %v648 = vtanh.pop %v632
        %v649 = vtanh.pop %v633
        %v650 = vtanh.pop %v634
        %v651 = vtanh.pop %v635
        %v652 = vtanh.pop %v636
        %v653 = vtanh.pop %v637
        %v654 = vtanh.pop %v638
        %v655 = vtanh.pop %v639
        %v656 = vtanh.pop %v640
        %v657 = vtanh.pop %v641
        %v658 = vtanh.pop %v642
        %v659 = vtanh.pop %v643
        %v660 = vtanh.pop %v644
        %v661 = vtanh.pop %v645
        %v662 = vtanh.pop %v646
        %v663 = vtanh.pop %v647
        %680 = vrot.lane.b32.xlu0 %v648, 96
        %v681 = vpop.permute.xlu0 %680
        %682 = vrot.lane.b32.xlu0 %v649, 96
        %v683 = vpop.permute.xlu0 %682
        %684 = vrot.lane.b32.xlu0 %v650, 96
        %v685 = vpop.permute.xlu0 %684
        %686 = vrot.lane.b32.xlu0 %v651, 96
        %v687 = vpop.permute.xlu0 %686
        %688 = vrot.lane.b32.xlu0 %v652, 96
        %v689 = vpop.permute.xlu0 %688
        %690 = vrot.lane.b32.xlu0 %v653, 96
        %v691 = vpop.permute.xlu0 %690
        %692 = vrot.lane.b32.xlu0 %v654, 96
        %v693 = vpop.permute.xlu0 %692
        %694 = vrot.lane.b32.xlu0 %v655, 96
        %v695 = vpop.permute.xlu0 %694
        %696 = vrot.lane.b32.xlu0 %v656, 96
        %v697 = vpop.permute.xlu0 %696
        %698 = vrot.lane.b32.xlu0 %v657, 96
        %v699 = vpop.permute.xlu0 %698
        %700 = vrot.lane.b32.xlu0 %v658, 96
        %v701 = vpop.permute.xlu0 %700
        %702 = vrot.lane.b32.xlu0 %v659, 96
        %v703 = vpop.permute.xlu0 %702
        %704 = vrot.lane.b32.xlu0 %v660, 96
        %v705 = vpop.permute.xlu0 %704
        %706 = vrot.lane.b32.xlu0 %v661, 96
        %v707 = vpop.permute.xlu0 %706
        %708 = vrot.lane.b32.xlu0 %v662, 96
        %v709 = vpop.permute.xlu0 %708
        %710 = vrot.lane.b32.xlu0 %v663, 96
        %v711 = vpop.permute.xlu0 %710
        %v728 = vmul.f32 %v520, %v681
        %v729 = vmul.f32 %v521, %v683
        %v730 = vmul.f32 %v522, %v685
        %v731 = vmul.f32 %v523, %v687
        %v732 = vmul.f32 %v524, %v689
        %v733 = vmul.f32 %v525, %v691
        %v734 = vmul.f32 %v526, %v693
        %v735 = vmul.f32 %v527, %v695
        %v736 = vmul.f32 %v528, %v697
        %v737 = vmul.f32 %v529, %v699
        %v738 = vmul.f32 %v530, %v701
        %v739 = vmul.f32 %v531, %v703
        %v740 = vmul.f32 %v532, %v705
        %v741 = vmul.f32 %v533, %v707
        %v742 = vmul.f32 %v534, %v709
        %v743 = vmul.f32 %v535, %v711
        %760 = vrot.lane.b32.xlu0 %v728, 32
        %v761 = vpop.permute.xlu0 %760
        %762 = vrot.lane.b32.xlu0 %v729, 32
        %v763 = vpop.permute.xlu0 %762
        %764 = vrot.lane.b32.xlu0 %v730, 32
        %v765 = vpop.permute.xlu0 %764
        %766 = vrot.lane.b32.xlu0 %v731, 32
        %v767 = vpop.permute.xlu0 %766
        %768 = vrot.lane.b32.xlu0 %v732, 32
        %v769 = vpop.permute.xlu0 %768
        %770 = vrot.lane.b32.xlu0 %v733, 32
        %v771 = vpop.permute.xlu0 %770
        %772 = vrot.lane.b32.xlu0 %v734, 32
        %v773 = vpop.permute.xlu0 %772
        %774 = vrot.lane.b32.xlu0 %v735, 32
        %v775 = vpop.permute.xlu0 %774
        %776 = vrot.lane.b32.xlu0 %v736, 32
        %v777 = vpop.permute.xlu0 %776
        %778 = vrot.lane.b32.xlu0 %v737, 32
        %v779 = vpop.permute.xlu0 %778
        %780 = vrot.lane.b32.xlu0 %v738, 32
        %v781 = vpop.permute.xlu0 %780
        %782 = vrot.lane.b32.xlu0 %v739, 32
        %v783 = vpop.permute.xlu0 %782
        %784 = vrot.lane.b32.xlu0 %v740, 32
        %v785 = vpop.permute.xlu0 %784
        %786 = vrot.lane.b32.xlu0 %v741, 32
        %v787 = vpop.permute.xlu0 %786
        %788 = vrot.lane.b32.xlu0 %v742, 32
        %v789 = vpop.permute.xlu0 %788
        %790 = vrot.lane.b32.xlu0 %v743, 32
        %v791 = vpop.permute.xlu0 %790
        %808 = vmatpush.msra.mxu0 %v791
        %809 = vmatpush.msra.mxu0 %v789
        %810 = vmatpush.msra.mxu0 %v787
        %811 = vmatpush.msra.mxu0 %v785
        %812 = vmatpush.msra.mxu0 %v783
        %813 = vmatpush.msra.mxu0 %v781
        %814 = vmatpush.msra.mxu0 %v779
        %815 = vmatpush.msra.mxu0 %v777
        %816 = vmatpush.msra.mxu0 %v775
        %817 = vmatpush.msra.mxu0 %v773
        %818 = vmatpush.msra.mxu0 %v771
        %819 = vmatpush.msra.mxu0 %v769
        %820 = vmatpush.msra.mxu0 %v767
        %821 = vmatpush.msra.mxu0 %v765
        %822 = vmatpush.msra.mxu0 %v763
        %823 = vmatpush.msra.mxu0 %v761
        %824 = vmatmul.f32.gmra.mxu0 %v332
        %v825 = vpop.f32.mrf.mxu0
        %v826 = vadd.f32 0.0, %v825
        %827 = vmatmul.f32.gmra.mxu0 %v333
        %v828 = vpop.f32.mrf.mxu0
        %v829 = vadd.f32 0.0, %v828
        %830 = vmatmul.f32.gmra.mxu0 %v334
        %v831 = vpop.f32.mrf.mxu0
        %v832 = vadd.f32 0.0, %v831
        %833 = vmatmul.f32.gmra.mxu0 %v335
        %v834 = vpop.f32.mrf.mxu0
        %v835 = vadd.f32 0.0, %v834
        %836 = vmatmul.f32.gmra.mxu0 %v336
        %v837 = vpop.f32.mrf.mxu0
        %v838 = vadd.f32 0.0, %v837
        %839 = vmatmul.f32.gmra.mxu0 %v337
        %v840 = vpop.f32.mrf.mxu0
        %v841 = vadd.f32 0.0, %v840
        %842 = vmatmul.f32.gmra.mxu0 %v338
        %v843 = vpop.f32.mrf.mxu0
        %v844 = vadd.f32 0.0, %v843
        %845 = vmatmul.f32.gmra.mxu0 %v339
        %v846 = vpop.f32.mrf.mxu0
        %v847 = vadd.f32 0.0, %v846
        %848 = vmatmul.f32.gmra.mxu0 %v340
        %v849 = vpop.f32.mrf.mxu0
        %v850 = vadd.f32 0.0, %v849
        %851 = vmatmul.f32.gmra.mxu0 %v341
        %v852 = vpop.f32.mrf.mxu0
        %v853 = vadd.f32 0.0, %v852
        %854 = vmatmul.f32.gmra.mxu0 %v342
        %v855 = vpop.f32.mrf.mxu0
        %v856 = vadd.f32 0.0, %v855
        %857 = vmatmul.f32.gmra.mxu0 %v343
        %v858 = vpop.f32.mrf.mxu0
        %v859 = vadd.f32 0.0, %v858
        %860 = vmatmul.f32.gmra.mxu0 %v344
        %v861 = vpop.f32.mrf.mxu0
        %v862 = vadd.f32 0.0, %v861
        %863 = vmatmul.f32.gmra.mxu0 %v345
        %v864 = vpop.f32.mrf.mxu0
        %v865 = vadd.f32 0.0, %v864
        %866 = vmatmul.f32.gmra.mxu0 %v346
        %v867 = vpop.f32.mrf.mxu0
        %v868 = vadd.f32 0.0, %v867
        %869 = vmatmul.f32.gmra.mxu0 %v347
        %v870 = vpop.f32.mrf.mxu0
        %v871 = vadd.f32 0.0, %v870
        %872 = vdwg.mxu0
        %vm873 = vcmask 261120
        %v875 = vsel %vm873, %v826, 0
        %v878 = vsel %vm873, %v829, 0
        %v881 = vsel %vm873, %v832, 0
        %v884 = vsel %vm873, %v835, 0
        %v887 = vsel %vm873, %v838, 0
        %v890 = vsel %vm873, %v841, 0
        %v893 = vsel %vm873, %v844, 0
        %v896 = vsel %vm873, %v847, 0
        %v899 = vsel %vm873, %v850, 0
        %v902 = vsel %vm873, %v853, 0
        %v905 = vsel %vm873, %v856, 0
        %v908 = vsel %vm873, %v859, 0
        %v911 = vsel %vm873, %v862, 0
        %v914 = vsel %vm873, %v865, 0
        %v917 = vsel %vm873, %v868, 0
        %v920 = vsel %vm873, %v871, 0
        %922 = vmatpush.msra.mxu0 0.0
        %923 = vmatpush.msra.mxu0 0.0
        %924 = vmatpush.msra.mxu0 0.0
        %925 = vmatpush.msra.mxu0 0.0
        %926 = vmatpush.msra.mxu0 0.0
        %927 = vmatpush.msra.mxu0 0.0
        %928 = vmatpush.msra.mxu0 0.0
        %929 = vmatpush.msra.mxu0 0.0
        %930 = vmatpush.msra.mxu0 0.0
        %931 = vmatpush.msra.mxu0 0.0
        %932 = vmatpush.msra.mxu0 0.0
        %933 = vmatpush.msra.mxu0 0.0
        %934 = vmatpush.msra.mxu0 %v353
        %935 = vmatpush.msra.mxu0 %v352
        %936 = vmatpush.msra.mxu0 %v351
        %937 = vmatpush.msra.mxu0 %v350
        %938 = vmatmul.f32.gmra.mxu0 %v875
        %v939 = vpop.f32.mrf.mxu0
        %v940 = vadd.f32 0.0, %v939
        %941 = vmatmul.f32.gmra.mxu0 %v878
        %v942 = vpop.f32.mrf.mxu0
        %v943 = vadd.f32 0.0, %v942
        %944 = vmatmul.f32.gmra.mxu0 %v881
        %v945 = vpop.f32.mrf.mxu0
        %v946 = vadd.f32 0.0, %v945
        %947 = vmatmul.f32.gmra.mxu0 %v884
        %v948 = vpop.f32.mrf.mxu0
        %v949 = vadd.f32 0.0, %v948
        %950 = vmatmul.f32.gmra.mxu0 %v887
        %v951 = vpop.f32.mrf.mxu0
        %v952 = vadd.f32 0.0, %v951
        %953 = vmatmul.f32.gmra.mxu0 %v890
        %v954 = vpop.f32.mrf.mxu0
        %v955 = vadd.f32 0.0, %v954
        %956 = vmatmul.f32.gmra.mxu0 %v893
        %v957 = vpop.f32.mrf.mxu0
        %v958 = vadd.f32 0.0, %v957
        %959 = vmatmul.f32.gmra.mxu0 %v896
        %v960 = vpop.f32.mrf.mxu0
        %v961 = vadd.f32 0.0, %v960
        %962 = vmatmul.f32.gmra.mxu0 %v899
        %v963 = vpop.f32.mrf.mxu0
        %v964 = vadd.f32 0.0, %v963
        %965 = vmatmul.f32.gmra.mxu0 %v902
        %v966 = vpop.f32.mrf.mxu0
        %v967 = vadd.f32 0.0, %v966
        %968 = vmatmul.f32.gmra.mxu0 %v905
        %v969 = vpop.f32.mrf.mxu0
        %v970 = vadd.f32 0.0, %v969
        %971 = vmatmul.f32.gmra.mxu0 %v908
        %v972 = vpop.f32.mrf.mxu0
        %v973 = vadd.f32 0.0, %v972
        %974 = vmatmul.f32.gmra.mxu0 %v911
        %v975 = vpop.f32.mrf.mxu0
        %v976 = vadd.f32 0.0, %v975
        %977 = vmatmul.f32.gmra.mxu0 %v914
        %v978 = vpop.f32.mrf.mxu0
        %v979 = vadd.f32 0.0, %v978
        %980 = vmatmul.f32.gmra.mxu0 %v917
        %v981 = vpop.f32.mrf.mxu0
        %v982 = vadd.f32 0.0, %v981
        %983 = vmatmul.f32.gmra.mxu0 %v920
        %v984 = vpop.f32.mrf.mxu0
        %v985 = vadd.f32 0.0, %v984
        %986 = vdwg.mxu0
        %v987 = vadd.f32 %v425, %v940
        %v988 = vadd.f32 %v428, %v943
        %v989 = vadd.f32 %v431, %v946
        %v990 = vadd.f32 %v434, %v949
        %v991 = vadd.f32 %v437, %v952
        %v992 = vadd.f32 %v440, %v955
        %v993 = vadd.f32 %v443, %v958
        %v994 = vadd.f32 %v446, %v961
        %v995 = vadd.f32 %v449, %v964
        %v996 = vadd.f32 %v452, %v967
        %v997 = vadd.f32 %v455, %v970
        %v998 = vadd.f32 %v458, %v973
        %v999 = vadd.f32 %v461, %v976
        %v1000 = vadd.f32 %v464, %v979
        %v1001 = vadd.f32 %v467, %v982
        %v1002 = vadd.f32 %v470, %v985
        %v1003 = vmul.f32 %v987, 0.5
        %v1004 = vmul.f32 %v988, 0.5
        %v1005 = vmul.f32 %v989, 0.5
        %v1006 = vmul.f32 %v990, 0.5
        %v1007 = vmul.f32 %v991, 0.5
        %v1008 = vmul.f32 %v992, 0.5
        %v1009 = vmul.f32 %v993, 0.5
        %v1010 = vmul.f32 %v994, 0.5
        %v1011 = vmul.f32 %v995, 0.5
        %v1012 = vmul.f32 %v996, 0.5
        %v1013 = vmul.f32 %v997, 0.5
        %v1014 = vmul.f32 %v998, 0.5
        %v1015 = vmul.f32 %v999, 0.5
        %v1016 = vmul.f32 %v1000, 0.5
        %v1017 = vmul.f32 %v1001, 0.5
        %v1018 = vmul.f32 %v1002, 0.5
        %v1019 = vtanh.pop %v1003
        %v1020 = vtanh.pop %v1004
        %v1021 = vtanh.pop %v1005
        %v1022 = vtanh.pop %v1006
        %v1023 = vtanh.pop %v1007
        %v1024 = vtanh.pop %v1008
        %v1025 = vtanh.pop %v1009
        %v1026 = vtanh.pop %v1010
        %v1027 = vtanh.pop %v1011
        %v1028 = vtanh.pop %v1012
        %v1029 = vtanh.pop %v1013
        %v1030 = vtanh.pop %v1014
        %v1031 = vtanh.pop %v1015
        %v1032 = vtanh.pop %v1016
        %v1033 = vtanh.pop %v1017
        %v1034 = vtanh.pop %v1018
        %v1035 = vmul.f32 %v1019, 0.5
        %v1036 = vmul.f32 %v1020, 0.5
        %v1037 = vmul.f32 %v1021, 0.5
        %v1038 = vmul.f32 %v1022, 0.5
        %v1039 = vmul.f32 %v1023, 0.5
        %v1040 = vmul.f32 %v1024, 0.5
        %v1041 = vmul.f32 %v1025, 0.5
        %v1042 = vmul.f32 %v1026, 0.5
        %v1043 = vmul.f32 %v1027, 0.5
        %v1044 = vmul.f32 %v1028, 0.5
        %v1045 = vmul.f32 %v1029, 0.5
        %v1046 = vmul.f32 %v1030, 0.5
        %v1047 = vmul.f32 %v1031, 0.5
        %v1048 = vmul.f32 %v1032, 0.5
        %v1049 = vmul.f32 %v1033, 0.5
        %v1050 = vmul.f32 %v1034, 0.5
        %v1051 = vadd.f32 %v1035, 0.5
        %v1052 = vadd.f32 %v1036, 0.5
        %v1053 = vadd.f32 %v1037, 0.5
        %v1054 = vadd.f32 %v1038, 0.5
        %v1055 = vadd.f32 %v1039, 0.5
        %v1056 = vadd.f32 %v1040, 0.5
        %v1057 = vadd.f32 %v1041, 0.5
        %v1058 = vadd.f32 %v1042, 0.5
        %v1059 = vadd.f32 %v1043, 0.5
        %v1060 = vadd.f32 %v1044, 0.5
        %v1061 = vadd.f32 %v1045, 0.5
        %v1062 = vadd.f32 %v1046, 0.5
        %v1063 = vadd.f32 %v1047, 0.5
        %v1064 = vadd.f32 %v1048, 0.5
        %v1065 = vadd.f32 %v1049, 0.5
        %v1066 = vadd.f32 %v1050, 0.5
        %v1067 = vmul.f32 %v1051, 2.0
        %v1068 = vmul.f32 %v1052, 2.0
        %v1069 = vmul.f32 %v1053, 2.0
        %v1070 = vmul.f32 %v1054, 2.0
        %v1071 = vmul.f32 %v1055, 2.0
        %v1072 = vmul.f32 %v1056, 2.0
        %v1073 = vmul.f32 %v1057, 2.0
        %v1074 = vmul.f32 %v1058, 2.0
        %v1075 = vmul.f32 %v1059, 2.0
        %v1076 = vmul.f32 %v1060, 2.0
        %v1077 = vmul.f32 %v1061, 2.0
        %v1078 = vmul.f32 %v1062, 2.0
        %v1079 = vmul.f32 %v1063, 2.0
        %v1080 = vmul.f32 %v1064, 2.0
        %v1081 = vmul.f32 %v1065, 2.0
        %v1082 = vmul.f32 %v1066, 2.0
        %v1083 = vsub.f32 %v1067, 1.0
        %v1084 = vsub.f32 %v1068, 1.0
        %v1085 = vsub.f32 %v1069, 1.0
        %v1086 = vsub.f32 %v1070, 1.0
        %v1087 = vsub.f32 %v1071, 1.0
        %v1088 = vsub.f32 %v1072, 1.0
        %v1089 = vsub.f32 %v1073, 1.0
        %v1090 = vsub.f32 %v1074, 1.0
        %v1091 = vsub.f32 %v1075, 1.0
        %v1092 = vsub.f32 %v1076, 1.0
        %v1093 = vsub.f32 %v1077, 1.0
        %v1094 = vsub.f32 %v1078, 1.0
        %v1095 = vsub.f32 %v1079, 1.0
        %v1096 = vsub.f32 %v1080, 1.0
        %v1097 = vsub.f32 %v1081, 1.0
        %v1098 = vsub.f32 %v1082, 1.0
        %1115 = vrot.lane.b32.xlu0 %v632, 32
        %v1116 = vpop.permute.xlu0 %1115
        %1117 = vrot.lane.b32.xlu0 %v633, 32
        %v1118 = vpop.permute.xlu0 %1117
        %1119 = vrot.lane.b32.xlu0 %v634, 32
        %v1120 = vpop.permute.xlu0 %1119
        %1121 = vrot.lane.b32.xlu0 %v635, 32
        %v1122 = vpop.permute.xlu0 %1121
        %1123 = vrot.lane.b32.xlu0 %v636, 32
        %v1124 = vpop.permute.xlu0 %1123
        %1125 = vrot.lane.b32.xlu0 %v637, 32
        %v1126 = vpop.permute.xlu0 %1125
        %1127 = vrot.lane.b32.xlu0 %v638, 32
        %v1128 = vpop.permute.xlu0 %1127
        %1129 = vrot.lane.b32.xlu0 %v639, 32
        %v1130 = vpop.permute.xlu0 %1129
        %1131 = vrot.lane.b32.xlu0 %v640, 32
        %v1132 = vpop.permute.xlu0 %1131
        %1133 = vrot.lane.b32.xlu0 %v641, 32
        %v1134 = vpop.permute.xlu0 %1133
        %1135 = vrot.lane.b32.xlu0 %v642, 32
        %v1136 = vpop.permute.xlu0 %1135
        %1137 = vrot.lane.b32.xlu0 %v643, 32
        %v1138 = vpop.permute.xlu0 %1137
        %1139 = vrot.lane.b32.xlu0 %v644, 32
        %v1140 = vpop.permute.xlu0 %1139
        %1141 = vrot.lane.b32.xlu0 %v645, 32
        %v1142 = vpop.permute.xlu0 %1141
        %1143 = vrot.lane.b32.xlu0 %v646, 32
        %v1144 = vpop.permute.xlu0 %1143
        %1145 = vrot.lane.b32.xlu0 %v647, 32
        %v1146 = vpop.permute.xlu0 %1145
        %v1163 = vmul.f32 %v1051, %v1116
        %v1164 = vmul.f32 %v1052, %v1118
        %v1165 = vmul.f32 %v1053, %v1120
        %v1166 = vmul.f32 %v1054, %v1122
        %v1167 = vmul.f32 %v1055, %v1124
        %v1168 = vmul.f32 %v1056, %v1126
        %v1169 = vmul.f32 %v1057, %v1128
        %v1170 = vmul.f32 %v1058, %v1130
        %v1171 = vmul.f32 %v1059, %v1132
        %v1172 = vmul.f32 %v1060, %v1134
        %v1173 = vmul.f32 %v1061, %v1136
        %v1174 = vmul.f32 %v1062, %v1138
        %v1175 = vmul.f32 %v1063, %v1140
        %v1176 = vmul.f32 %v1064, %v1142
        %v1177 = vmul.f32 %v1065, %v1144
        %v1178 = vmul.f32 %v1066, %v1146
        %1195 = vrot.lane.b32.xlu0 %v1083, 64
        %v1196 = vpop.permute.xlu0 %1195
        %1197 = vrot.lane.b32.xlu0 %v1084, 64
        %v1198 = vpop.permute.xlu0 %1197
        %1199 = vrot.lane.b32.xlu0 %v1085, 64
        %v1200 = vpop.permute.xlu0 %1199
        %1201 = vrot.lane.b32.xlu0 %v1086, 64
        %v1202 = vpop.permute.xlu0 %1201
        %1203 = vrot.lane.b32.xlu0 %v1087, 64
        %v1204 = vpop.permute.xlu0 %1203
        %1205 = vrot.lane.b32.xlu0 %v1088, 64
        %v1206 = vpop.permute.xlu0 %1205
        %1207 = vrot.lane.b32.xlu0 %v1089, 64
        %v1208 = vpop.permute.xlu0 %1207
        %1209 = vrot.lane.b32.xlu0 %v1090, 64
        %v1210 = vpop.permute.xlu0 %1209
        %1211 = vrot.lane.b32.xlu0 %v1091, 64
        %v1212 = vpop.permute.xlu0 %1211
        %1213 = vrot.lane.b32.xlu0 %v1092, 64
        %v1214 = vpop.permute.xlu0 %1213
        %1215 = vrot.lane.b32.xlu0 %v1093, 64
        %v1216 = vpop.permute.xlu0 %1215
        %1217 = vrot.lane.b32.xlu0 %v1094, 64
        %v1218 = vpop.permute.xlu0 %1217
        %1219 = vrot.lane.b32.xlu0 %v1095, 64
        %v1220 = vpop.permute.xlu0 %1219
        %1221 = vrot.lane.b32.xlu0 %v1096, 64
        %v1222 = vpop.permute.xlu0 %1221
        %1223 = vrot.lane.b32.xlu0 %v1097, 64
        %v1224 = vpop.permute.xlu0 %1223
        %1225 = vrot.lane.b32.xlu0 %v1098, 64
        %v1226 = vpop.permute.xlu0 %1225
        %v1243 = vmul.f32 %v1051, %v1196
        %v1244 = vmul.f32 %v1052, %v1198
        %v1245 = vmul.f32 %v1053, %v1200
        %v1246 = vmul.f32 %v1054, %v1202
        %v1247 = vmul.f32 %v1055, %v1204
        %v1248 = vmul.f32 %v1056, %v1206
        %v1249 = vmul.f32 %v1057, %v1208
        %v1250 = vmul.f32 %v1058, %v1210
        %v1251 = vmul.f32 %v1059, %v1212
        %v1252 = vmul.f32 %v1060, %v1214
        %v1253 = vmul.f32 %v1061, %v1216
        %v1254 = vmul.f32 %v1062, %v1218
        %v1255 = vmul.f32 %v1063, %v1220
        %v1256 = vmul.f32 %v1064, %v1222
        %v1257 = vmul.f32 %v1065, %v1224
        %v1258 = vmul.f32 %v1066, %v1226
        %1275 = vrot.lane.b32.xlu0 %v1243, 32
        %v1276 = vpop.permute.xlu0 %1275
        %1277 = vrot.lane.b32.xlu0 %v1244, 32
        %v1278 = vpop.permute.xlu0 %1277
        %1279 = vrot.lane.b32.xlu0 %v1245, 32
        %v1280 = vpop.permute.xlu0 %1279
        %1281 = vrot.lane.b32.xlu0 %v1246, 32
        %v1282 = vpop.permute.xlu0 %1281
        %1283 = vrot.lane.b32.xlu0 %v1247, 32
        %v1284 = vpop.permute.xlu0 %1283
        %1285 = vrot.lane.b32.xlu0 %v1248, 32
        %v1286 = vpop.permute.xlu0 %1285
        %1287 = vrot.lane.b32.xlu0 %v1249, 32
        %v1288 = vpop.permute.xlu0 %1287
        %1289 = vrot.lane.b32.xlu0 %v1250, 32
        %v1290 = vpop.permute.xlu0 %1289
        %1291 = vrot.lane.b32.xlu0 %v1251, 32
        %v1292 = vpop.permute.xlu0 %1291
        %1293 = vrot.lane.b32.xlu0 %v1252, 32
        %v1294 = vpop.permute.xlu0 %1293
        %1295 = vrot.lane.b32.xlu0 %v1253, 32
        %v1296 = vpop.permute.xlu0 %1295
        %1297 = vrot.lane.b32.xlu0 %v1254, 32
        %v1298 = vpop.permute.xlu0 %1297
        %1299 = vrot.lane.b32.xlu0 %v1255, 32
        %v1300 = vpop.permute.xlu0 %1299
        %1301 = vrot.lane.b32.xlu0 %v1256, 32
        %v1302 = vpop.permute.xlu0 %1301
        %1303 = vrot.lane.b32.xlu0 %v1257, 32
        %v1304 = vpop.permute.xlu0 %1303
        %1305 = vrot.lane.b32.xlu0 %v1258, 32
        %v1306 = vpop.permute.xlu0 %1305
        %v1323 = vadd.f32 %v1163, %v1276
        %v1324 = vadd.f32 %v1164, %v1278
        %v1325 = vadd.f32 %v1165, %v1280
        %v1326 = vadd.f32 %v1166, %v1282
        %v1327 = vadd.f32 %v1167, %v1284
        %v1328 = vadd.f32 %v1168, %v1286
        %v1329 = vadd.f32 %v1169, %v1288
        %v1330 = vadd.f32 %v1170, %v1290
        %v1331 = vadd.f32 %v1171, %v1292
        %v1332 = vadd.f32 %v1172, %v1294
        %v1333 = vadd.f32 %v1173, %v1296
        %v1334 = vadd.f32 %v1174, %v1298
        %v1335 = vadd.f32 %v1175, %v1300
        %v1336 = vadd.f32 %v1176, %v1302
        %v1337 = vadd.f32 %v1177, %v1304
        %v1338 = vadd.f32 %v1178, %v1306
        %v1339 = vtanh.pop %v1323
        %v1340 = vtanh.pop %v1324
        %v1341 = vtanh.pop %v1325
        %v1342 = vtanh.pop %v1326
        %v1343 = vtanh.pop %v1327
        %v1344 = vtanh.pop %v1328
        %v1345 = vtanh.pop %v1329
        %v1346 = vtanh.pop %v1330
        %v1347 = vtanh.pop %v1331
        %v1348 = vtanh.pop %v1332
        %v1349 = vtanh.pop %v1333
        %v1350 = vtanh.pop %v1334
        %v1351 = vtanh.pop %v1335
        %v1352 = vtanh.pop %v1336
        %v1353 = vtanh.pop %v1337
        %v1354 = vtanh.pop %v1338
        %1371 = vrot.lane.b32.xlu0 %v1339, 64
        %v1372 = vpop.permute.xlu0 %1371
        %1373 = vrot.lane.b32.xlu0 %v1340, 64
        %v1374 = vpop.permute.xlu0 %1373
        %1375 = vrot.lane.b32.xlu0 %v1341, 64
        %v1376 = vpop.permute.xlu0 %1375
        %1377 = vrot.lane.b32.xlu0 %v1342, 64
        %v1378 = vpop.permute.xlu0 %1377
        %1379 = vrot.lane.b32.xlu0 %v1343, 64
        %v1380 = vpop.permute.xlu0 %1379
        %1381 = vrot.lane.b32.xlu0 %v1344, 64
        %v1382 = vpop.permute.xlu0 %1381
        %1383 = vrot.lane.b32.xlu0 %v1345, 64
        %v1384 = vpop.permute.xlu0 %1383
        %1385 = vrot.lane.b32.xlu0 %v1346, 64
        %v1386 = vpop.permute.xlu0 %1385
        %1387 = vrot.lane.b32.xlu0 %v1347, 64
        %v1388 = vpop.permute.xlu0 %1387
        %1389 = vrot.lane.b32.xlu0 %v1348, 64
        %v1390 = vpop.permute.xlu0 %1389
        %1391 = vrot.lane.b32.xlu0 %v1349, 64
        %v1392 = vpop.permute.xlu0 %1391
        %1393 = vrot.lane.b32.xlu0 %v1350, 64
        %v1394 = vpop.permute.xlu0 %1393
        %1395 = vrot.lane.b32.xlu0 %v1351, 64
        %v1396 = vpop.permute.xlu0 %1395
        %1397 = vrot.lane.b32.xlu0 %v1352, 64
        %v1398 = vpop.permute.xlu0 %1397
        %1399 = vrot.lane.b32.xlu0 %v1353, 64
        %v1400 = vpop.permute.xlu0 %1399
        %1401 = vrot.lane.b32.xlu0 %v1354, 64
        %v1402 = vpop.permute.xlu0 %1401
        %v1419 = vmul.f32 %v1051, %v1372
        %v1420 = vmul.f32 %v1052, %v1374
        %v1421 = vmul.f32 %v1053, %v1376
        %v1422 = vmul.f32 %v1054, %v1378
        %v1423 = vmul.f32 %v1055, %v1380
        %v1424 = vmul.f32 %v1056, %v1382
        %v1425 = vmul.f32 %v1057, %v1384
        %v1426 = vmul.f32 %v1058, %v1386
        %v1427 = vmul.f32 %v1059, %v1388
        %v1428 = vmul.f32 %v1060, %v1390
        %v1429 = vmul.f32 %v1061, %v1392
        %v1430 = vmul.f32 %v1062, %v1394
        %v1431 = vmul.f32 %v1063, %v1396
        %v1432 = vmul.f32 %v1064, %v1398
        %v1433 = vmul.f32 %v1065, %v1400
        %v1434 = vmul.f32 %v1066, %v1402
        %1451 = vrot.lane.b32.xlu0 %v1419, 32
        %v1452 = vpop.permute.xlu0 %1451
        %1453 = vrot.lane.b32.xlu0 %v1420, 32
        %v1454 = vpop.permute.xlu0 %1453
        %1455 = vrot.lane.b32.xlu0 %v1421, 32
        %v1456 = vpop.permute.xlu0 %1455
        %1457 = vrot.lane.b32.xlu0 %v1422, 32
        %v1458 = vpop.permute.xlu0 %1457
        %1459 = vrot.lane.b32.xlu0 %v1423, 32
        %v1460 = vpop.permute.xlu0 %1459
        %1461 = vrot.lane.b32.xlu0 %v1424, 32
        %v1462 = vpop.permute.xlu0 %1461
        %1463 = vrot.lane.b32.xlu0 %v1425, 32
        %v1464 = vpop.permute.xlu0 %1463
        %1465 = vrot.lane.b32.xlu0 %v1426, 32
        %v1466 = vpop.permute.xlu0 %1465
        %1467 = vrot.lane.b32.xlu0 %v1427, 32
        %v1468 = vpop.permute.xlu0 %1467
        %1469 = vrot.lane.b32.xlu0 %v1428, 32
        %v1470 = vpop.permute.xlu0 %1469
        %1471 = vrot.lane.b32.xlu0 %v1429, 32
        %v1472 = vpop.permute.xlu0 %1471
        %1473 = vrot.lane.b32.xlu0 %v1430, 32
        %v1474 = vpop.permute.xlu0 %1473
        %1475 = vrot.lane.b32.xlu0 %v1431, 32
        %v1476 = vpop.permute.xlu0 %1475
        %1477 = vrot.lane.b32.xlu0 %v1432, 32
        %v1478 = vpop.permute.xlu0 %1477
        %1479 = vrot.lane.b32.xlu0 %v1433, 32
        %v1480 = vpop.permute.xlu0 %1479
        %1481 = vrot.lane.b32.xlu0 %v1434, 32
        %v1482 = vpop.permute.xlu0 %1481
        %1499 = vmatpush.msra.mxu0 %v1482
        %1500 = vmatpush.msra.mxu0 %v1480
        %1501 = vmatpush.msra.mxu0 %v1478
        %1502 = vmatpush.msra.mxu0 %v1476
        %1503 = vmatpush.msra.mxu0 %v1474
        %1504 = vmatpush.msra.mxu0 %v1472
        %1505 = vmatpush.msra.mxu0 %v1470
        %1506 = vmatpush.msra.mxu0 %v1468
        %1507 = vmatpush.msra.mxu0 %v1466
        %1508 = vmatpush.msra.mxu0 %v1464
        %1509 = vmatpush.msra.mxu0 %v1462
        %1510 = vmatpush.msra.mxu0 %v1460
        %1511 = vmatpush.msra.mxu0 %v1458
        %1512 = vmatpush.msra.mxu0 %v1456
        %1513 = vmatpush.msra.mxu0 %v1454
        %1514 = vmatpush.msra.mxu0 %v1452
        %1515 = vmatmul.f32.gmra.mxu0 %v332
        %v1516 = vpop.f32.mrf.mxu0
        %v1517 = vadd.f32 0.0, %v1516
        %1518 = vmatmul.f32.gmra.mxu0 %v333
        %v1519 = vpop.f32.mrf.mxu0
        %v1520 = vadd.f32 0.0, %v1519
        %1521 = vmatmul.f32.gmra.mxu0 %v334
        %v1522 = vpop.f32.mrf.mxu0
        %v1523 = vadd.f32 0.0, %v1522
        %1524 = vmatmul.f32.gmra.mxu0 %v335
        %v1525 = vpop.f32.mrf.mxu0
        %v1526 = vadd.f32 0.0, %v1525
        %1527 = vmatmul.f32.gmra.mxu0 %v336
        %v1528 = vpop.f32.mrf.mxu0
        %v1529 = vadd.f32 0.0, %v1528
        %1530 = vmatmul.f32.gmra.mxu0 %v337
        %v1531 = vpop.f32.mrf.mxu0
        %v1532 = vadd.f32 0.0, %v1531
        %1533 = vmatmul.f32.gmra.mxu0 %v338
        %v1534 = vpop.f32.mrf.mxu0
        %v1535 = vadd.f32 0.0, %v1534
        %1536 = vmatmul.f32.gmra.mxu0 %v339
        %v1537 = vpop.f32.mrf.mxu0
        %v1538 = vadd.f32 0.0, %v1537
        %1539 = vmatmul.f32.gmra.mxu0 %v340
        %v1540 = vpop.f32.mrf.mxu0
        %v1541 = vadd.f32 0.0, %v1540
        %1542 = vmatmul.f32.gmra.mxu0 %v341
        %v1543 = vpop.f32.mrf.mxu0
        %v1544 = vadd.f32 0.0, %v1543
        %1545 = vmatmul.f32.gmra.mxu0 %v342
        %v1546 = vpop.f32.mrf.mxu0
        %v1547 = vadd.f32 0.0, %v1546
        %1548 = vmatmul.f32.gmra.mxu0 %v343
        %v1549 = vpop.f32.mrf.mxu0
        %v1550 = vadd.f32 0.0, %v1549
        %1551 = vmatmul.f32.gmra.mxu0 %v344
        %v1552 = vpop.f32.mrf.mxu0
        %v1553 = vadd.f32 0.0, %v1552
        %1554 = vmatmul.f32.gmra.mxu0 %v345
        %v1555 = vpop.f32.mrf.mxu0
        %v1556 = vadd.f32 0.0, %v1555
        %1557 = vmatmul.f32.gmra.mxu0 %v346
        %v1558 = vpop.f32.mrf.mxu0
        %v1559 = vadd.f32 0.0, %v1558
        %1560 = vmatmul.f32.gmra.mxu0 %v347
        %v1561 = vpop.f32.mrf.mxu0
        %v1562 = vadd.f32 0.0, %v1561
        %1563 = vdwg.mxu0
        %v1565 = vsel %vm873, %v1517, 0
        %v1568 = vsel %vm873, %v1520, 0
        %v1571 = vsel %vm873, %v1523, 0
        %v1574 = vsel %vm873, %v1526, 0
        %v1577 = vsel %vm873, %v1529, 0
        %v1580 = vsel %vm873, %v1532, 0
        %v1583 = vsel %vm873, %v1535, 0
        %v1586 = vsel %vm873, %v1538, 0
        %v1589 = vsel %vm873, %v1541, 0
        %v1592 = vsel %vm873, %v1544, 0
        %v1595 = vsel %vm873, %v1547, 0
        %v1598 = vsel %vm873, %v1550, 0
        %v1601 = vsel %vm873, %v1553, 0
        %v1604 = vsel %vm873, %v1556, 0
        %v1607 = vsel %vm873, %v1559, 0
        %v1610 = vsel %vm873, %v1562, 0
        %1612 = vmatpush.msra.mxu0 0.0
        %1613 = vmatpush.msra.mxu0 0.0
        %1614 = vmatpush.msra.mxu0 0.0
        %1615 = vmatpush.msra.mxu0 0.0
        %1616 = vmatpush.msra.mxu0 0.0
        %1617 = vmatpush.msra.mxu0 0.0
        %1618 = vmatpush.msra.mxu0 0.0
        %1619 = vmatpush.msra.mxu0 0.0
        %1620 = vmatpush.msra.mxu0 0.0
        %1621 = vmatpush.msra.mxu0 0.0
        %1622 = vmatpush.msra.mxu0 0.0
        %1623 = vmatpush.msra.mxu0 0.0
        %1624 = vmatpush.msra.mxu0 %v353
        %1625 = vmatpush.msra.mxu0 %v352
        %1626 = vmatpush.msra.mxu0 %v351
        %1627 = vmatpush.msra.mxu0 %v350
        %1628 = vmatmul.f32.gmra.mxu0 %v1565
        %v1629 = vpop.f32.mrf.mxu0
        %v1630 = vadd.f32 0.0, %v1629
        %1631 = vmatmul.f32.gmra.mxu0 %v1568
        %v1632 = vpop.f32.mrf.mxu0
        %v1633 = vadd.f32 0.0, %v1632
        %1634 = vmatmul.f32.gmra.mxu0 %v1571
        %v1635 = vpop.f32.mrf.mxu0
        %v1636 = vadd.f32 0.0, %v1635
        %1637 = vmatmul.f32.gmra.mxu0 %v1574
        %v1638 = vpop.f32.mrf.mxu0
        %v1639 = vadd.f32 0.0, %v1638
        %1640 = vmatmul.f32.gmra.mxu0 %v1577
        %v1641 = vpop.f32.mrf.mxu0
        %v1642 = vadd.f32 0.0, %v1641
        %1643 = vmatmul.f32.gmra.mxu0 %v1580
        %v1644 = vpop.f32.mrf.mxu0
        %v1645 = vadd.f32 0.0, %v1644
        %1646 = vmatmul.f32.gmra.mxu0 %v1583
        %v1647 = vpop.f32.mrf.mxu0
        %v1648 = vadd.f32 0.0, %v1647
        %1649 = vmatmul.f32.gmra.mxu0 %v1586
        %v1650 = vpop.f32.mrf.mxu0
        %v1651 = vadd.f32 0.0, %v1650
        %1652 = vmatmul.f32.gmra.mxu0 %v1589
        %v1653 = vpop.f32.mrf.mxu0
        %v1654 = vadd.f32 0.0, %v1653
        %1655 = vmatmul.f32.gmra.mxu0 %v1592
        %v1656 = vpop.f32.mrf.mxu0
        %v1657 = vadd.f32 0.0, %v1656
        %1658 = vmatmul.f32.gmra.mxu0 %v1595
        %v1659 = vpop.f32.mrf.mxu0
        %v1660 = vadd.f32 0.0, %v1659
        %1661 = vmatmul.f32.gmra.mxu0 %v1598
        %v1662 = vpop.f32.mrf.mxu0
        %v1663 = vadd.f32 0.0, %v1662
        %1664 = vmatmul.f32.gmra.mxu0 %v1601
        %v1665 = vpop.f32.mrf.mxu0
        %v1666 = vadd.f32 0.0, %v1665
        %1667 = vmatmul.f32.gmra.mxu0 %v1604
        %v1668 = vpop.f32.mrf.mxu0
        %v1669 = vadd.f32 0.0, %v1668
        %1670 = vmatmul.f32.gmra.mxu0 %v1607
        %v1671 = vpop.f32.mrf.mxu0
        %v1672 = vadd.f32 0.0, %v1671
        %1673 = vmatmul.f32.gmra.mxu0 %v1610
        %v1674 = vpop.f32.mrf.mxu0
        %v1675 = vadd.f32 0.0, %v1674
        %1676 = vdwg.mxu0
        %v1677 = vadd.f32 %v425, %v1630
        %v1678 = vadd.f32 %v428, %v1633
        %v1679 = vadd.f32 %v431, %v1636
        %v1680 = vadd.f32 %v434, %v1639
        %v1681 = vadd.f32 %v437, %v1642
        %v1682 = vadd.f32 %v440, %v1645
        %v1683 = vadd.f32 %v443, %v1648
        %v1684 = vadd.f32 %v446, %v1651
        %v1685 = vadd.f32 %v449, %v1654
        %v1686 = vadd.f32 %v452, %v1657
        %v1687 = vadd.f32 %v455, %v1660
        %v1688 = vadd.f32 %v458, %v1663
        %v1689 = vadd.f32 %v461, %v1666
        %v1690 = vadd.f32 %v464, %v1669
        %v1691 = vadd.f32 %v467, %v1672
        %v1692 = vadd.f32 %v470, %v1675
        %v1693 = vmul.f32 %v1677, 0.5
        %v1694 = vmul.f32 %v1678, 0.5
        %v1695 = vmul.f32 %v1679, 0.5
        %v1696 = vmul.f32 %v1680, 0.5
        %v1697 = vmul.f32 %v1681, 0.5
        %v1698 = vmul.f32 %v1682, 0.5
        %v1699 = vmul.f32 %v1683, 0.5
        %v1700 = vmul.f32 %v1684, 0.5
        %v1701 = vmul.f32 %v1685, 0.5
        %v1702 = vmul.f32 %v1686, 0.5
        %v1703 = vmul.f32 %v1687, 0.5
        %v1704 = vmul.f32 %v1688, 0.5
        %v1705 = vmul.f32 %v1689, 0.5
        %v1706 = vmul.f32 %v1690, 0.5
        %v1707 = vmul.f32 %v1691, 0.5
        %v1708 = vmul.f32 %v1692, 0.5
        %v1709 = vtanh.pop %v1693
        %v1710 = vtanh.pop %v1694
        %v1711 = vtanh.pop %v1695
        %v1712 = vtanh.pop %v1696
        %v1713 = vtanh.pop %v1697
        %v1714 = vtanh.pop %v1698
        %v1715 = vtanh.pop %v1699
        %v1716 = vtanh.pop %v1700
        %v1717 = vtanh.pop %v1701
        %v1718 = vtanh.pop %v1702
        %v1719 = vtanh.pop %v1703
        %v1720 = vtanh.pop %v1704
        %v1721 = vtanh.pop %v1705
        %v1722 = vtanh.pop %v1706
        %v1723 = vtanh.pop %v1707
        %v1724 = vtanh.pop %v1708
        %v1725 = vmul.f32 %v1709, 0.5
        %v1726 = vmul.f32 %v1710, 0.5
        %v1727 = vmul.f32 %v1711, 0.5
        %v1728 = vmul.f32 %v1712, 0.5
        %v1729 = vmul.f32 %v1713, 0.5
        %v1730 = vmul.f32 %v1714, 0.5
        %v1731 = vmul.f32 %v1715, 0.5
        %v1732 = vmul.f32 %v1716, 0.5
        %v1733 = vmul.f32 %v1717, 0.5
        %v1734 = vmul.f32 %v1718, 0.5
        %v1735 = vmul.f32 %v1719, 0.5
        %v1736 = vmul.f32 %v1720, 0.5
        %v1737 = vmul.f32 %v1721, 0.5
        %v1738 = vmul.f32 %v1722, 0.5
        %v1739 = vmul.f32 %v1723, 0.5
        %v1740 = vmul.f32 %v1724, 0.5
        %v1741 = vadd.f32 %v1725, 0.5
        %v1742 = vadd.f32 %v1726, 0.5
        %v1743 = vadd.f32 %v1727, 0.5
        %v1744 = vadd.f32 %v1728, 0.5
        %v1745 = vadd.f32 %v1729, 0.5
        %v1746 = vadd.f32 %v1730, 0.5
        %v1747 = vadd.f32 %v1731, 0.5
        %v1748 = vadd.f32 %v1732, 0.5
        %v1749 = vadd.f32 %v1733, 0.5
        %v1750 = vadd.f32 %v1734, 0.5
        %v1751 = vadd.f32 %v1735, 0.5
        %v1752 = vadd.f32 %v1736, 0.5
        %v1753 = vadd.f32 %v1737, 0.5
        %v1754 = vadd.f32 %v1738, 0.5
        %v1755 = vadd.f32 %v1739, 0.5
        %v1756 = vadd.f32 %v1740, 0.5
        %v1757 = vmul.f32 %v1741, 2.0
        %v1758 = vmul.f32 %v1742, 2.0
        %v1759 = vmul.f32 %v1743, 2.0
        %v1760 = vmul.f32 %v1744, 2.0
        %v1761 = vmul.f32 %v1745, 2.0
        %v1762 = vmul.f32 %v1746, 2.0
        %v1763 = vmul.f32 %v1747, 2.0
        %v1764 = vmul.f32 %v1748, 2.0
        %v1765 = vmul.f32 %v1749, 2.0
        %v1766 = vmul.f32 %v1750, 2.0
        %v1767 = vmul.f32 %v1751, 2.0
        %v1768 = vmul.f32 %v1752, 2.0
        %v1769 = vmul.f32 %v1753, 2.0
        %v1770 = vmul.f32 %v1754, 2.0
        %v1771 = vmul.f32 %v1755, 2.0
        %v1772 = vmul.f32 %v1756, 2.0
        %v1773 = vsub.f32 %v1757, 1.0
        %v1774 = vsub.f32 %v1758, 1.0
        %v1775 = vsub.f32 %v1759, 1.0
        %v1776 = vsub.f32 %v1760, 1.0
        %v1777 = vsub.f32 %v1761, 1.0
        %v1778 = vsub.f32 %v1762, 1.0
        %v1779 = vsub.f32 %v1763, 1.0
        %v1780 = vsub.f32 %v1764, 1.0
        %v1781 = vsub.f32 %v1765, 1.0
        %v1782 = vsub.f32 %v1766, 1.0
        %v1783 = vsub.f32 %v1767, 1.0
        %v1784 = vsub.f32 %v1768, 1.0
        %v1785 = vsub.f32 %v1769, 1.0
        %v1786 = vsub.f32 %v1770, 1.0
        %v1787 = vsub.f32 %v1771, 1.0
        %v1788 = vsub.f32 %v1772, 1.0
        %v1789 = vmul.f32 %v1741, %v1323
        %v1790 = vmul.f32 %v1742, %v1324
        %v1791 = vmul.f32 %v1743, %v1325
        %v1792 = vmul.f32 %v1744, %v1326
        %v1793 = vmul.f32 %v1745, %v1327
        %v1794 = vmul.f32 %v1746, %v1328
        %v1795 = vmul.f32 %v1747, %v1329
        %v1796 = vmul.f32 %v1748, %v1330
        %v1797 = vmul.f32 %v1749, %v1331
        %v1798 = vmul.f32 %v1750, %v1332
        %v1799 = vmul.f32 %v1751, %v1333
        %v1800 = vmul.f32 %v1752, %v1334
        %v1801 = vmul.f32 %v1753, %v1335
        %v1802 = vmul.f32 %v1754, %v1336
        %v1803 = vmul.f32 %v1755, %v1337
        %v1804 = vmul.f32 %v1756, %v1338
        %1821 = vrot.lane.b32.xlu0 %v1773, 64
        %v1822 = vpop.permute.xlu0 %1821
        %1823 = vrot.lane.b32.xlu0 %v1774, 64
        %v1824 = vpop.permute.xlu0 %1823
        %1825 = vrot.lane.b32.xlu0 %v1775, 64
        %v1826 = vpop.permute.xlu0 %1825
        %1827 = vrot.lane.b32.xlu0 %v1776, 64
        %v1828 = vpop.permute.xlu0 %1827
        %1829 = vrot.lane.b32.xlu0 %v1777, 64
        %v1830 = vpop.permute.xlu0 %1829
        %1831 = vrot.lane.b32.xlu0 %v1778, 64
        %v1832 = vpop.permute.xlu0 %1831
        %1833 = vrot.lane.b32.xlu0 %v1779, 64
        %v1834 = vpop.permute.xlu0 %1833
        %1835 = vrot.lane.b32.xlu0 %v1780, 64
        %v1836 = vpop.permute.xlu0 %1835
        %1837 = vrot.lane.b32.xlu0 %v1781, 64
        %v1838 = vpop.permute.xlu0 %1837
        %1839 = vrot.lane.b32.xlu0 %v1782, 64
        %v1840 = vpop.permute.xlu0 %1839
        %1841 = vrot.lane.b32.xlu0 %v1783, 64
        %v1842 = vpop.permute.xlu0 %1841
        %1843 = vrot.lane.b32.xlu0 %v1784, 64
        %v1844 = vpop.permute.xlu0 %1843
        %1845 = vrot.lane.b32.xlu0 %v1785, 64
        %v1846 = vpop.permute.xlu0 %1845
        %1847 = vrot.lane.b32.xlu0 %v1786, 64
        %v1848 = vpop.permute.xlu0 %1847
        %1849 = vrot.lane.b32.xlu0 %v1787, 64
        %v1850 = vpop.permute.xlu0 %1849
        %1851 = vrot.lane.b32.xlu0 %v1788, 64
        %v1852 = vpop.permute.xlu0 %1851
        %v1869 = vmul.f32 %v1741, %v1822
        %v1870 = vmul.f32 %v1742, %v1824
        %v1871 = vmul.f32 %v1743, %v1826
        %v1872 = vmul.f32 %v1744, %v1828
        %v1873 = vmul.f32 %v1745, %v1830
        %v1874 = vmul.f32 %v1746, %v1832
        %v1875 = vmul.f32 %v1747, %v1834
        %v1876 = vmul.f32 %v1748, %v1836
        %v1877 = vmul.f32 %v1749, %v1838
        %v1878 = vmul.f32 %v1750, %v1840
        %v1879 = vmul.f32 %v1751, %v1842
        %v1880 = vmul.f32 %v1752, %v1844
        %v1881 = vmul.f32 %v1753, %v1846
        %v1882 = vmul.f32 %v1754, %v1848
        %v1883 = vmul.f32 %v1755, %v1850
        %v1884 = vmul.f32 %v1756, %v1852
        %1901 = vrot.lane.b32.xlu0 %v1869, 32
        %v1902 = vpop.permute.xlu0 %1901
        %1903 = vrot.lane.b32.xlu0 %v1870, 32
        %v1904 = vpop.permute.xlu0 %1903
        %1905 = vrot.lane.b32.xlu0 %v1871, 32
        %v1906 = vpop.permute.xlu0 %1905
        %1907 = vrot.lane.b32.xlu0 %v1872, 32
        %v1908 = vpop.permute.xlu0 %1907
        %1909 = vrot.lane.b32.xlu0 %v1873, 32
        %v1910 = vpop.permute.xlu0 %1909
        %1911 = vrot.lane.b32.xlu0 %v1874, 32
        %v1912 = vpop.permute.xlu0 %1911
        %1913 = vrot.lane.b32.xlu0 %v1875, 32
        %v1914 = vpop.permute.xlu0 %1913
        %1915 = vrot.lane.b32.xlu0 %v1876, 32
        %v1916 = vpop.permute.xlu0 %1915
        %1917 = vrot.lane.b32.xlu0 %v1877, 32
        %v1918 = vpop.permute.xlu0 %1917
        %1919 = vrot.lane.b32.xlu0 %v1878, 32
        %v1920 = vpop.permute.xlu0 %1919
        %1921 = vrot.lane.b32.xlu0 %v1879, 32
        %v1922 = vpop.permute.xlu0 %1921
        %1923 = vrot.lane.b32.xlu0 %v1880, 32
        %v1924 = vpop.permute.xlu0 %1923
        %1925 = vrot.lane.b32.xlu0 %v1881, 32
        %v1926 = vpop.permute.xlu0 %1925
        %1927 = vrot.lane.b32.xlu0 %v1882, 32
        %v1928 = vpop.permute.xlu0 %1927
        %1929 = vrot.lane.b32.xlu0 %v1883, 32
        %v1930 = vpop.permute.xlu0 %1929
        %1931 = vrot.lane.b32.xlu0 %v1884, 32
        %v1932 = vpop.permute.xlu0 %1931
        %v1949 = vadd.f32 %v1789, %v1902
        %v1950 = vadd.f32 %v1790, %v1904
        %v1951 = vadd.f32 %v1791, %v1906
        %v1952 = vadd.f32 %v1792, %v1908
        %v1953 = vadd.f32 %v1793, %v1910
        %v1954 = vadd.f32 %v1794, %v1912
        %v1955 = vadd.f32 %v1795, %v1914
        %v1956 = vadd.f32 %v1796, %v1916
        %v1957 = vadd.f32 %v1797, %v1918
        %v1958 = vadd.f32 %v1798, %v1920
        %v1959 = vadd.f32 %v1799, %v1922
        %v1960 = vadd.f32 %v1800, %v1924
        %v1961 = vadd.f32 %v1801, %v1926
        %v1962 = vadd.f32 %v1802, %v1928
        %v1963 = vadd.f32 %v1803, %v1930
        %v1964 = vadd.f32 %v1804, %v1932
        %v1965 = vtanh.pop %v1949
        %v1966 = vtanh.pop %v1950
        %v1967 = vtanh.pop %v1951
        %v1968 = vtanh.pop %v1952
        %v1969 = vtanh.pop %v1953
        %v1970 = vtanh.pop %v1954
        %v1971 = vtanh.pop %v1955
        %v1972 = vtanh.pop %v1956
        %v1973 = vtanh.pop %v1957
        %v1974 = vtanh.pop %v1958
        %v1975 = vtanh.pop %v1959
        %v1976 = vtanh.pop %v1960
        %v1977 = vtanh.pop %v1961
        %v1978 = vtanh.pop %v1962
        %v1979 = vtanh.pop %v1963
        %v1980 = vtanh.pop %v1964
        %1997 = vrot.lane.b32.xlu0 %v1965, 64
        %v1998 = vpop.permute.xlu0 %1997
        %1999 = vrot.lane.b32.xlu0 %v1966, 64
        %v2000 = vpop.permute.xlu0 %1999
        %2001 = vrot.lane.b32.xlu0 %v1967, 64
        %v2002 = vpop.permute.xlu0 %2001
        %2003 = vrot.lane.b32.xlu0 %v1968, 64
        %v2004 = vpop.permute.xlu0 %2003
        %2005 = vrot.lane.b32.xlu0 %v1969, 64
        %v2006 = vpop.permute.xlu0 %2005
        %2007 = vrot.lane.b32.xlu0 %v1970, 64
        %v2008 = vpop.permute.xlu0 %2007
        %2009 = vrot.lane.b32.xlu0 %v1971, 64
        %v2010 = vpop.permute.xlu0 %2009
        %2011 = vrot.lane.b32.xlu0 %v1972, 64
        %v2012 = vpop.permute.xlu0 %2011
        %2013 = vrot.lane.b32.xlu0 %v1973, 64
        %v2014 = vpop.permute.xlu0 %2013
        %2015 = vrot.lane.b32.xlu0 %v1974, 64
        %v2016 = vpop.permute.xlu0 %2015
        %2017 = vrot.lane.b32.xlu0 %v1975, 64
        %v2018 = vpop.permute.xlu0 %2017
        %2019 = vrot.lane.b32.xlu0 %v1976, 64
        %v2020 = vpop.permute.xlu0 %2019
        %2021 = vrot.lane.b32.xlu0 %v1977, 64
        %v2022 = vpop.permute.xlu0 %2021
        %2023 = vrot.lane.b32.xlu0 %v1978, 64
        %v2024 = vpop.permute.xlu0 %2023
        %2025 = vrot.lane.b32.xlu0 %v1979, 64
        %v2026 = vpop.permute.xlu0 %2025
        %2027 = vrot.lane.b32.xlu0 %v1980, 64
        %v2028 = vpop.permute.xlu0 %2027
        %v2045 = vmul.f32 %v1741, %v1998
        %v2046 = vmul.f32 %v1742, %v2000
        %v2047 = vmul.f32 %v1743, %v2002
        %v2048 = vmul.f32 %v1744, %v2004
        %v2049 = vmul.f32 %v1745, %v2006
        %v2050 = vmul.f32 %v1746, %v2008
        %v2051 = vmul.f32 %v1747, %v2010
        %v2052 = vmul.f32 %v1748, %v2012
        %v2053 = vmul.f32 %v1749, %v2014
        %v2054 = vmul.f32 %v1750, %v2016
        %v2055 = vmul.f32 %v1751, %v2018
        %v2056 = vmul.f32 %v1752, %v2020
        %v2057 = vmul.f32 %v1753, %v2022
        %v2058 = vmul.f32 %v1754, %v2024
        %v2059 = vmul.f32 %v1755, %v2026
        %v2060 = vmul.f32 %v1756, %v2028
        %2077 = vrot.lane.b32.xlu0 %v2045, 32
        %v2078 = vpop.permute.xlu0 %2077
        %2079 = vrot.lane.b32.xlu0 %v2046, 32
        %v2080 = vpop.permute.xlu0 %2079
        %2081 = vrot.lane.b32.xlu0 %v2047, 32
        %v2082 = vpop.permute.xlu0 %2081
        %2083 = vrot.lane.b32.xlu0 %v2048, 32
        %v2084 = vpop.permute.xlu0 %2083
        %2085 = vrot.lane.b32.xlu0 %v2049, 32
        %v2086 = vpop.permute.xlu0 %2085
        %2087 = vrot.lane.b32.xlu0 %v2050, 32
        %v2088 = vpop.permute.xlu0 %2087
        %2089 = vrot.lane.b32.xlu0 %v2051, 32
        %v2090 = vpop.permute.xlu0 %2089
        %2091 = vrot.lane.b32.xlu0 %v2052, 32
        %v2092 = vpop.permute.xlu0 %2091
        %2093 = vrot.lane.b32.xlu0 %v2053, 32
        %v2094 = vpop.permute.xlu0 %2093
        %2095 = vrot.lane.b32.xlu0 %v2054, 32
        %v2096 = vpop.permute.xlu0 %2095
        %2097 = vrot.lane.b32.xlu0 %v2055, 32
        %v2098 = vpop.permute.xlu0 %2097
        %2099 = vrot.lane.b32.xlu0 %v2056, 32
        %v2100 = vpop.permute.xlu0 %2099
        %2101 = vrot.lane.b32.xlu0 %v2057, 32
        %v2102 = vpop.permute.xlu0 %2101
        %2103 = vrot.lane.b32.xlu0 %v2058, 32
        %v2104 = vpop.permute.xlu0 %2103
        %2105 = vrot.lane.b32.xlu0 %v2059, 32
        %v2106 = vpop.permute.xlu0 %2105
        %2107 = vrot.lane.b32.xlu0 %v2060, 32
        %v2108 = vpop.permute.xlu0 %2107
        %2125 = vmatpush.msra.mxu0 %v2108
        %2126 = vmatpush.msra.mxu0 %v2106
        %2127 = vmatpush.msra.mxu0 %v2104
        %2128 = vmatpush.msra.mxu0 %v2102
        %2129 = vmatpush.msra.mxu0 %v2100
        %2130 = vmatpush.msra.mxu0 %v2098
        %2131 = vmatpush.msra.mxu0 %v2096
        %2132 = vmatpush.msra.mxu0 %v2094
        %2133 = vmatpush.msra.mxu0 %v2092
        %2134 = vmatpush.msra.mxu0 %v2090
        %2135 = vmatpush.msra.mxu0 %v2088
        %2136 = vmatpush.msra.mxu0 %v2086
        %2137 = vmatpush.msra.mxu0 %v2084
        %2138 = vmatpush.msra.mxu0 %v2082
        %2139 = vmatpush.msra.mxu0 %v2080
        %2140 = vmatpush.msra.mxu0 %v2078
        %2141 = vmatmul.f32.gmra.mxu0 %v332
        %v2142 = vpop.f32.mrf.mxu0
        %v2143 = vadd.f32 0.0, %v2142
        %2144 = vmatmul.f32.gmra.mxu0 %v333
        %v2145 = vpop.f32.mrf.mxu0
        %v2146 = vadd.f32 0.0, %v2145
        %2147 = vmatmul.f32.gmra.mxu0 %v334
        %v2148 = vpop.f32.mrf.mxu0
        %v2149 = vadd.f32 0.0, %v2148
        %2150 = vmatmul.f32.gmra.mxu0 %v335
        %v2151 = vpop.f32.mrf.mxu0
        %v2152 = vadd.f32 0.0, %v2151
        %2153 = vmatmul.f32.gmra.mxu0 %v336
        %v2154 = vpop.f32.mrf.mxu0
        %v2155 = vadd.f32 0.0, %v2154
        %2156 = vmatmul.f32.gmra.mxu0 %v337
        %v2157 = vpop.f32.mrf.mxu0
        %v2158 = vadd.f32 0.0, %v2157
        %2159 = vmatmul.f32.gmra.mxu0 %v338
        %v2160 = vpop.f32.mrf.mxu0
        %v2161 = vadd.f32 0.0, %v2160
        %2162 = vmatmul.f32.gmra.mxu0 %v339
        %v2163 = vpop.f32.mrf.mxu0
        %v2164 = vadd.f32 0.0, %v2163
        %2165 = vmatmul.f32.gmra.mxu0 %v340
        %v2166 = vpop.f32.mrf.mxu0
        %v2167 = vadd.f32 0.0, %v2166
        %2168 = vmatmul.f32.gmra.mxu0 %v341
        %v2169 = vpop.f32.mrf.mxu0
        %v2170 = vadd.f32 0.0, %v2169
        %2171 = vmatmul.f32.gmra.mxu0 %v342
        %v2172 = vpop.f32.mrf.mxu0
        %v2173 = vadd.f32 0.0, %v2172
        %2174 = vmatmul.f32.gmra.mxu0 %v343
        %v2175 = vpop.f32.mrf.mxu0
        %v2176 = vadd.f32 0.0, %v2175
        %2177 = vmatmul.f32.gmra.mxu0 %v344
        %v2178 = vpop.f32.mrf.mxu0
        %v2179 = vadd.f32 0.0, %v2178
        %2180 = vmatmul.f32.gmra.mxu0 %v345
        %v2181 = vpop.f32.mrf.mxu0
        %v2182 = vadd.f32 0.0, %v2181
        %2183 = vmatmul.f32.gmra.mxu0 %v346
        %v2184 = vpop.f32.mrf.mxu0
        %v2185 = vadd.f32 0.0, %v2184
        %2186 = vmatmul.f32.gmra.mxu0 %v347
        %v2187 = vpop.f32.mrf.mxu0
        %v2188 = vadd.f32 0.0, %v2187
        %2189 = vdwg.mxu0
        %v2191 = vsel %vm873, %v2143, 0
        %v2194 = vsel %vm873, %v2146, 0
        %v2197 = vsel %vm873, %v2149, 0
        %v2200 = vsel %vm873, %v2152, 0
        %v2203 = vsel %vm873, %v2155, 0
        %v2206 = vsel %vm873, %v2158, 0
        %v2209 = vsel %vm873, %v2161, 0
        %v2212 = vsel %vm873, %v2164, 0
        %v2215 = vsel %vm873, %v2167, 0
        %v2218 = vsel %vm873, %v2170, 0
        %v2221 = vsel %vm873, %v2173, 0
        %v2224 = vsel %vm873, %v2176, 0
        %v2227 = vsel %vm873, %v2179, 0
        %v2230 = vsel %vm873, %v2182, 0
        %v2233 = vsel %vm873, %v2185, 0
        %v2236 = vsel %vm873, %v2188, 0
        %2238 = vmatpush.msra.mxu0 0.0
        %2239 = vmatpush.msra.mxu0 0.0
        %2240 = vmatpush.msra.mxu0 0.0
        %2241 = vmatpush.msra.mxu0 0.0
        %2242 = vmatpush.msra.mxu0 0.0
        %2243 = vmatpush.msra.mxu0 0.0
        %2244 = vmatpush.msra.mxu0 0.0
        %2245 = vmatpush.msra.mxu0 0.0
        %2246 = vmatpush.msra.mxu0 0.0
        %2247 = vmatpush.msra.mxu0 0.0
        %2248 = vmatpush.msra.mxu0 0.0
        %2249 = vmatpush.msra.mxu0 0.0
        %2250 = vmatpush.msra.mxu0 %v353
        %2251 = vmatpush.msra.mxu0 %v352
        %2252 = vmatpush.msra.mxu0 %v351
        %2253 = vmatpush.msra.mxu0 %v350
        %2254 = vmatmul.f32.gmra.mxu0 %v2191
        %v2255 = vpop.f32.mrf.mxu0
        %v2256 = vadd.f32 0.0, %v2255
        %2257 = vmatmul.f32.gmra.mxu0 %v2194
        %v2258 = vpop.f32.mrf.mxu0
        %v2259 = vadd.f32 0.0, %v2258
        %2260 = vmatmul.f32.gmra.mxu0 %v2197
        %v2261 = vpop.f32.mrf.mxu0
        %v2262 = vadd.f32 0.0, %v2261
        %2263 = vmatmul.f32.gmra.mxu0 %v2200
        %v2264 = vpop.f32.mrf.mxu0
        %v2265 = vadd.f32 0.0, %v2264
        %2266 = vmatmul.f32.gmra.mxu0 %v2203
        %v2267 = vpop.f32.mrf.mxu0
        %v2268 = vadd.f32 0.0, %v2267
        %2269 = vmatmul.f32.gmra.mxu0 %v2206
        %v2270 = vpop.f32.mrf.mxu0
        %v2271 = vadd.f32 0.0, %v2270
        %2272 = vmatmul.f32.gmra.mxu0 %v2209
        %v2273 = vpop.f32.mrf.mxu0
        %v2274 = vadd.f32 0.0, %v2273
        %2275 = vmatmul.f32.gmra.mxu0 %v2212
        %v2276 = vpop.f32.mrf.mxu0
        %v2277 = vadd.f32 0.0, %v2276
        %2278 = vmatmul.f32.gmra.mxu0 %v2215
        %v2279 = vpop.f32.mrf.mxu0
        %v2280 = vadd.f32 0.0, %v2279
        %2281 = vmatmul.f32.gmra.mxu0 %v2218
        %v2282 = vpop.f32.mrf.mxu0
        %v2283 = vadd.f32 0.0, %v2282
        %2284 = vmatmul.f32.gmra.mxu0 %v2221
        %v2285 = vpop.f32.mrf.mxu0
        %v2286 = vadd.f32 0.0, %v2285
        %2287 = vmatmul.f32.gmra.mxu0 %v2224
        %v2288 = vpop.f32.mrf.mxu0
        %v2289 = vadd.f32 0.0, %v2288
        %2290 = vmatmul.f32.gmra.mxu0 %v2227
        %v2291 = vpop.f32.mrf.mxu0
        %v2292 = vadd.f32 0.0, %v2291
        %2293 = vmatmul.f32.gmra.mxu0 %v2230
        %v2294 = vpop.f32.mrf.mxu0
        %v2295 = vadd.f32 0.0, %v2294
        %2296 = vmatmul.f32.gmra.mxu0 %v2233
        %v2297 = vpop.f32.mrf.mxu0
        %v2298 = vadd.f32 0.0, %v2297
        %2299 = vmatmul.f32.gmra.mxu0 %v2236
        %v2300 = vpop.f32.mrf.mxu0
        %v2301 = vadd.f32 0.0, %v2300
        %2302 = vdwg.mxu0
        %v2303 = vadd.f32 %v425, %v2256
        %v2304 = vadd.f32 %v428, %v2259
        %v2305 = vadd.f32 %v431, %v2262
        %v2306 = vadd.f32 %v434, %v2265
        %v2307 = vadd.f32 %v437, %v2268
        %v2308 = vadd.f32 %v440, %v2271
        %v2309 = vadd.f32 %v443, %v2274
        %v2310 = vadd.f32 %v446, %v2277
        %v2311 = vadd.f32 %v449, %v2280
        %v2312 = vadd.f32 %v452, %v2283
        %v2313 = vadd.f32 %v455, %v2286
        %v2314 = vadd.f32 %v458, %v2289
        %v2315 = vadd.f32 %v461, %v2292
        %v2316 = vadd.f32 %v464, %v2295
        %v2317 = vadd.f32 %v467, %v2298
        %v2318 = vadd.f32 %v470, %v2301
        %v2319 = vmul.f32 %v2303, 0.5
        %v2320 = vmul.f32 %v2304, 0.5
        %v2321 = vmul.f32 %v2305, 0.5
        %v2322 = vmul.f32 %v2306, 0.5
        %v2323 = vmul.f32 %v2307, 0.5
        %v2324 = vmul.f32 %v2308, 0.5
        %v2325 = vmul.f32 %v2309, 0.5
        %v2326 = vmul.f32 %v2310, 0.5
        %v2327 = vmul.f32 %v2311, 0.5
        %v2328 = vmul.f32 %v2312, 0.5
        %v2329 = vmul.f32 %v2313, 0.5
        %v2330 = vmul.f32 %v2314, 0.5
        %v2331 = vmul.f32 %v2315, 0.5
        %v2332 = vmul.f32 %v2316, 0.5
        %v2333 = vmul.f32 %v2317, 0.5
        %v2334 = vmul.f32 %v2318, 0.5
        %v2335 = vtanh.pop %v2319
        %v2336 = vtanh.pop %v2320
        %v2337 = vtanh.pop %v2321
        %v2338 = vtanh.pop %v2322
        %v2339 = vtanh.pop %v2323
        %v2340 = vtanh.pop %v2324
        %v2341 = vtanh.pop %v2325
        %v2342 = vtanh.pop %v2326
        %v2343 = vtanh.pop %v2327
        %v2344 = vtanh.pop %v2328
        %v2345 = vtanh.pop %v2329
        %v2346 = vtanh.pop %v2330
        %v2347 = vtanh.pop %v2331
        %v2348 = vtanh.pop %v2332
        %v2349 = vtanh.pop %v2333
        %v2350 = vtanh.pop %v2334
        %v2351 = vmul.f32 %v2335, 0.5
        %v2352 = vmul.f32 %v2336, 0.5
        %v2353 = vmul.f32 %v2337, 0.5
        %v2354 = vmul.f32 %v2338, 0.5
        %v2355 = vmul.f32 %v2339, 0.5
        %v2356 = vmul.f32 %v2340, 0.5
        %v2357 = vmul.f32 %v2341, 0.5
        %v2358 = vmul.f32 %v2342, 0.5
        %v2359 = vmul.f32 %v2343, 0.5
        %v2360 = vmul.f32 %v2344, 0.5
        %v2361 = vmul.f32 %v2345, 0.5
        %v2362 = vmul.f32 %v2346, 0.5
        %v2363 = vmul.f32 %v2347, 0.5
        %v2364 = vmul.f32 %v2348, 0.5
        %v2365 = vmul.f32 %v2349, 0.5
        %v2366 = vmul.f32 %v2350, 0.5
        %v2367 = vadd.f32 %v2351, 0.5
        %v2368 = vadd.f32 %v2352, 0.5
        %v2369 = vadd.f32 %v2353, 0.5
        %v2370 = vadd.f32 %v2354, 0.5
        %v2371 = vadd.f32 %v2355, 0.5
        %v2372 = vadd.f32 %v2356, 0.5
        %v2373 = vadd.f32 %v2357, 0.5
        %v2374 = vadd.f32 %v2358, 0.5
        %v2375 = vadd.f32 %v2359, 0.5
        %v2376 = vadd.f32 %v2360, 0.5
        %v2377 = vadd.f32 %v2361, 0.5
        %v2378 = vadd.f32 %v2362, 0.5
        %v2379 = vadd.f32 %v2363, 0.5
        %v2380 = vadd.f32 %v2364, 0.5
        %v2381 = vadd.f32 %v2365, 0.5
        %v2382 = vadd.f32 %v2366, 0.5
        %v2383 = vmul.f32 %v2367, 2.0
        %v2384 = vmul.f32 %v2368, 2.0
        %v2385 = vmul.f32 %v2369, 2.0
        %v2386 = vmul.f32 %v2370, 2.0
        %v2387 = vmul.f32 %v2371, 2.0
        %v2388 = vmul.f32 %v2372, 2.0
        %v2389 = vmul.f32 %v2373, 2.0
        %v2390 = vmul.f32 %v2374, 2.0
        %v2391 = vmul.f32 %v2375, 2.0
        %v2392 = vmul.f32 %v2376, 2.0
        %v2393 = vmul.f32 %v2377, 2.0
        %v2394 = vmul.f32 %v2378, 2.0
        %v2395 = vmul.f32 %v2379, 2.0
        %v2396 = vmul.f32 %v2380, 2.0
        %v2397 = vmul.f32 %v2381, 2.0
        %v2398 = vmul.f32 %v2382, 2.0
        %v2399 = vsub.f32 %v2383, 1.0
        %v2400 = vsub.f32 %v2384, 1.0
        %v2401 = vsub.f32 %v2385, 1.0
        %v2402 = vsub.f32 %v2386, 1.0
        %v2403 = vsub.f32 %v2387, 1.0
        %v2404 = vsub.f32 %v2388, 1.0
        %v2405 = vsub.f32 %v2389, 1.0
        %v2406 = vsub.f32 %v2390, 1.0
        %v2407 = vsub.f32 %v2391, 1.0
        %v2408 = vsub.f32 %v2392, 1.0
        %v2409 = vsub.f32 %v2393, 1.0
        %v2410 = vsub.f32 %v2394, 1.0
        %v2411 = vsub.f32 %v2395, 1.0
        %v2412 = vsub.f32 %v2396, 1.0
        %v2413 = vsub.f32 %v2397, 1.0
        %v2414 = vsub.f32 %v2398, 1.0
        %v2415 = vmul.f32 %v2367, %v1949
        %v2416 = vmul.f32 %v2368, %v1950
        %v2417 = vmul.f32 %v2369, %v1951
        %v2418 = vmul.f32 %v2370, %v1952
        %v2419 = vmul.f32 %v2371, %v1953
        %v2420 = vmul.f32 %v2372, %v1954
        %v2421 = vmul.f32 %v2373, %v1955
        %v2422 = vmul.f32 %v2374, %v1956
        %v2423 = vmul.f32 %v2375, %v1957
        %v2424 = vmul.f32 %v2376, %v1958
        %v2425 = vmul.f32 %v2377, %v1959
        %v2426 = vmul.f32 %v2378, %v1960
        %v2427 = vmul.f32 %v2379, %v1961
        %v2428 = vmul.f32 %v2380, %v1962
        %v2429 = vmul.f32 %v2381, %v1963
        %v2430 = vmul.f32 %v2382, %v1964
        %2447 = vrot.lane.b32.xlu0 %v2399, 64
        %v2448 = vpop.permute.xlu0 %2447
        %2449 = vrot.lane.b32.xlu0 %v2400, 64
        %v2450 = vpop.permute.xlu0 %2449
        %2451 = vrot.lane.b32.xlu0 %v2401, 64
        %v2452 = vpop.permute.xlu0 %2451
        %2453 = vrot.lane.b32.xlu0 %v2402, 64
        %v2454 = vpop.permute.xlu0 %2453
        %2455 = vrot.lane.b32.xlu0 %v2403, 64
        %v2456 = vpop.permute.xlu0 %2455
        %2457 = vrot.lane.b32.xlu0 %v2404, 64
        %v2458 = vpop.permute.xlu0 %2457
        %2459 = vrot.lane.b32.xlu0 %v2405, 64
        %v2460 = vpop.permute.xlu0 %2459
        %2461 = vrot.lane.b32.xlu0 %v2406, 64
        %v2462 = vpop.permute.xlu0 %2461
        %2463 = vrot.lane.b32.xlu0 %v2407, 64
        %v2464 = vpop.permute.xlu0 %2463
        %2465 = vrot.lane.b32.xlu0 %v2408, 64
        %v2466 = vpop.permute.xlu0 %2465
        %2467 = vrot.lane.b32.xlu0 %v2409, 64
        %v2468 = vpop.permute.xlu0 %2467
        %2469 = vrot.lane.b32.xlu0 %v2410, 64
        %v2470 = vpop.permute.xlu0 %2469
        %2471 = vrot.lane.b32.xlu0 %v2411, 64
        %v2472 = vpop.permute.xlu0 %2471
        %2473 = vrot.lane.b32.xlu0 %v2412, 64
        %v2474 = vpop.permute.xlu0 %2473
        %2475 = vrot.lane.b32.xlu0 %v2413, 64
        %v2476 = vpop.permute.xlu0 %2475
        %2477 = vrot.lane.b32.xlu0 %v2414, 64
        %v2478 = vpop.permute.xlu0 %2477
        %v2495 = vmul.f32 %v2367, %v2448
        %v2496 = vmul.f32 %v2368, %v2450
        %v2497 = vmul.f32 %v2369, %v2452
        %v2498 = vmul.f32 %v2370, %v2454
        %v2499 = vmul.f32 %v2371, %v2456
        %v2500 = vmul.f32 %v2372, %v2458
        %v2501 = vmul.f32 %v2373, %v2460
        %v2502 = vmul.f32 %v2374, %v2462
        %v2503 = vmul.f32 %v2375, %v2464
        %v2504 = vmul.f32 %v2376, %v2466
        %v2505 = vmul.f32 %v2377, %v2468
        %v2506 = vmul.f32 %v2378, %v2470
        %v2507 = vmul.f32 %v2379, %v2472
        %v2508 = vmul.f32 %v2380, %v2474
        %v2509 = vmul.f32 %v2381, %v2476
        %v2510 = vmul.f32 %v2382, %v2478
        %2527 = vrot.lane.b32.xlu0 %v2495, 32
        %v2528 = vpop.permute.xlu0 %2527
        %2529 = vrot.lane.b32.xlu0 %v2496, 32
        %v2530 = vpop.permute.xlu0 %2529
        %2531 = vrot.lane.b32.xlu0 %v2497, 32
        %v2532 = vpop.permute.xlu0 %2531
        %2533 = vrot.lane.b32.xlu0 %v2498, 32
        %v2534 = vpop.permute.xlu0 %2533
        %2535 = vrot.lane.b32.xlu0 %v2499, 32
        %v2536 = vpop.permute.xlu0 %2535
        %2537 = vrot.lane.b32.xlu0 %v2500, 32
        %v2538 = vpop.permute.xlu0 %2537
        %2539 = vrot.lane.b32.xlu0 %v2501, 32
        %v2540 = vpop.permute.xlu0 %2539
        %2541 = vrot.lane.b32.xlu0 %v2502, 32
        %v2542 = vpop.permute.xlu0 %2541
        %2543 = vrot.lane.b32.xlu0 %v2503, 32
        %v2544 = vpop.permute.xlu0 %2543
        %2545 = vrot.lane.b32.xlu0 %v2504, 32
        %v2546 = vpop.permute.xlu0 %2545
        %2547 = vrot.lane.b32.xlu0 %v2505, 32
        %v2548 = vpop.permute.xlu0 %2547
        %2549 = vrot.lane.b32.xlu0 %v2506, 32
        %v2550 = vpop.permute.xlu0 %2549
        %2551 = vrot.lane.b32.xlu0 %v2507, 32
        %v2552 = vpop.permute.xlu0 %2551
        %2553 = vrot.lane.b32.xlu0 %v2508, 32
        %v2554 = vpop.permute.xlu0 %2553
        %2555 = vrot.lane.b32.xlu0 %v2509, 32
        %v2556 = vpop.permute.xlu0 %2555
        %2557 = vrot.lane.b32.xlu0 %v2510, 32
        %v2558 = vpop.permute.xlu0 %2557
        %v2575 = vadd.f32 %v2415, %v2528
        %v2576 = vadd.f32 %v2416, %v2530
        %v2577 = vadd.f32 %v2417, %v2532
        %v2578 = vadd.f32 %v2418, %v2534
        %v2579 = vadd.f32 %v2419, %v2536
        %v2580 = vadd.f32 %v2420, %v2538
        %v2581 = vadd.f32 %v2421, %v2540
        %v2582 = vadd.f32 %v2422, %v2542
        %v2583 = vadd.f32 %v2423, %v2544
        %v2584 = vadd.f32 %v2424, %v2546
        %v2585 = vadd.f32 %v2425, %v2548
        %v2586 = vadd.f32 %v2426, %v2550
        %v2587 = vadd.f32 %v2427, %v2552
        %v2588 = vadd.f32 %v2428, %v2554
        %v2589 = vadd.f32 %v2429, %v2556
        %v2590 = vadd.f32 %v2430, %v2558
        %v2591 = vtanh.pop %v2575
        %v2592 = vtanh.pop %v2576
        %v2593 = vtanh.pop %v2577
        %v2594 = vtanh.pop %v2578
        %v2595 = vtanh.pop %v2579
        %v2596 = vtanh.pop %v2580
        %v2597 = vtanh.pop %v2581
        %v2598 = vtanh.pop %v2582
        %v2599 = vtanh.pop %v2583
        %v2600 = vtanh.pop %v2584
        %v2601 = vtanh.pop %v2585
        %v2602 = vtanh.pop %v2586
        %v2603 = vtanh.pop %v2587
        %v2604 = vtanh.pop %v2588
        %v2605 = vtanh.pop %v2589
        %v2606 = vtanh.pop %v2590
        %2623 = vrot.lane.b32.xlu0 %v2591, 64
        %v2624 = vpop.permute.xlu0 %2623
        %2625 = vrot.lane.b32.xlu0 %v2592, 64
        %v2626 = vpop.permute.xlu0 %2625
        %2627 = vrot.lane.b32.xlu0 %v2593, 64
        %v2628 = vpop.permute.xlu0 %2627
        %2629 = vrot.lane.b32.xlu0 %v2594, 64
        %v2630 = vpop.permute.xlu0 %2629
        %2631 = vrot.lane.b32.xlu0 %v2595, 64
        %v2632 = vpop.permute.xlu0 %2631
        %2633 = vrot.lane.b32.xlu0 %v2596, 64
        %v2634 = vpop.permute.xlu0 %2633
        %2635 = vrot.lane.b32.xlu0 %v2597, 64
        %v2636 = vpop.permute.xlu0 %2635
        %2637 = vrot.lane.b32.xlu0 %v2598, 64
        %v2638 = vpop.permute.xlu0 %2637
        %2639 = vrot.lane.b32.xlu0 %v2599, 64
        %v2640 = vpop.permute.xlu0 %2639
        %2641 = vrot.lane.b32.xlu0 %v2600, 64
        %v2642 = vpop.permute.xlu0 %2641
        %2643 = vrot.lane.b32.xlu0 %v2601, 64
        %v2644 = vpop.permute.xlu0 %2643
        %2645 = vrot.lane.b32.xlu0 %v2602, 64
        %v2646 = vpop.permute.xlu0 %2645
        %2647 = vrot.lane.b32.xlu0 %v2603, 64
        %v2648 = vpop.permute.xlu0 %2647
        %2649 = vrot.lane.b32.xlu0 %v2604, 64
        %v2650 = vpop.permute.xlu0 %2649
        %2651 = vrot.lane.b32.xlu0 %v2605, 64
        %v2652 = vpop.permute.xlu0 %2651
        %2653 = vrot.lane.b32.xlu0 %v2606, 64
        %v2654 = vpop.permute.xlu0 %2653
        %v2671 = vmul.f32 %v2367, %v2624
        %v2672 = vmul.f32 %v2368, %v2626
        %v2673 = vmul.f32 %v2369, %v2628
        %v2674 = vmul.f32 %v2370, %v2630
        %v2675 = vmul.f32 %v2371, %v2632
        %v2676 = vmul.f32 %v2372, %v2634
        %v2677 = vmul.f32 %v2373, %v2636
        %v2678 = vmul.f32 %v2374, %v2638
        %v2679 = vmul.f32 %v2375, %v2640
        %v2680 = vmul.f32 %v2376, %v2642
        %v2681 = vmul.f32 %v2377, %v2644
        %v2682 = vmul.f32 %v2378, %v2646
        %v2683 = vmul.f32 %v2379, %v2648
        %v2684 = vmul.f32 %v2380, %v2650
        %v2685 = vmul.f32 %v2381, %v2652
        %v2686 = vmul.f32 %v2382, %v2654
        %2703 = vrot.lane.b32.xlu0 %v2671, 32
        %v2704 = vpop.permute.xlu0 %2703
        %2705 = vrot.lane.b32.xlu0 %v2672, 32
        %v2706 = vpop.permute.xlu0 %2705
        %2707 = vrot.lane.b32.xlu0 %v2673, 32
        %v2708 = vpop.permute.xlu0 %2707
        %2709 = vrot.lane.b32.xlu0 %v2674, 32
        %v2710 = vpop.permute.xlu0 %2709
        %2711 = vrot.lane.b32.xlu0 %v2675, 32
        %v2712 = vpop.permute.xlu0 %2711
        %2713 = vrot.lane.b32.xlu0 %v2676, 32
        %v2714 = vpop.permute.xlu0 %2713
        %2715 = vrot.lane.b32.xlu0 %v2677, 32
        %v2716 = vpop.permute.xlu0 %2715
        %2717 = vrot.lane.b32.xlu0 %v2678, 32
        %v2718 = vpop.permute.xlu0 %2717
        %2719 = vrot.lane.b32.xlu0 %v2679, 32
        %v2720 = vpop.permute.xlu0 %2719
        %2721 = vrot.lane.b32.xlu0 %v2680, 32
        %v2722 = vpop.permute.xlu0 %2721
        %2723 = vrot.lane.b32.xlu0 %v2681, 32
        %v2724 = vpop.permute.xlu0 %2723
        %2725 = vrot.lane.b32.xlu0 %v2682, 32
        %v2726 = vpop.permute.xlu0 %2725
        %2727 = vrot.lane.b32.xlu0 %v2683, 32
        %v2728 = vpop.permute.xlu0 %2727
        %2729 = vrot.lane.b32.xlu0 %v2684, 32
        %v2730 = vpop.permute.xlu0 %2729
        %2731 = vrot.lane.b32.xlu0 %v2685, 32
        %v2732 = vpop.permute.xlu0 %2731
        %2733 = vrot.lane.b32.xlu0 %v2686, 32
        %v2734 = vpop.permute.xlu0 %2733
        %2751 = vmatpush.msra.mxu0 %v2734
        %2752 = vmatpush.msra.mxu0 %v2732
        %2753 = vmatpush.msra.mxu0 %v2730
        %2754 = vmatpush.msra.mxu0 %v2728
        %2755 = vmatpush.msra.mxu0 %v2726
        %2756 = vmatpush.msra.mxu0 %v2724
        %2757 = vmatpush.msra.mxu0 %v2722
        %2758 = vmatpush.msra.mxu0 %v2720
        %2759 = vmatpush.msra.mxu0 %v2718
        %2760 = vmatpush.msra.mxu0 %v2716
        %2761 = vmatpush.msra.mxu0 %v2714
        %2762 = vmatpush.msra.mxu0 %v2712
        %2763 = vmatpush.msra.mxu0 %v2710
        %2764 = vmatpush.msra.mxu0 %v2708
        %2765 = vmatpush.msra.mxu0 %v2706
        %2766 = vmatpush.msra.mxu0 %v2704
        %2767 = vmatmul.f32.gmra.mxu0 %v332
        %v2768 = vpop.f32.mrf.mxu0
        %v2769 = vadd.f32 0.0, %v2768
        %2770 = vmatmul.f32.gmra.mxu0 %v333
        %v2771 = vpop.f32.mrf.mxu0
        %v2772 = vadd.f32 0.0, %v2771
        %2773 = vmatmul.f32.gmra.mxu0 %v334
        %v2774 = vpop.f32.mrf.mxu0
        %v2775 = vadd.f32 0.0, %v2774
        %2776 = vmatmul.f32.gmra.mxu0 %v335
        %v2777 = vpop.f32.mrf.mxu0
        %v2778 = vadd.f32 0.0, %v2777
        %2779 = vmatmul.f32.gmra.mxu0 %v336
        %v2780 = vpop.f32.mrf.mxu0
        %v2781 = vadd.f32 0.0, %v2780
        %2782 = vmatmul.f32.gmra.mxu0 %v337
        %v2783 = vpop.f32.mrf.mxu0
        %v2784 = vadd.f32 0.0, %v2783
        %2785 = vmatmul.f32.gmra.mxu0 %v338
        %v2786 = vpop.f32.mrf.mxu0
        %v2787 = vadd.f32 0.0, %v2786
        %2788 = vmatmul.f32.gmra.mxu0 %v339
        %v2789 = vpop.f32.mrf.mxu0
        %v2790 = vadd.f32 0.0, %v2789
        %2791 = vmatmul.f32.gmra.mxu0 %v340
        %v2792 = vpop.f32.mrf.mxu0
        %v2793 = vadd.f32 0.0, %v2792
        %2794 = vmatmul.f32.gmra.mxu0 %v341
        %v2795 = vpop.f32.mrf.mxu0
        %v2796 = vadd.f32 0.0, %v2795
        %2797 = vmatmul.f32.gmra.mxu0 %v342
        %v2798 = vpop.f32.mrf.mxu0
        %v2799 = vadd.f32 0.0, %v2798
        %2800 = vmatmul.f32.gmra.mxu0 %v343
        %v2801 = vpop.f32.mrf.mxu0
        %v2802 = vadd.f32 0.0, %v2801
        %2803 = vmatmul.f32.gmra.mxu0 %v344
        %v2804 = vpop.f32.mrf.mxu0
        %v2805 = vadd.f32 0.0, %v2804
        %2806 = vmatmul.f32.gmra.mxu0 %v345
        %v2807 = vpop.f32.mrf.mxu0
        %v2808 = vadd.f32 0.0, %v2807
        %2809 = vmatmul.f32.gmra.mxu0 %v346
        %v2810 = vpop.f32.mrf.mxu0
        %v2811 = vadd.f32 0.0, %v2810
        %2812 = vmatmul.f32.gmra.mxu0 %v347
        %v2813 = vpop.f32.mrf.mxu0
        %v2814 = vadd.f32 0.0, %v2813
        %2815 = vdwg.mxu0
        %v2817 = vsel %vm873, %v2769, 0
        %v2820 = vsel %vm873, %v2772, 0
        %v2823 = vsel %vm873, %v2775, 0
        %v2826 = vsel %vm873, %v2778, 0
        %v2829 = vsel %vm873, %v2781, 0
        %v2832 = vsel %vm873, %v2784, 0
        %v2835 = vsel %vm873, %v2787, 0
        %v2838 = vsel %vm873, %v2790, 0
        %v2841 = vsel %vm873, %v2793, 0
        %v2844 = vsel %vm873, %v2796, 0
        %v2847 = vsel %vm873, %v2799, 0
        %v2850 = vsel %vm873, %v2802, 0
        %v2853 = vsel %vm873, %v2805, 0
        %v2856 = vsel %vm873, %v2808, 0
        %v2859 = vsel %vm873, %v2811, 0
        %v2862 = vsel %vm873, %v2814, 0
        %2864 = vmatpush.msra.mxu0 0.0
        %2865 = vmatpush.msra.mxu0 0.0
        %2866 = vmatpush.msra.mxu0 0.0
        %2867 = vmatpush.msra.mxu0 0.0
        %2868 = vmatpush.msra.mxu0 0.0
        %2869 = vmatpush.msra.mxu0 0.0
        %2870 = vmatpush.msra.mxu0 0.0
        %2871 = vmatpush.msra.mxu0 0.0
        %2872 = vmatpush.msra.mxu0 0.0
        %2873 = vmatpush.msra.mxu0 0.0
        %2874 = vmatpush.msra.mxu0 0.0
        %2875 = vmatpush.msra.mxu0 0.0
        %2876 = vmatpush.msra.mxu0 %v353
        %2877 = vmatpush.msra.mxu0 %v352
        %2878 = vmatpush.msra.mxu0 %v351
        %2879 = vmatpush.msra.mxu0 %v350
        %2880 = vmatmul.f32.gmra.mxu0 %v2817
        %v2881 = vpop.f32.mrf.mxu0
        %v2882 = vadd.f32 0.0, %v2881
        %2883 = vmatmul.f32.gmra.mxu0 %v2820
        %v2884 = vpop.f32.mrf.mxu0
        %v2885 = vadd.f32 0.0, %v2884
        %2886 = vmatmul.f32.gmra.mxu0 %v2823
        %v2887 = vpop.f32.mrf.mxu0
        %v2888 = vadd.f32 0.0, %v2887
        %2889 = vmatmul.f32.gmra.mxu0 %v2826
        %v2890 = vpop.f32.mrf.mxu0
        %v2891 = vadd.f32 0.0, %v2890
        %2892 = vmatmul.f32.gmra.mxu0 %v2829
        %v2893 = vpop.f32.mrf.mxu0
        %v2894 = vadd.f32 0.0, %v2893
        %2895 = vmatmul.f32.gmra.mxu0 %v2832
        %v2896 = vpop.f32.mrf.mxu0
        %v2897 = vadd.f32 0.0, %v2896
        %2898 = vmatmul.f32.gmra.mxu0 %v2835
        %v2899 = vpop.f32.mrf.mxu0
        %v2900 = vadd.f32 0.0, %v2899
        %2901 = vmatmul.f32.gmra.mxu0 %v2838
        %v2902 = vpop.f32.mrf.mxu0
        %v2903 = vadd.f32 0.0, %v2902
        %2904 = vmatmul.f32.gmra.mxu0 %v2841
        %v2905 = vpop.f32.mrf.mxu0
        %v2906 = vadd.f32 0.0, %v2905
        %2907 = vmatmul.f32.gmra.mxu0 %v2844
        %v2908 = vpop.f32.mrf.mxu0
        %v2909 = vadd.f32 0.0, %v2908
        %2910 = vmatmul.f32.gmra.mxu0 %v2847
        %v2911 = vpop.f32.mrf.mxu0
        %v2912 = vadd.f32 0.0, %v2911
        %2913 = vmatmul.f32.gmra.mxu0 %v2850
        %v2914 = vpop.f32.mrf.mxu0
        %v2915 = vadd.f32 0.0, %v2914
        %2916 = vmatmul.f32.gmra.mxu0 %v2853
        %v2917 = vpop.f32.mrf.mxu0
        %v2918 = vadd.f32 0.0, %v2917
        %2919 = vmatmul.f32.gmra.mxu0 %v2856
        %v2920 = vpop.f32.mrf.mxu0
        %v2921 = vadd.f32 0.0, %v2920
        %2922 = vmatmul.f32.gmra.mxu0 %v2859
        %v2923 = vpop.f32.mrf.mxu0
        %v2924 = vadd.f32 0.0, %v2923
        %2925 = vmatmul.f32.gmra.mxu0 %v2862
        %v2926 = vpop.f32.mrf.mxu0
        %v2927 = vadd.f32 0.0, %v2926
        %2928 = vdwg.mxu0
        %v2929 = vadd.f32 %v425, %v2882
        %v2930 = vadd.f32 %v428, %v2885
        %v2931 = vadd.f32 %v431, %v2888
        %v2932 = vadd.f32 %v434, %v2891
        %v2933 = vadd.f32 %v437, %v2894
        %v2934 = vadd.f32 %v440, %v2897
        %v2935 = vadd.f32 %v443, %v2900
        %v2936 = vadd.f32 %v446, %v2903
        %v2937 = vadd.f32 %v449, %v2906
        %v2938 = vadd.f32 %v452, %v2909
        %v2939 = vadd.f32 %v455, %v2912
        %v2940 = vadd.f32 %v458, %v2915
        %v2941 = vadd.f32 %v461, %v2918
        %v2942 = vadd.f32 %v464, %v2921
        %v2943 = vadd.f32 %v467, %v2924
        %v2944 = vadd.f32 %v470, %v2927
        %v2945 = vmul.f32 %v2929, 0.5
        %v2946 = vmul.f32 %v2930, 0.5
        %v2947 = vmul.f32 %v2931, 0.5
        %v2948 = vmul.f32 %v2932, 0.5
        %v2949 = vmul.f32 %v2933, 0.5
        %v2950 = vmul.f32 %v2934, 0.5
        %v2951 = vmul.f32 %v2935, 0.5
        %v2952 = vmul.f32 %v2936, 0.5
        %v2953 = vmul.f32 %v2937, 0.5
        %v2954 = vmul.f32 %v2938, 0.5
        %v2955 = vmul.f32 %v2939, 0.5
        %v2956 = vmul.f32 %v2940, 0.5
        %v2957 = vmul.f32 %v2941, 0.5
        %v2958 = vmul.f32 %v2942, 0.5
        %v2959 = vmul.f32 %v2943, 0.5
        %v2960 = vmul.f32 %v2944, 0.5
        %v2961 = vtanh.pop %v2945
        %v2962 = vtanh.pop %v2946
        %v2963 = vtanh.pop %v2947
        %v2964 = vtanh.pop %v2948
        %v2965 = vtanh.pop %v2949
        %v2966 = vtanh.pop %v2950
        %v2967 = vtanh.pop %v2951
        %v2968 = vtanh.pop %v2952
        %v2969 = vtanh.pop %v2953
        %v2970 = vtanh.pop %v2954
        %v2971 = vtanh.pop %v2955
        %v2972 = vtanh.pop %v2956
        %v2973 = vtanh.pop %v2957
        %v2974 = vtanh.pop %v2958
        %v2975 = vtanh.pop %v2959
        %v2976 = vtanh.pop %v2960
        %v2977 = vmul.f32 %v2961, 0.5
        %v2978 = vmul.f32 %v2962, 0.5
        %v2979 = vmul.f32 %v2963, 0.5
        %v2980 = vmul.f32 %v2964, 0.5
        %v2981 = vmul.f32 %v2965, 0.5
        %v2982 = vmul.f32 %v2966, 0.5
        %v2983 = vmul.f32 %v2967, 0.5
        %v2984 = vmul.f32 %v2968, 0.5
        %v2985 = vmul.f32 %v2969, 0.5
        %v2986 = vmul.f32 %v2970, 0.5
        %v2987 = vmul.f32 %v2971, 0.5
        %v2988 = vmul.f32 %v2972, 0.5
        %v2989 = vmul.f32 %v2973, 0.5
        %v2990 = vmul.f32 %v2974, 0.5
        %v2991 = vmul.f32 %v2975, 0.5
        %v2992 = vmul.f32 %v2976, 0.5
        %v2993 = vadd.f32 %v2977, 0.5
        %v2994 = vadd.f32 %v2978, 0.5
        %v2995 = vadd.f32 %v2979, 0.5
        %v2996 = vadd.f32 %v2980, 0.5
        %v2997 = vadd.f32 %v2981, 0.5
        %v2998 = vadd.f32 %v2982, 0.5
        %v2999 = vadd.f32 %v2983, 0.5
        %v3000 = vadd.f32 %v2984, 0.5
        %v3001 = vadd.f32 %v2985, 0.5
        %v3002 = vadd.f32 %v2986, 0.5
        %v3003 = vadd.f32 %v2987, 0.5
        %v3004 = vadd.f32 %v2988, 0.5
        %v3005 = vadd.f32 %v2989, 0.5
        %v3006 = vadd.f32 %v2990, 0.5
        %v3007 = vadd.f32 %v2991, 0.5
        %v3008 = vadd.f32 %v2992, 0.5
        %v3009 = vmul.f32 %v2993, 2.0
        %v3010 = vmul.f32 %v2994, 2.0
        %v3011 = vmul.f32 %v2995, 2.0
        %v3012 = vmul.f32 %v2996, 2.0
        %v3013 = vmul.f32 %v2997, 2.0
        %v3014 = vmul.f32 %v2998, 2.0
        %v3015 = vmul.f32 %v2999, 2.0
        %v3016 = vmul.f32 %v3000, 2.0
        %v3017 = vmul.f32 %v3001, 2.0
        %v3018 = vmul.f32 %v3002, 2.0
        %v3019 = vmul.f32 %v3003, 2.0
        %v3020 = vmul.f32 %v3004, 2.0
        %v3021 = vmul.f32 %v3005, 2.0
        %v3022 = vmul.f32 %v3006, 2.0
        %v3023 = vmul.f32 %v3007, 2.0
        %v3024 = vmul.f32 %v3008, 2.0
        %v3025 = vsub.f32 %v3009, 1.0
        %v3026 = vsub.f32 %v3010, 1.0
        %v3027 = vsub.f32 %v3011, 1.0
        %v3028 = vsub.f32 %v3012, 1.0
        %v3029 = vsub.f32 %v3013, 1.0
        %v3030 = vsub.f32 %v3014, 1.0
        %v3031 = vsub.f32 %v3015, 1.0
        %v3032 = vsub.f32 %v3016, 1.0
        %v3033 = vsub.f32 %v3017, 1.0
        %v3034 = vsub.f32 %v3018, 1.0
        %v3035 = vsub.f32 %v3019, 1.0
        %v3036 = vsub.f32 %v3020, 1.0
        %v3037 = vsub.f32 %v3021, 1.0
        %v3038 = vsub.f32 %v3022, 1.0
        %v3039 = vsub.f32 %v3023, 1.0
        %v3040 = vsub.f32 %v3024, 1.0
        %v3041 = vmul.f32 %v2993, %v2575
        %v3042 = vmul.f32 %v2994, %v2576
        %v3043 = vmul.f32 %v2995, %v2577
        %v3044 = vmul.f32 %v2996, %v2578
        %v3045 = vmul.f32 %v2997, %v2579
        %v3046 = vmul.f32 %v2998, %v2580
        %v3047 = vmul.f32 %v2999, %v2581
        %v3048 = vmul.f32 %v3000, %v2582
        %v3049 = vmul.f32 %v3001, %v2583
        %v3050 = vmul.f32 %v3002, %v2584
        %v3051 = vmul.f32 %v3003, %v2585
        %v3052 = vmul.f32 %v3004, %v2586
        %v3053 = vmul.f32 %v3005, %v2587
        %v3054 = vmul.f32 %v3006, %v2588
        %v3055 = vmul.f32 %v3007, %v2589
        %v3056 = vmul.f32 %v3008, %v2590
        %3073 = vrot.lane.b32.xlu0 %v3025, 64
        %v3074 = vpop.permute.xlu0 %3073
        %3075 = vrot.lane.b32.xlu0 %v3026, 64
        %v3076 = vpop.permute.xlu0 %3075
        %3077 = vrot.lane.b32.xlu0 %v3027, 64
        %v3078 = vpop.permute.xlu0 %3077
        %3079 = vrot.lane.b32.xlu0 %v3028, 64
        %v3080 = vpop.permute.xlu0 %3079
        %3081 = vrot.lane.b32.xlu0 %v3029, 64
        %v3082 = vpop.permute.xlu0 %3081
        %3083 = vrot.lane.b32.xlu0 %v3030, 64
        %v3084 = vpop.permute.xlu0 %3083
        %3085 = vrot.lane.b32.xlu0 %v3031, 64
        %v3086 = vpop.permute.xlu0 %3085
        %3087 = vrot.lane.b32.xlu0 %v3032, 64
        %v3088 = vpop.permute.xlu0 %3087
        %3089 = vrot.lane.b32.xlu0 %v3033, 64
        %v3090 = vpop.permute.xlu0 %3089
        %3091 = vrot.lane.b32.xlu0 %v3034, 64
        %v3092 = vpop.permute.xlu0 %3091
        %3093 = vrot.lane.b32.xlu0 %v3035, 64
        %v3094 = vpop.permute.xlu0 %3093
        %3095 = vrot.lane.b32.xlu0 %v3036, 64
        %v3096 = vpop.permute.xlu0 %3095
        %3097 = vrot.lane.b32.xlu0 %v3037, 64
        %v3098 = vpop.permute.xlu0 %3097
        %3099 = vrot.lane.b32.xlu0 %v3038, 64
        %v3100 = vpop.permute.xlu0 %3099
        %3101 = vrot.lane.b32.xlu0 %v3039, 64
        %v3102 = vpop.permute.xlu0 %3101
        %3103 = vrot.lane.b32.xlu0 %v3040, 64
        %v3104 = vpop.permute.xlu0 %3103
        %v3121 = vmul.f32 %v2993, %v3074
        %v3122 = vmul.f32 %v2994, %v3076
        %v3123 = vmul.f32 %v2995, %v3078
        %v3124 = vmul.f32 %v2996, %v3080
        %v3125 = vmul.f32 %v2997, %v3082
        %v3126 = vmul.f32 %v2998, %v3084
        %v3127 = vmul.f32 %v2999, %v3086
        %v3128 = vmul.f32 %v3000, %v3088
        %v3129 = vmul.f32 %v3001, %v3090
        %v3130 = vmul.f32 %v3002, %v3092
        %v3131 = vmul.f32 %v3003, %v3094
        %v3132 = vmul.f32 %v3004, %v3096
        %v3133 = vmul.f32 %v3005, %v3098
        %v3134 = vmul.f32 %v3006, %v3100
        %v3135 = vmul.f32 %v3007, %v3102
        %v3136 = vmul.f32 %v3008, %v3104
        %3153 = vrot.lane.b32.xlu0 %v3121, 32
        %v3154 = vpop.permute.xlu0 %3153
        %3155 = vrot.lane.b32.xlu0 %v3122, 32
        %v3156 = vpop.permute.xlu0 %3155
        %3157 = vrot.lane.b32.xlu0 %v3123, 32
        %v3158 = vpop.permute.xlu0 %3157
        %3159 = vrot.lane.b32.xlu0 %v3124, 32
        %v3160 = vpop.permute.xlu0 %3159
        %3161 = vrot.lane.b32.xlu0 %v3125, 32
        %v3162 = vpop.permute.xlu0 %3161
        %3163 = vrot.lane.b32.xlu0 %v3126, 32
        %v3164 = vpop.permute.xlu0 %3163
        %3165 = vrot.lane.b32.xlu0 %v3127, 32
        %v3166 = vpop.permute.xlu0 %3165
        %3167 = vrot.lane.b32.xlu0 %v3128, 32
        %v3168 = vpop.permute.xlu0 %3167
        %3169 = vrot.lane.b32.xlu0 %v3129, 32
        %v3170 = vpop.permute.xlu0 %3169
        %3171 = vrot.lane.b32.xlu0 %v3130, 32
        %v3172 = vpop.permute.xlu0 %3171
        %3173 = vrot.lane.b32.xlu0 %v3131, 32
        %v3174 = vpop.permute.xlu0 %3173
        %3175 = vrot.lane.b32.xlu0 %v3132, 32
        %v3176 = vpop.permute.xlu0 %3175
        %3177 = vrot.lane.b32.xlu0 %v3133, 32
        %v3178 = vpop.permute.xlu0 %3177
        %3179 = vrot.lane.b32.xlu0 %v3134, 32
        %v3180 = vpop.permute.xlu0 %3179
        %3181 = vrot.lane.b32.xlu0 %v3135, 32
        %v3182 = vpop.permute.xlu0 %3181
        %3183 = vrot.lane.b32.xlu0 %v3136, 32
        %v3184 = vpop.permute.xlu0 %3183
        %v3201 = vadd.f32 %v3041, %v3154
        %v3202 = vadd.f32 %v3042, %v3156
        %v3203 = vadd.f32 %v3043, %v3158
        %v3204 = vadd.f32 %v3044, %v3160
        %v3205 = vadd.f32 %v3045, %v3162
        %v3206 = vadd.f32 %v3046, %v3164
        %v3207 = vadd.f32 %v3047, %v3166
        %v3208 = vadd.f32 %v3048, %v3168
        %v3209 = vadd.f32 %v3049, %v3170
        %v3210 = vadd.f32 %v3050, %v3172
        %v3211 = vadd.f32 %v3051, %v3174
        %v3212 = vadd.f32 %v3052, %v3176
        %v3213 = vadd.f32 %v3053, %v3178
        %v3214 = vadd.f32 %v3054, %v3180
        %v3215 = vadd.f32 %v3055, %v3182
        %v3216 = vadd.f32 %v3056, %v3184
        %v3217 = vtanh.pop %v3201
        %v3218 = vtanh.pop %v3202
        %v3219 = vtanh.pop %v3203
        %v3220 = vtanh.pop %v3204
        %v3221 = vtanh.pop %v3205
        %v3222 = vtanh.pop %v3206
        %v3223 = vtanh.pop %v3207
        %v3224 = vtanh.pop %v3208
        %v3225 = vtanh.pop %v3209
        %v3226 = vtanh.pop %v3210
        %v3227 = vtanh.pop %v3211
        %v3228 = vtanh.pop %v3212
        %v3229 = vtanh.pop %v3213
        %v3230 = vtanh.pop %v3214
        %v3231 = vtanh.pop %v3215
        %v3232 = vtanh.pop %v3216
        %3249 = vrot.lane.b32.xlu0 %v3217, 64
        %v3250 = vpop.permute.xlu0 %3249
        %3251 = vrot.lane.b32.xlu0 %v3218, 64
        %v3252 = vpop.permute.xlu0 %3251
        %3253 = vrot.lane.b32.xlu0 %v3219, 64
        %v3254 = vpop.permute.xlu0 %3253
        %3255 = vrot.lane.b32.xlu0 %v3220, 64
        %v3256 = vpop.permute.xlu0 %3255
        %3257 = vrot.lane.b32.xlu0 %v3221, 64
        %v3258 = vpop.permute.xlu0 %3257
        %3259 = vrot.lane.b32.xlu0 %v3222, 64
        %v3260 = vpop.permute.xlu0 %3259
        %3261 = vrot.lane.b32.xlu0 %v3223, 64
        %v3262 = vpop.permute.xlu0 %3261
        %3263 = vrot.lane.b32.xlu0 %v3224, 64
        %v3264 = vpop.permute.xlu0 %3263
        %3265 = vrot.lane.b32.xlu0 %v3225, 64
        %v3266 = vpop.permute.xlu0 %3265
        %3267 = vrot.lane.b32.xlu0 %v3226, 64
        %v3268 = vpop.permute.xlu0 %3267
        %3269 = vrot.lane.b32.xlu0 %v3227, 64
        %v3270 = vpop.permute.xlu0 %3269
        %3271 = vrot.lane.b32.xlu0 %v3228, 64
        %v3272 = vpop.permute.xlu0 %3271
        %3273 = vrot.lane.b32.xlu0 %v3229, 64
        %v3274 = vpop.permute.xlu0 %3273
        %3275 = vrot.lane.b32.xlu0 %v3230, 64
        %v3276 = vpop.permute.xlu0 %3275
        %3277 = vrot.lane.b32.xlu0 %v3231, 64
        %v3278 = vpop.permute.xlu0 %3277
        %3279 = vrot.lane.b32.xlu0 %v3232, 64
        %v3280 = vpop.permute.xlu0 %3279
        %v3297 = vmul.f32 %v2993, %v3250
        %v3298 = vmul.f32 %v2994, %v3252
        %v3299 = vmul.f32 %v2995, %v3254
        %v3300 = vmul.f32 %v2996, %v3256
        %v3301 = vmul.f32 %v2997, %v3258
        %v3302 = vmul.f32 %v2998, %v3260
        %v3303 = vmul.f32 %v2999, %v3262
        %v3304 = vmul.f32 %v3000, %v3264
        %v3305 = vmul.f32 %v3001, %v3266
        %v3306 = vmul.f32 %v3002, %v3268
        %v3307 = vmul.f32 %v3003, %v3270
        %v3308 = vmul.f32 %v3004, %v3272
        %v3309 = vmul.f32 %v3005, %v3274
        %v3310 = vmul.f32 %v3006, %v3276
        %v3311 = vmul.f32 %v3007, %v3278
        %v3312 = vmul.f32 %v3008, %v3280
        %3329 = vrot.lane.b32.xlu0 %v3297, 32
        %v3330 = vpop.permute.xlu0 %3329
        %3331 = vrot.lane.b32.xlu0 %v3298, 32
        %v3332 = vpop.permute.xlu0 %3331
        %3333 = vrot.lane.b32.xlu0 %v3299, 32
        %v3334 = vpop.permute.xlu0 %3333
        %3335 = vrot.lane.b32.xlu0 %v3300, 32
        %v3336 = vpop.permute.xlu0 %3335
        %3337 = vrot.lane.b32.xlu0 %v3301, 32
        %v3338 = vpop.permute.xlu0 %3337
        %3339 = vrot.lane.b32.xlu0 %v3302, 32
        %v3340 = vpop.permute.xlu0 %3339
        %3341 = vrot.lane.b32.xlu0 %v3303, 32
        %v3342 = vpop.permute.xlu0 %3341
        %3343 = vrot.lane.b32.xlu0 %v3304, 32
        %v3344 = vpop.permute.xlu0 %3343
        %3345 = vrot.lane.b32.xlu0 %v3305, 32
        %v3346 = vpop.permute.xlu0 %3345
        %3347 = vrot.lane.b32.xlu0 %v3306, 32
        %v3348 = vpop.permute.xlu0 %3347
        %3349 = vrot.lane.b32.xlu0 %v3307, 32
        %v3350 = vpop.permute.xlu0 %3349
        %3351 = vrot.lane.b32.xlu0 %v3308, 32
        %v3352 = vpop.permute.xlu0 %3351
        %3353 = vrot.lane.b32.xlu0 %v3309, 32
        %v3354 = vpop.permute.xlu0 %3353
        %3355 = vrot.lane.b32.xlu0 %v3310, 32
        %v3356 = vpop.permute.xlu0 %3355
        %3357 = vrot.lane.b32.xlu0 %v3311, 32
        %v3358 = vpop.permute.xlu0 %3357
        %3359 = vrot.lane.b32.xlu0 %v3312, 32
        %v3360 = vpop.permute.xlu0 %3359
        %3377 = vmatpush.msra.mxu0 %v3360
        %3378 = vmatpush.msra.mxu0 %v3358
        %3379 = vmatpush.msra.mxu0 %v3356
        %3380 = vmatpush.msra.mxu0 %v3354
        %3381 = vmatpush.msra.mxu0 %v3352
        %3382 = vmatpush.msra.mxu0 %v3350
        %3383 = vmatpush.msra.mxu0 %v3348
        %3384 = vmatpush.msra.mxu0 %v3346
        %3385 = vmatpush.msra.mxu0 %v3344
        %3386 = vmatpush.msra.mxu0 %v3342
        %3387 = vmatpush.msra.mxu0 %v3340
        %3388 = vmatpush.msra.mxu0 %v3338
        %3389 = vmatpush.msra.mxu0 %v3336
        %3390 = vmatpush.msra.mxu0 %v3334
        %3391 = vmatpush.msra.mxu0 %v3332
        %3392 = vmatpush.msra.mxu0 %v3330
        %3393 = vmatmul.f32.gmra.mxu0 %v332
        %v3394 = vpop.f32.mrf.mxu0
        %v3395 = vadd.f32 0.0, %v3394
        %3396 = vmatmul.f32.gmra.mxu0 %v333
        %v3397 = vpop.f32.mrf.mxu0
        %v3398 = vadd.f32 0.0, %v3397
        %3399 = vmatmul.f32.gmra.mxu0 %v334
        %v3400 = vpop.f32.mrf.mxu0
        %v3401 = vadd.f32 0.0, %v3400
        %3402 = vmatmul.f32.gmra.mxu0 %v335
        %v3403 = vpop.f32.mrf.mxu0
        %v3404 = vadd.f32 0.0, %v3403
        %3405 = vmatmul.f32.gmra.mxu0 %v336
        %v3406 = vpop.f32.mrf.mxu0
        %v3407 = vadd.f32 0.0, %v3406
        %3408 = vmatmul.f32.gmra.mxu0 %v337
        %v3409 = vpop.f32.mrf.mxu0
        %v3410 = vadd.f32 0.0, %v3409
        %3411 = vmatmul.f32.gmra.mxu0 %v338
        %v3412 = vpop.f32.mrf.mxu0
        %v3413 = vadd.f32 0.0, %v3412
        %3414 = vmatmul.f32.gmra.mxu0 %v339
        %v3415 = vpop.f32.mrf.mxu0
        %v3416 = vadd.f32 0.0, %v3415
        %3417 = vmatmul.f32.gmra.mxu0 %v340
        %v3418 = vpop.f32.mrf.mxu0
        %v3419 = vadd.f32 0.0, %v3418
        %3420 = vmatmul.f32.gmra.mxu0 %v341
        %v3421 = vpop.f32.mrf.mxu0
        %v3422 = vadd.f32 0.0, %v3421
        %3423 = vmatmul.f32.gmra.mxu0 %v342
        %v3424 = vpop.f32.mrf.mxu0
        %v3425 = vadd.f32 0.0, %v3424
        %3426 = vmatmul.f32.gmra.mxu0 %v343
        %v3427 = vpop.f32.mrf.mxu0
        %v3428 = vadd.f32 0.0, %v3427
        %3429 = vmatmul.f32.gmra.mxu0 %v344
        %v3430 = vpop.f32.mrf.mxu0
        %v3431 = vadd.f32 0.0, %v3430
        %3432 = vmatmul.f32.gmra.mxu0 %v345
        %v3433 = vpop.f32.mrf.mxu0
        %v3434 = vadd.f32 0.0, %v3433
        %3435 = vmatmul.f32.gmra.mxu0 %v346
        %v3436 = vpop.f32.mrf.mxu0
        %v3437 = vadd.f32 0.0, %v3436
        %3438 = vmatmul.f32.gmra.mxu0 %v347
        %v3439 = vpop.f32.mrf.mxu0
        %v3440 = vadd.f32 0.0, %v3439
        %3441 = vdwg.mxu0
        %v3443 = vsel %vm873, %v3395, 0
        %v3446 = vsel %vm873, %v3398, 0
        %v3449 = vsel %vm873, %v3401, 0
        %v3452 = vsel %vm873, %v3404, 0
        %v3455 = vsel %vm873, %v3407, 0
        %v3458 = vsel %vm873, %v3410, 0
        %v3461 = vsel %vm873, %v3413, 0
        %v3464 = vsel %vm873, %v3416, 0
        %v3467 = vsel %vm873, %v3419, 0
        %v3470 = vsel %vm873, %v3422, 0
        %v3473 = vsel %vm873, %v3425, 0
        %v3476 = vsel %vm873, %v3428, 0
        %v3479 = vsel %vm873, %v3431, 0
        %v3482 = vsel %vm873, %v3434, 0
        %v3485 = vsel %vm873, %v3437, 0
        %v3488 = vsel %vm873, %v3440, 0
        %3490 = vmatpush.msra.mxu0 0.0
        %3491 = vmatpush.msra.mxu0 0.0
        %3492 = vmatpush.msra.mxu0 0.0
        %3493 = vmatpush.msra.mxu0 0.0
        %3494 = vmatpush.msra.mxu0 0.0
        %3495 = vmatpush.msra.mxu0 0.0
        %3496 = vmatpush.msra.mxu0 0.0
        %3497 = vmatpush.msra.mxu0 0.0
        %3498 = vmatpush.msra.mxu0 0.0
        %3499 = vmatpush.msra.mxu0 0.0
        %3500 = vmatpush.msra.mxu0 0.0
        %3501 = vmatpush.msra.mxu0 0.0
        %3502 = vmatpush.msra.mxu0 %v353
        %3503 = vmatpush.msra.mxu0 %v352
        %3504 = vmatpush.msra.mxu0 %v351
        %3505 = vmatpush.msra.mxu0 %v350
        %3506 = vmatmul.f32.gmra.mxu0 %v3443
        %v3507 = vpop.f32.mrf.mxu0
        %v3508 = vadd.f32 0.0, %v3507
        %3509 = vmatmul.f32.gmra.mxu0 %v3446
        %v3510 = vpop.f32.mrf.mxu0
        %v3511 = vadd.f32 0.0, %v3510
        %3512 = vmatmul.f32.gmra.mxu0 %v3449
        %v3513 = vpop.f32.mrf.mxu0
        %v3514 = vadd.f32 0.0, %v3513
        %3515 = vmatmul.f32.gmra.mxu0 %v3452
        %v3516 = vpop.f32.mrf.mxu0
        %v3517 = vadd.f32 0.0, %v3516
        %3518 = vmatmul.f32.gmra.mxu0 %v3455
        %v3519 = vpop.f32.mrf.mxu0
        %v3520 = vadd.f32 0.0, %v3519
        %3521 = vmatmul.f32.gmra.mxu0 %v3458
        %v3522 = vpop.f32.mrf.mxu0
        %v3523 = vadd.f32 0.0, %v3522
        %3524 = vmatmul.f32.gmra.mxu0 %v3461
        %v3525 = vpop.f32.mrf.mxu0
        %v3526 = vadd.f32 0.0, %v3525
        %3527 = vmatmul.f32.gmra.mxu0 %v3464
        %v3528 = vpop.f32.mrf.mxu0
        %v3529 = vadd.f32 0.0, %v3528
        %3530 = vmatmul.f32.gmra.mxu0 %v3467
        %v3531 = vpop.f32.mrf.mxu0
        %v3532 = vadd.f32 0.0, %v3531
        %3533 = vmatmul.f32.gmra.mxu0 %v3470
        %v3534 = vpop.f32.mrf.mxu0
        %v3535 = vadd.f32 0.0, %v3534
        %3536 = vmatmul.f32.gmra.mxu0 %v3473
        %v3537 = vpop.f32.mrf.mxu0
        %v3538 = vadd.f32 0.0, %v3537
        %3539 = vmatmul.f32.gmra.mxu0 %v3476
        %v3540 = vpop.f32.mrf.mxu0
        %v3541 = vadd.f32 0.0, %v3540
        %3542 = vmatmul.f32.gmra.mxu0 %v3479
        %v3543 = vpop.f32.mrf.mxu0
        %v3544 = vadd.f32 0.0, %v3543
        %3545 = vmatmul.f32.gmra.mxu0 %v3482
        %v3546 = vpop.f32.mrf.mxu0
        %v3547 = vadd.f32 0.0, %v3546
        %3548 = vmatmul.f32.gmra.mxu0 %v3485
        %v3549 = vpop.f32.mrf.mxu0
        %v3550 = vadd.f32 0.0, %v3549
        %3551 = vmatmul.f32.gmra.mxu0 %v3488
        %v3552 = vpop.f32.mrf.mxu0
        %v3553 = vadd.f32 0.0, %v3552
        %3554 = vdwg.mxu0
        %v3555 = vadd.f32 %v425, %v3508
        %v3556 = vadd.f32 %v428, %v3511
        %v3557 = vadd.f32 %v431, %v3514
        %v3558 = vadd.f32 %v434, %v3517
        %v3559 = vadd.f32 %v437, %v3520
        %v3560 = vadd.f32 %v440, %v3523
        %v3561 = vadd.f32 %v443, %v3526
        %v3562 = vadd.f32 %v446, %v3529
        %v3563 = vadd.f32 %v449, %v3532
        %v3564 = vadd.f32 %v452, %v3535
        %v3565 = vadd.f32 %v455, %v3538
        %v3566 = vadd.f32 %v458, %v3541
        %v3567 = vadd.f32 %v461, %v3544
        %v3568 = vadd.f32 %v464, %v3547
        %v3569 = vadd.f32 %v467, %v3550
        %v3570 = vadd.f32 %v470, %v3553
        %v3571 = vmul.f32 %v3555, 0.5
        %v3572 = vmul.f32 %v3556, 0.5
        %v3573 = vmul.f32 %v3557, 0.5
        %v3574 = vmul.f32 %v3558, 0.5
        %v3575 = vmul.f32 %v3559, 0.5
        %v3576 = vmul.f32 %v3560, 0.5
        %v3577 = vmul.f32 %v3561, 0.5
        %v3578 = vmul.f32 %v3562, 0.5
        %v3579 = vmul.f32 %v3563, 0.5
        %v3580 = vmul.f32 %v3564, 0.5
        %v3581 = vmul.f32 %v3565, 0.5
        %v3582 = vmul.f32 %v3566, 0.5
        %v3583 = vmul.f32 %v3567, 0.5
        %v3584 = vmul.f32 %v3568, 0.5
        %v3585 = vmul.f32 %v3569, 0.5
        %v3586 = vmul.f32 %v3570, 0.5
        %v3587 = vtanh.pop %v3571
        %v3588 = vtanh.pop %v3572
        %v3589 = vtanh.pop %v3573
        %v3590 = vtanh.pop %v3574
        %v3591 = vtanh.pop %v3575
        %v3592 = vtanh.pop %v3576
        %v3593 = vtanh.pop %v3577
        %v3594 = vtanh.pop %v3578
        %v3595 = vtanh.pop %v3579
        %v3596 = vtanh.pop %v3580
        %v3597 = vtanh.pop %v3581
        %v3598 = vtanh.pop %v3582
        %v3599 = vtanh.pop %v3583
        %v3600 = vtanh.pop %v3584
        %v3601 = vtanh.pop %v3585
        %v3602 = vtanh.pop %v3586
        %v3603 = vmul.f32 %v3587, 0.5
        %v3604 = vmul.f32 %v3588, 0.5
        %v3605 = vmul.f32 %v3589, 0.5
        %v3606 = vmul.f32 %v3590, 0.5
        %v3607 = vmul.f32 %v3591, 0.5
        %v3608 = vmul.f32 %v3592, 0.5
        %v3609 = vmul.f32 %v3593, 0.5
        %v3610 = vmul.f32 %v3594, 0.5
        %v3611 = vmul.f32 %v3595, 0.5
        %v3612 = vmul.f32 %v3596, 0.5
        %v3613 = vmul.f32 %v3597, 0.5
        %v3614 = vmul.f32 %v3598, 0.5
        %v3615 = vmul.f32 %v3599, 0.5
        %v3616 = vmul.f32 %v3600, 0.5
        %v3617 = vmul.f32 %v3601, 0.5
        %v3618 = vmul.f32 %v3602, 0.5
        %v3619 = vadd.f32 %v3603, 0.5
        %v3620 = vadd.f32 %v3604, 0.5
        %v3621 = vadd.f32 %v3605, 0.5
        %v3622 = vadd.f32 %v3606, 0.5
        %v3623 = vadd.f32 %v3607, 0.5
        %v3624 = vadd.f32 %v3608, 0.5
        %v3625 = vadd.f32 %v3609, 0.5
        %v3626 = vadd.f32 %v3610, 0.5
        %v3627 = vadd.f32 %v3611, 0.5
        %v3628 = vadd.f32 %v3612, 0.5
        %v3629 = vadd.f32 %v3613, 0.5
        %v3630 = vadd.f32 %v3614, 0.5
        %v3631 = vadd.f32 %v3615, 0.5
        %v3632 = vadd.f32 %v3616, 0.5
        %v3633 = vadd.f32 %v3617, 0.5
        %v3634 = vadd.f32 %v3618, 0.5
        %v3635 = vmul.f32 %v3619, 2.0
        %v3636 = vmul.f32 %v3620, 2.0
        %v3637 = vmul.f32 %v3621, 2.0
        %v3638 = vmul.f32 %v3622, 2.0
        %v3639 = vmul.f32 %v3623, 2.0
        %v3640 = vmul.f32 %v3624, 2.0
        %v3641 = vmul.f32 %v3625, 2.0
        %v3642 = vmul.f32 %v3626, 2.0
        %v3643 = vmul.f32 %v3627, 2.0
        %v3644 = vmul.f32 %v3628, 2.0
        %v3645 = vmul.f32 %v3629, 2.0
        %v3646 = vmul.f32 %v3630, 2.0
        %v3647 = vmul.f32 %v3631, 2.0
        %v3648 = vmul.f32 %v3632, 2.0
        %v3649 = vmul.f32 %v3633, 2.0
        %v3650 = vmul.f32 %v3634, 2.0
        %v3651 = vsub.f32 %v3635, 1.0
        %v3652 = vsub.f32 %v3636, 1.0
        %v3653 = vsub.f32 %v3637, 1.0
        %v3654 = vsub.f32 %v3638, 1.0
        %v3655 = vsub.f32 %v3639, 1.0
        %v3656 = vsub.f32 %v3640, 1.0
        %v3657 = vsub.f32 %v3641, 1.0
        %v3658 = vsub.f32 %v3642, 1.0
        %v3659 = vsub.f32 %v3643, 1.0
        %v3660 = vsub.f32 %v3644, 1.0
        %v3661 = vsub.f32 %v3645, 1.0
        %v3662 = vsub.f32 %v3646, 1.0
        %v3663 = vsub.f32 %v3647, 1.0
        %v3664 = vsub.f32 %v3648, 1.0
        %v3665 = vsub.f32 %v3649, 1.0
        %v3666 = vsub.f32 %v3650, 1.0
        %v3667 = vmul.f32 %v3619, %v3201
        %v3668 = vmul.f32 %v3620, %v3202
        %v3669 = vmul.f32 %v3621, %v3203
        %v3670 = vmul.f32 %v3622, %v3204
        %v3671 = vmul.f32 %v3623, %v3205
        %v3672 = vmul.f32 %v3624, %v3206
        %v3673 = vmul.f32 %v3625, %v3207
        %v3674 = vmul.f32 %v3626, %v3208
        %v3675 = vmul.f32 %v3627, %v3209
        %v3676 = vmul.f32 %v3628, %v3210
        %v3677 = vmul.f32 %v3629, %v3211
        %v3678 = vmul.f32 %v3630, %v3212
        %v3679 = vmul.f32 %v3631, %v3213
        %v3680 = vmul.f32 %v3632, %v3214
        %v3681 = vmul.f32 %v3633, %v3215
        %v3682 = vmul.f32 %v3634, %v3216
        %3699 = vrot.lane.b32.xlu0 %v3651, 64
        %v3700 = vpop.permute.xlu0 %3699
        %3701 = vrot.lane.b32.xlu0 %v3652, 64
        %v3702 = vpop.permute.xlu0 %3701
        %3703 = vrot.lane.b32.xlu0 %v3653, 64
        %v3704 = vpop.permute.xlu0 %3703
        %3705 = vrot.lane.b32.xlu0 %v3654, 64
        %v3706 = vpop.permute.xlu0 %3705
        %3707 = vrot.lane.b32.xlu0 %v3655, 64
        %v3708 = vpop.permute.xlu0 %3707
        %3709 = vrot.lane.b32.xlu0 %v3656, 64
        %v3710 = vpop.permute.xlu0 %3709
        %3711 = vrot.lane.b32.xlu0 %v3657, 64
        %v3712 = vpop.permute.xlu0 %3711
        %3713 = vrot.lane.b32.xlu0 %v3658, 64
        %v3714 = vpop.permute.xlu0 %3713
        %3715 = vrot.lane.b32.xlu0 %v3659, 64
        %v3716 = vpop.permute.xlu0 %3715
        %3717 = vrot.lane.b32.xlu0 %v3660, 64
        %v3718 = vpop.permute.xlu0 %3717
        %3719 = vrot.lane.b32.xlu0 %v3661, 64
        %v3720 = vpop.permute.xlu0 %3719
        %3721 = vrot.lane.b32.xlu0 %v3662, 64
        %v3722 = vpop.permute.xlu0 %3721
        %3723 = vrot.lane.b32.xlu0 %v3663, 64
        %v3724 = vpop.permute.xlu0 %3723
        %3725 = vrot.lane.b32.xlu0 %v3664, 64
        %v3726 = vpop.permute.xlu0 %3725
        %3727 = vrot.lane.b32.xlu0 %v3665, 64
        %v3728 = vpop.permute.xlu0 %3727
        %3729 = vrot.lane.b32.xlu0 %v3666, 64
        %v3730 = vpop.permute.xlu0 %3729
        %v3747 = vmul.f32 %v3619, %v3700
        %v3748 = vmul.f32 %v3620, %v3702
        %v3749 = vmul.f32 %v3621, %v3704
        %v3750 = vmul.f32 %v3622, %v3706
        %v3751 = vmul.f32 %v3623, %v3708
        %v3752 = vmul.f32 %v3624, %v3710
        %v3753 = vmul.f32 %v3625, %v3712
        %v3754 = vmul.f32 %v3626, %v3714
        %v3755 = vmul.f32 %v3627, %v3716
        %v3756 = vmul.f32 %v3628, %v3718
        %v3757 = vmul.f32 %v3629, %v3720
        %v3758 = vmul.f32 %v3630, %v3722
        %v3759 = vmul.f32 %v3631, %v3724
        %v3760 = vmul.f32 %v3632, %v3726
        %v3761 = vmul.f32 %v3633, %v3728
        %v3762 = vmul.f32 %v3634, %v3730
        %3779 = vrot.lane.b32.xlu0 %v3747, 32
        %v3780 = vpop.permute.xlu0 %3779
        %3781 = vrot.lane.b32.xlu0 %v3748, 32
        %v3782 = vpop.permute.xlu0 %3781
        %3783 = vrot.lane.b32.xlu0 %v3749, 32
        %v3784 = vpop.permute.xlu0 %3783
        %3785 = vrot.lane.b32.xlu0 %v3750, 32
        %v3786 = vpop.permute.xlu0 %3785
        %3787 = vrot.lane.b32.xlu0 %v3751, 32
        %v3788 = vpop.permute.xlu0 %3787
        %3789 = vrot.lane.b32.xlu0 %v3752, 32
        %v3790 = vpop.permute.xlu0 %3789
        %3791 = vrot.lane.b32.xlu0 %v3753, 32
        %v3792 = vpop.permute.xlu0 %3791
        %3793 = vrot.lane.b32.xlu0 %v3754, 32
        %v3794 = vpop.permute.xlu0 %3793
        %3795 = vrot.lane.b32.xlu0 %v3755, 32
        %v3796 = vpop.permute.xlu0 %3795
        %3797 = vrot.lane.b32.xlu0 %v3756, 32
        %v3798 = vpop.permute.xlu0 %3797
        %3799 = vrot.lane.b32.xlu0 %v3757, 32
        %v3800 = vpop.permute.xlu0 %3799
        %3801 = vrot.lane.b32.xlu0 %v3758, 32
        %v3802 = vpop.permute.xlu0 %3801
        %3803 = vrot.lane.b32.xlu0 %v3759, 32
        %v3804 = vpop.permute.xlu0 %3803
        %3805 = vrot.lane.b32.xlu0 %v3760, 32
        %v3806 = vpop.permute.xlu0 %3805
        %3807 = vrot.lane.b32.xlu0 %v3761, 32
        %v3808 = vpop.permute.xlu0 %3807
        %3809 = vrot.lane.b32.xlu0 %v3762, 32
        %v3810 = vpop.permute.xlu0 %3809
        %v3827 = vadd.f32 %v3667, %v3780
        %v3828 = vadd.f32 %v3668, %v3782
        %v3829 = vadd.f32 %v3669, %v3784
        %v3830 = vadd.f32 %v3670, %v3786
        %v3831 = vadd.f32 %v3671, %v3788
        %v3832 = vadd.f32 %v3672, %v3790
        %v3833 = vadd.f32 %v3673, %v3792
        %v3834 = vadd.f32 %v3674, %v3794
        %v3835 = vadd.f32 %v3675, %v3796
        %v3836 = vadd.f32 %v3676, %v3798
        %v3837 = vadd.f32 %v3677, %v3800
        %v3838 = vadd.f32 %v3678, %v3802
        %v3839 = vadd.f32 %v3679, %v3804
        %v3840 = vadd.f32 %v3680, %v3806
        %v3841 = vadd.f32 %v3681, %v3808
        %v3842 = vadd.f32 %v3682, %v3810
        %v3843 = vtanh.pop %v3827
        %v3844 = vtanh.pop %v3828
        %v3845 = vtanh.pop %v3829
        %v3846 = vtanh.pop %v3830
        %v3847 = vtanh.pop %v3831
        %v3848 = vtanh.pop %v3832
        %v3849 = vtanh.pop %v3833
        %v3850 = vtanh.pop %v3834
        %v3851 = vtanh.pop %v3835
        %v3852 = vtanh.pop %v3836
        %v3853 = vtanh.pop %v3837
        %v3854 = vtanh.pop %v3838
        %v3855 = vtanh.pop %v3839
        %v3856 = vtanh.pop %v3840
        %v3857 = vtanh.pop %v3841
        %v3858 = vtanh.pop %v3842
        %3875 = vrot.lane.b32.xlu0 %v3843, 64
        %v3876 = vpop.permute.xlu0 %3875
        %3877 = vrot.lane.b32.xlu0 %v3844, 64
        %v3878 = vpop.permute.xlu0 %3877
        %3879 = vrot.lane.b32.xlu0 %v3845, 64
        %v3880 = vpop.permute.xlu0 %3879
        %3881 = vrot.lane.b32.xlu0 %v3846, 64
        %v3882 = vpop.permute.xlu0 %3881
        %3883 = vrot.lane.b32.xlu0 %v3847, 64
        %v3884 = vpop.permute.xlu0 %3883
        %3885 = vrot.lane.b32.xlu0 %v3848, 64
        %v3886 = vpop.permute.xlu0 %3885
        %3887 = vrot.lane.b32.xlu0 %v3849, 64
        %v3888 = vpop.permute.xlu0 %3887
        %3889 = vrot.lane.b32.xlu0 %v3850, 64
        %v3890 = vpop.permute.xlu0 %3889
        %3891 = vrot.lane.b32.xlu0 %v3851, 64
        %v3892 = vpop.permute.xlu0 %3891
        %3893 = vrot.lane.b32.xlu0 %v3852, 64
        %v3894 = vpop.permute.xlu0 %3893
        %3895 = vrot.lane.b32.xlu0 %v3853, 64
        %v3896 = vpop.permute.xlu0 %3895
        %3897 = vrot.lane.b32.xlu0 %v3854, 64
        %v3898 = vpop.permute.xlu0 %3897
        %3899 = vrot.lane.b32.xlu0 %v3855, 64
        %v3900 = vpop.permute.xlu0 %3899
        %3901 = vrot.lane.b32.xlu0 %v3856, 64
        %v3902 = vpop.permute.xlu0 %3901
        %3903 = vrot.lane.b32.xlu0 %v3857, 64
        %v3904 = vpop.permute.xlu0 %3903
        %3905 = vrot.lane.b32.xlu0 %v3858, 64
        %v3906 = vpop.permute.xlu0 %3905
        %v3923 = vmul.f32 %v3619, %v3876
        %v3924 = vmul.f32 %v3620, %v3878
        %v3925 = vmul.f32 %v3621, %v3880
        %v3926 = vmul.f32 %v3622, %v3882
        %v3927 = vmul.f32 %v3623, %v3884
        %v3928 = vmul.f32 %v3624, %v3886
        %v3929 = vmul.f32 %v3625, %v3888
        %v3930 = vmul.f32 %v3626, %v3890
        %v3931 = vmul.f32 %v3627, %v3892
        %v3932 = vmul.f32 %v3628, %v3894
        %v3933 = vmul.f32 %v3629, %v3896
        %v3934 = vmul.f32 %v3630, %v3898
        %v3935 = vmul.f32 %v3631, %v3900
        %v3936 = vmul.f32 %v3632, %v3902
        %v3937 = vmul.f32 %v3633, %v3904
        %v3938 = vmul.f32 %v3634, %v3906
        %3955 = vrot.lane.b32.xlu0 %v3923, 32
        %v3956 = vpop.permute.xlu0 %3955
        %3957 = vrot.lane.b32.xlu0 %v3924, 32
        %v3958 = vpop.permute.xlu0 %3957
        %3959 = vrot.lane.b32.xlu0 %v3925, 32
        %v3960 = vpop.permute.xlu0 %3959
        %3961 = vrot.lane.b32.xlu0 %v3926, 32
        %v3962 = vpop.permute.xlu0 %3961
        %3963 = vrot.lane.b32.xlu0 %v3927, 32
        %v3964 = vpop.permute.xlu0 %3963
        %3965 = vrot.lane.b32.xlu0 %v3928, 32
        %v3966 = vpop.permute.xlu0 %3965
        %3967 = vrot.lane.b32.xlu0 %v3929, 32
        %v3968 = vpop.permute.xlu0 %3967
        %3969 = vrot.lane.b32.xlu0 %v3930, 32
        %v3970 = vpop.permute.xlu0 %3969
        %3971 = vrot.lane.b32.xlu0 %v3931, 32
        %v3972 = vpop.permute.xlu0 %3971
        %3973 = vrot.lane.b32.xlu0 %v3932, 32
        %v3974 = vpop.permute.xlu0 %3973
        %3975 = vrot.lane.b32.xlu0 %v3933, 32
        %v3976 = vpop.permute.xlu0 %3975
        %3977 = vrot.lane.b32.xlu0 %v3934, 32
        %v3978 = vpop.permute.xlu0 %3977
        %3979 = vrot.lane.b32.xlu0 %v3935, 32
        %v3980 = vpop.permute.xlu0 %3979
        %3981 = vrot.lane.b32.xlu0 %v3936, 32
        %v3982 = vpop.permute.xlu0 %3981
        %3983 = vrot.lane.b32.xlu0 %v3937, 32
        %v3984 = vpop.permute.xlu0 %3983
        %3985 = vrot.lane.b32.xlu0 %v3938, 32
        %v3986 = vpop.permute.xlu0 %3985
        %4003 = vmatpush.msra.mxu0 %v3986
        %4004 = vmatpush.msra.mxu0 %v3984
        %4005 = vmatpush.msra.mxu0 %v3982
        %4006 = vmatpush.msra.mxu0 %v3980
        %4007 = vmatpush.msra.mxu0 %v3978
        %4008 = vmatpush.msra.mxu0 %v3976
        %4009 = vmatpush.msra.mxu0 %v3974
        %4010 = vmatpush.msra.mxu0 %v3972
        %4011 = vmatpush.msra.mxu0 %v3970
        %4012 = vmatpush.msra.mxu0 %v3968
        %4013 = vmatpush.msra.mxu0 %v3966
        %4014 = vmatpush.msra.mxu0 %v3964
        %4015 = vmatpush.msra.mxu0 %v3962
        %4016 = vmatpush.msra.mxu0 %v3960
        %4017 = vmatpush.msra.mxu0 %v3958
        %4018 = vmatpush.msra.mxu0 %v3956
        %4019 = vmatmul.f32.gmra.mxu0 %v332
        %v4020 = vpop.f32.mrf.mxu0
        %v4021 = vadd.f32 0.0, %v4020
        %4022 = vmatmul.f32.gmra.mxu0 %v333
        %v4023 = vpop.f32.mrf.mxu0
        %v4024 = vadd.f32 0.0, %v4023
        %4025 = vmatmul.f32.gmra.mxu0 %v334
        %v4026 = vpop.f32.mrf.mxu0
        %v4027 = vadd.f32 0.0, %v4026
        %4028 = vmatmul.f32.gmra.mxu0 %v335
        %v4029 = vpop.f32.mrf.mxu0
        %v4030 = vadd.f32 0.0, %v4029
        %4031 = vmatmul.f32.gmra.mxu0 %v336
        %v4032 = vpop.f32.mrf.mxu0
        %v4033 = vadd.f32 0.0, %v4032
        %4034 = vmatmul.f32.gmra.mxu0 %v337
        %v4035 = vpop.f32.mrf.mxu0
        %v4036 = vadd.f32 0.0, %v4035
        %4037 = vmatmul.f32.gmra.mxu0 %v338
        %v4038 = vpop.f32.mrf.mxu0
        %v4039 = vadd.f32 0.0, %v4038
        %4040 = vmatmul.f32.gmra.mxu0 %v339
        %v4041 = vpop.f32.mrf.mxu0
        %v4042 = vadd.f32 0.0, %v4041
        %4043 = vmatmul.f32.gmra.mxu0 %v340
        %v4044 = vpop.f32.mrf.mxu0
        %v4045 = vadd.f32 0.0, %v4044
        %4046 = vmatmul.f32.gmra.mxu0 %v341
        %v4047 = vpop.f32.mrf.mxu0
        %v4048 = vadd.f32 0.0, %v4047
        %4049 = vmatmul.f32.gmra.mxu0 %v342
        %v4050 = vpop.f32.mrf.mxu0
        %v4051 = vadd.f32 0.0, %v4050
        %4052 = vmatmul.f32.gmra.mxu0 %v343
        %v4053 = vpop.f32.mrf.mxu0
        %v4054 = vadd.f32 0.0, %v4053
        %4055 = vmatmul.f32.gmra.mxu0 %v344
        %v4056 = vpop.f32.mrf.mxu0
        %v4057 = vadd.f32 0.0, %v4056
        %4058 = vmatmul.f32.gmra.mxu0 %v345
        %v4059 = vpop.f32.mrf.mxu0
        %v4060 = vadd.f32 0.0, %v4059
        %4061 = vmatmul.f32.gmra.mxu0 %v346
        %v4062 = vpop.f32.mrf.mxu0
        %v4063 = vadd.f32 0.0, %v4062
        %4064 = vmatmul.f32.gmra.mxu0 %v347
        %v4065 = vpop.f32.mrf.mxu0
        %v4066 = vadd.f32 0.0, %v4065
        %4067 = vdwg.mxu0
        %v4069 = vsel %vm873, %v4021, 0
        %v4072 = vsel %vm873, %v4024, 0
        %v4075 = vsel %vm873, %v4027, 0
        %v4078 = vsel %vm873, %v4030, 0
        %v4081 = vsel %vm873, %v4033, 0
        %v4084 = vsel %vm873, %v4036, 0
        %v4087 = vsel %vm873, %v4039, 0
        %v4090 = vsel %vm873, %v4042, 0
        %v4093 = vsel %vm873, %v4045, 0
        %v4096 = vsel %vm873, %v4048, 0
        %v4099 = vsel %vm873, %v4051, 0
        %v4102 = vsel %vm873, %v4054, 0
        %v4105 = vsel %vm873, %v4057, 0
        %v4108 = vsel %vm873, %v4060, 0
        %v4111 = vsel %vm873, %v4063, 0
        %v4114 = vsel %vm873, %v4066, 0
        %4116 = vmatpush.msra.mxu0 0.0
        %4117 = vmatpush.msra.mxu0 0.0
        %4118 = vmatpush.msra.mxu0 0.0
        %4119 = vmatpush.msra.mxu0 0.0
        %4120 = vmatpush.msra.mxu0 0.0
        %4121 = vmatpush.msra.mxu0 0.0
        %4122 = vmatpush.msra.mxu0 0.0
        %4123 = vmatpush.msra.mxu0 0.0
        %4124 = vmatpush.msra.mxu0 0.0
        %4125 = vmatpush.msra.mxu0 0.0
        %4126 = vmatpush.msra.mxu0 0.0
        %4127 = vmatpush.msra.mxu0 0.0
        %4128 = vmatpush.msra.mxu0 %v353
        %4129 = vmatpush.msra.mxu0 %v352
        %4130 = vmatpush.msra.mxu0 %v351
        %4131 = vmatpush.msra.mxu0 %v350
        %4132 = vmatmul.f32.gmra.mxu0 %v4069
        %v4133 = vpop.f32.mrf.mxu0
        %v4134 = vadd.f32 0.0, %v4133
        %4135 = vmatmul.f32.gmra.mxu0 %v4072
        %v4136 = vpop.f32.mrf.mxu0
        %v4137 = vadd.f32 0.0, %v4136
        %4138 = vmatmul.f32.gmra.mxu0 %v4075
        %v4139 = vpop.f32.mrf.mxu0
        %v4140 = vadd.f32 0.0, %v4139
        %4141 = vmatmul.f32.gmra.mxu0 %v4078
        %v4142 = vpop.f32.mrf.mxu0
        %v4143 = vadd.f32 0.0, %v4142
        %4144 = vmatmul.f32.gmra.mxu0 %v4081
        %v4145 = vpop.f32.mrf.mxu0
        %v4146 = vadd.f32 0.0, %v4145
        %4147 = vmatmul.f32.gmra.mxu0 %v4084
        %v4148 = vpop.f32.mrf.mxu0
        %v4149 = vadd.f32 0.0, %v4148
        %4150 = vmatmul.f32.gmra.mxu0 %v4087
        %v4151 = vpop.f32.mrf.mxu0
        %v4152 = vadd.f32 0.0, %v4151
        %4153 = vmatmul.f32.gmra.mxu0 %v4090
        %v4154 = vpop.f32.mrf.mxu0
        %v4155 = vadd.f32 0.0, %v4154
        %4156 = vmatmul.f32.gmra.mxu0 %v4093
        %v4157 = vpop.f32.mrf.mxu0
        %v4158 = vadd.f32 0.0, %v4157
        %4159 = vmatmul.f32.gmra.mxu0 %v4096
        %v4160 = vpop.f32.mrf.mxu0
        %v4161 = vadd.f32 0.0, %v4160
        %4162 = vmatmul.f32.gmra.mxu0 %v4099
        %v4163 = vpop.f32.mrf.mxu0
        %v4164 = vadd.f32 0.0, %v4163
        %4165 = vmatmul.f32.gmra.mxu0 %v4102
        %v4166 = vpop.f32.mrf.mxu0
        %v4167 = vadd.f32 0.0, %v4166
        %4168 = vmatmul.f32.gmra.mxu0 %v4105
        %v4169 = vpop.f32.mrf.mxu0
        %v4170 = vadd.f32 0.0, %v4169
        %4171 = vmatmul.f32.gmra.mxu0 %v4108
        %v4172 = vpop.f32.mrf.mxu0
        %v4173 = vadd.f32 0.0, %v4172
        %4174 = vmatmul.f32.gmra.mxu0 %v4111
        %v4175 = vpop.f32.mrf.mxu0
        %v4176 = vadd.f32 0.0, %v4175
        %4177 = vmatmul.f32.gmra.mxu0 %v4114
        %v4178 = vpop.f32.mrf.mxu0
        %v4179 = vadd.f32 0.0, %v4178
        %4180 = vdwg.mxu0
        %v4181 = vadd.f32 %v425, %v4134
        %v4182 = vadd.f32 %v428, %v4137
        %v4183 = vadd.f32 %v431, %v4140
        %v4184 = vadd.f32 %v434, %v4143
        %v4185 = vadd.f32 %v437, %v4146
        %v4186 = vadd.f32 %v440, %v4149
        %v4187 = vadd.f32 %v443, %v4152
        %v4188 = vadd.f32 %v446, %v4155
        %v4189 = vadd.f32 %v449, %v4158
        %v4190 = vadd.f32 %v452, %v4161
        %v4191 = vadd.f32 %v455, %v4164
        %v4192 = vadd.f32 %v458, %v4167
        %v4193 = vadd.f32 %v461, %v4170
        %v4194 = vadd.f32 %v464, %v4173
        %v4195 = vadd.f32 %v467, %v4176
        %v4196 = vadd.f32 %v470, %v4179
        %v4197 = vmul.f32 %v4181, 0.5
        %v4198 = vmul.f32 %v4182, 0.5
        %v4199 = vmul.f32 %v4183, 0.5
        %v4200 = vmul.f32 %v4184, 0.5
        %v4201 = vmul.f32 %v4185, 0.5
        %v4202 = vmul.f32 %v4186, 0.5
        %v4203 = vmul.f32 %v4187, 0.5
        %v4204 = vmul.f32 %v4188, 0.5
        %v4205 = vmul.f32 %v4189, 0.5
        %v4206 = vmul.f32 %v4190, 0.5
        %v4207 = vmul.f32 %v4191, 0.5
        %v4208 = vmul.f32 %v4192, 0.5
        %v4209 = vmul.f32 %v4193, 0.5
        %v4210 = vmul.f32 %v4194, 0.5
        %v4211 = vmul.f32 %v4195, 0.5
        %v4212 = vmul.f32 %v4196, 0.5
        %v4213 = vtanh.pop %v4197
        %v4214 = vtanh.pop %v4198
        %v4215 = vtanh.pop %v4199
        %v4216 = vtanh.pop %v4200
        %v4217 = vtanh.pop %v4201
        %v4218 = vtanh.pop %v4202
        %v4219 = vtanh.pop %v4203
        %v4220 = vtanh.pop %v4204
        %v4221 = vtanh.pop %v4205
        %v4222 = vtanh.pop %v4206
        %v4223 = vtanh.pop %v4207
        %v4224 = vtanh.pop %v4208
        %v4225 = vtanh.pop %v4209
        %v4226 = vtanh.pop %v4210
        %v4227 = vtanh.pop %v4211
        %v4228 = vtanh.pop %v4212
        %v4229 = vmul.f32 %v4213, 0.5
        %v4230 = vmul.f32 %v4214, 0.5
        %v4231 = vmul.f32 %v4215, 0.5
        %v4232 = vmul.f32 %v4216, 0.5
        %v4233 = vmul.f32 %v4217, 0.5
        %v4234 = vmul.f32 %v4218, 0.5
        %v4235 = vmul.f32 %v4219, 0.5
        %v4236 = vmul.f32 %v4220, 0.5
        %v4237 = vmul.f32 %v4221, 0.5
        %v4238 = vmul.f32 %v4222, 0.5
        %v4239 = vmul.f32 %v4223, 0.5
        %v4240 = vmul.f32 %v4224, 0.5
        %v4241 = vmul.f32 %v4225, 0.5
        %v4242 = vmul.f32 %v4226, 0.5
        %v4243 = vmul.f32 %v4227, 0.5
        %v4244 = vmul.f32 %v4228, 0.5
        %v4245 = vadd.f32 %v4229, 0.5
        %v4246 = vadd.f32 %v4230, 0.5
        %v4247 = vadd.f32 %v4231, 0.5
        %v4248 = vadd.f32 %v4232, 0.5
        %v4249 = vadd.f32 %v4233, 0.5
        %v4250 = vadd.f32 %v4234, 0.5
        %v4251 = vadd.f32 %v4235, 0.5
        %v4252 = vadd.f32 %v4236, 0.5
        %v4253 = vadd.f32 %v4237, 0.5
        %v4254 = vadd.f32 %v4238, 0.5
        %v4255 = vadd.f32 %v4239, 0.5
        %v4256 = vadd.f32 %v4240, 0.5
        %v4257 = vadd.f32 %v4241, 0.5
        %v4258 = vadd.f32 %v4242, 0.5
        %v4259 = vadd.f32 %v4243, 0.5
        %v4260 = vadd.f32 %v4244, 0.5
        %v4261 = vmul.f32 %v4245, 2.0
        %v4262 = vmul.f32 %v4246, 2.0
        %v4263 = vmul.f32 %v4247, 2.0
        %v4264 = vmul.f32 %v4248, 2.0
        %v4265 = vmul.f32 %v4249, 2.0
        %v4266 = vmul.f32 %v4250, 2.0
        %v4267 = vmul.f32 %v4251, 2.0
        %v4268 = vmul.f32 %v4252, 2.0
        %v4269 = vmul.f32 %v4253, 2.0
        %v4270 = vmul.f32 %v4254, 2.0
        %v4271 = vmul.f32 %v4255, 2.0
        %v4272 = vmul.f32 %v4256, 2.0
        %v4273 = vmul.f32 %v4257, 2.0
        %v4274 = vmul.f32 %v4258, 2.0
        %v4275 = vmul.f32 %v4259, 2.0
        %v4276 = vmul.f32 %v4260, 2.0
        %v4277 = vsub.f32 %v4261, 1.0
        %v4278 = vsub.f32 %v4262, 1.0
        %v4279 = vsub.f32 %v4263, 1.0
        %v4280 = vsub.f32 %v4264, 1.0
        %v4281 = vsub.f32 %v4265, 1.0
        %v4282 = vsub.f32 %v4266, 1.0
        %v4283 = vsub.f32 %v4267, 1.0
        %v4284 = vsub.f32 %v4268, 1.0
        %v4285 = vsub.f32 %v4269, 1.0
        %v4286 = vsub.f32 %v4270, 1.0
        %v4287 = vsub.f32 %v4271, 1.0
        %v4288 = vsub.f32 %v4272, 1.0
        %v4289 = vsub.f32 %v4273, 1.0
        %v4290 = vsub.f32 %v4274, 1.0
        %v4291 = vsub.f32 %v4275, 1.0
        %v4292 = vsub.f32 %v4276, 1.0
        %v4293 = vmul.f32 %v4245, %v3827
        %v4294 = vmul.f32 %v4246, %v3828
        %v4295 = vmul.f32 %v4247, %v3829
        %v4296 = vmul.f32 %v4248, %v3830
        %v4297 = vmul.f32 %v4249, %v3831
        %v4298 = vmul.f32 %v4250, %v3832
        %v4299 = vmul.f32 %v4251, %v3833
        %v4300 = vmul.f32 %v4252, %v3834
        %v4301 = vmul.f32 %v4253, %v3835
        %v4302 = vmul.f32 %v4254, %v3836
        %v4303 = vmul.f32 %v4255, %v3837
        %v4304 = vmul.f32 %v4256, %v3838
        %v4305 = vmul.f32 %v4257, %v3839
        %v4306 = vmul.f32 %v4258, %v3840
        %v4307 = vmul.f32 %v4259, %v3841
        %v4308 = vmul.f32 %v4260, %v3842
        %4325 = vrot.lane.b32.xlu0 %v4277, 64
        %v4326 = vpop.permute.xlu0 %4325
        %4327 = vrot.lane.b32.xlu0 %v4278, 64
        %v4328 = vpop.permute.xlu0 %4327
        %4329 = vrot.lane.b32.xlu0 %v4279, 64
        %v4330 = vpop.permute.xlu0 %4329
        %4331 = vrot.lane.b32.xlu0 %v4280, 64
        %v4332 = vpop.permute.xlu0 %4331
        %4333 = vrot.lane.b32.xlu0 %v4281, 64
        %v4334 = vpop.permute.xlu0 %4333
        %4335 = vrot.lane.b32.xlu0 %v4282, 64
        %v4336 = vpop.permute.xlu0 %4335
        %4337 = vrot.lane.b32.xlu0 %v4283, 64
        %v4338 = vpop.permute.xlu0 %4337
        %4339 = vrot.lane.b32.xlu0 %v4284, 64
        %v4340 = vpop.permute.xlu0 %4339
        %4341 = vrot.lane.b32.xlu0 %v4285, 64
        %v4342 = vpop.permute.xlu0 %4341
        %4343 = vrot.lane.b32.xlu0 %v4286, 64
        %v4344 = vpop.permute.xlu0 %4343
        %4345 = vrot.lane.b32.xlu0 %v4287, 64
        %v4346 = vpop.permute.xlu0 %4345
        %4347 = vrot.lane.b32.xlu0 %v4288, 64
        %v4348 = vpop.permute.xlu0 %4347
        %4349 = vrot.lane.b32.xlu0 %v4289, 64
        %v4350 = vpop.permute.xlu0 %4349
        %4351 = vrot.lane.b32.xlu0 %v4290, 64
        %v4352 = vpop.permute.xlu0 %4351
        %4353 = vrot.lane.b32.xlu0 %v4291, 64
        %v4354 = vpop.permute.xlu0 %4353
        %4355 = vrot.lane.b32.xlu0 %v4292, 64
        %v4356 = vpop.permute.xlu0 %4355
        %v4373 = vmul.f32 %v4245, %v4326
        %v4374 = vmul.f32 %v4246, %v4328
        %v4375 = vmul.f32 %v4247, %v4330
        %v4376 = vmul.f32 %v4248, %v4332
        %v4377 = vmul.f32 %v4249, %v4334
        %v4378 = vmul.f32 %v4250, %v4336
        %v4379 = vmul.f32 %v4251, %v4338
        %v4380 = vmul.f32 %v4252, %v4340
        %v4381 = vmul.f32 %v4253, %v4342
        %v4382 = vmul.f32 %v4254, %v4344
        %v4383 = vmul.f32 %v4255, %v4346
        %v4384 = vmul.f32 %v4256, %v4348
        %v4385 = vmul.f32 %v4257, %v4350
        %v4386 = vmul.f32 %v4258, %v4352
        %v4387 = vmul.f32 %v4259, %v4354
        %v4388 = vmul.f32 %v4260, %v4356
        %4405 = vrot.lane.b32.xlu0 %v4373, 32
        %v4406 = vpop.permute.xlu0 %4405
        %4407 = vrot.lane.b32.xlu0 %v4374, 32
        %v4408 = vpop.permute.xlu0 %4407
        %4409 = vrot.lane.b32.xlu0 %v4375, 32
        %v4410 = vpop.permute.xlu0 %4409
        %4411 = vrot.lane.b32.xlu0 %v4376, 32
        %v4412 = vpop.permute.xlu0 %4411
        %4413 = vrot.lane.b32.xlu0 %v4377, 32
        %v4414 = vpop.permute.xlu0 %4413
        %4415 = vrot.lane.b32.xlu0 %v4378, 32
        %v4416 = vpop.permute.xlu0 %4415
        %4417 = vrot.lane.b32.xlu0 %v4379, 32
        %v4418 = vpop.permute.xlu0 %4417
        %4419 = vrot.lane.b32.xlu0 %v4380, 32
        %v4420 = vpop.permute.xlu0 %4419
        %4421 = vrot.lane.b32.xlu0 %v4381, 32
        %v4422 = vpop.permute.xlu0 %4421
        %4423 = vrot.lane.b32.xlu0 %v4382, 32
        %v4424 = vpop.permute.xlu0 %4423
        %4425 = vrot.lane.b32.xlu0 %v4383, 32
        %v4426 = vpop.permute.xlu0 %4425
        %4427 = vrot.lane.b32.xlu0 %v4384, 32
        %v4428 = vpop.permute.xlu0 %4427
        %4429 = vrot.lane.b32.xlu0 %v4385, 32
        %v4430 = vpop.permute.xlu0 %4429
        %4431 = vrot.lane.b32.xlu0 %v4386, 32
        %v4432 = vpop.permute.xlu0 %4431
        %4433 = vrot.lane.b32.xlu0 %v4387, 32
        %v4434 = vpop.permute.xlu0 %4433
        %4435 = vrot.lane.b32.xlu0 %v4388, 32
        %v4436 = vpop.permute.xlu0 %4435
        %v4453 = vadd.f32 %v4293, %v4406
        %v4454 = vadd.f32 %v4294, %v4408
        %v4455 = vadd.f32 %v4295, %v4410
        %v4456 = vadd.f32 %v4296, %v4412
        %v4457 = vadd.f32 %v4297, %v4414
        %v4458 = vadd.f32 %v4298, %v4416
        %v4459 = vadd.f32 %v4299, %v4418
        %v4460 = vadd.f32 %v4300, %v4420
        %v4461 = vadd.f32 %v4301, %v4422
        %v4462 = vadd.f32 %v4302, %v4424
        %v4463 = vadd.f32 %v4303, %v4426
        %v4464 = vadd.f32 %v4304, %v4428
        %v4465 = vadd.f32 %v4305, %v4430
        %v4466 = vadd.f32 %v4306, %v4432
        %v4467 = vadd.f32 %v4307, %v4434
        %v4468 = vadd.f32 %v4308, %v4436
        %v4469 = vtanh.pop %v4453
        %v4470 = vtanh.pop %v4454
        %v4471 = vtanh.pop %v4455
        %v4472 = vtanh.pop %v4456
        %v4473 = vtanh.pop %v4457
        %v4474 = vtanh.pop %v4458
        %v4475 = vtanh.pop %v4459
        %v4476 = vtanh.pop %v4460
        %v4477 = vtanh.pop %v4461
        %v4478 = vtanh.pop %v4462
        %v4479 = vtanh.pop %v4463
        %v4480 = vtanh.pop %v4464
        %v4481 = vtanh.pop %v4465
        %v4482 = vtanh.pop %v4466
        %v4483 = vtanh.pop %v4467
        %v4484 = vtanh.pop %v4468
        %4501 = vrot.lane.b32.xlu0 %v4469, 64
        %v4502 = vpop.permute.xlu0 %4501
        %4503 = vrot.lane.b32.xlu0 %v4470, 64
        %v4504 = vpop.permute.xlu0 %4503
        %4505 = vrot.lane.b32.xlu0 %v4471, 64
        %v4506 = vpop.permute.xlu0 %4505
        %4507 = vrot.lane.b32.xlu0 %v4472, 64
        %v4508 = vpop.permute.xlu0 %4507
        %4509 = vrot.lane.b32.xlu0 %v4473, 64
        %v4510 = vpop.permute.xlu0 %4509
        %4511 = vrot.lane.b32.xlu0 %v4474, 64
        %v4512 = vpop.permute.xlu0 %4511
        %4513 = vrot.lane.b32.xlu0 %v4475, 64
        %v4514 = vpop.permute.xlu0 %4513
        %4515 = vrot.lane.b32.xlu0 %v4476, 64
        %v4516 = vpop.permute.xlu0 %4515
        %4517 = vrot.lane.b32.xlu0 %v4477, 64
        %v4518 = vpop.permute.xlu0 %4517
        %4519 = vrot.lane.b32.xlu0 %v4478, 64
        %v4520 = vpop.permute.xlu0 %4519
        %4521 = vrot.lane.b32.xlu0 %v4479, 64
        %v4522 = vpop.permute.xlu0 %4521
        %4523 = vrot.lane.b32.xlu0 %v4480, 64
        %v4524 = vpop.permute.xlu0 %4523
        %4525 = vrot.lane.b32.xlu0 %v4481, 64
        %v4526 = vpop.permute.xlu0 %4525
        %4527 = vrot.lane.b32.xlu0 %v4482, 64
        %v4528 = vpop.permute.xlu0 %4527
        %4529 = vrot.lane.b32.xlu0 %v4483, 64
        %v4530 = vpop.permute.xlu0 %4529
        %4531 = vrot.lane.b32.xlu0 %v4484, 64
        %v4532 = vpop.permute.xlu0 %4531
        %v4549 = vmul.f32 %v4245, %v4502
        %v4550 = vmul.f32 %v4246, %v4504
        %v4551 = vmul.f32 %v4247, %v4506
        %v4552 = vmul.f32 %v4248, %v4508
        %v4553 = vmul.f32 %v4249, %v4510
        %v4554 = vmul.f32 %v4250, %v4512
        %v4555 = vmul.f32 %v4251, %v4514
        %v4556 = vmul.f32 %v4252, %v4516
        %v4557 = vmul.f32 %v4253, %v4518
        %v4558 = vmul.f32 %v4254, %v4520
        %v4559 = vmul.f32 %v4255, %v4522
        %v4560 = vmul.f32 %v4256, %v4524
        %v4561 = vmul.f32 %v4257, %v4526
        %v4562 = vmul.f32 %v4258, %v4528
        %v4563 = vmul.f32 %v4259, %v4530
        %v4564 = vmul.f32 %v4260, %v4532
        %4581 = vrot.lane.b32.xlu0 %v4549, 32
        %v4582 = vpop.permute.xlu0 %4581
        %4583 = vrot.lane.b32.xlu0 %v4550, 32
        %v4584 = vpop.permute.xlu0 %4583
        %4585 = vrot.lane.b32.xlu0 %v4551, 32
        %v4586 = vpop.permute.xlu0 %4585
        %4587 = vrot.lane.b32.xlu0 %v4552, 32
        %v4588 = vpop.permute.xlu0 %4587
        %4589 = vrot.lane.b32.xlu0 %v4553, 32
        %v4590 = vpop.permute.xlu0 %4589
        %4591 = vrot.lane.b32.xlu0 %v4554, 32
        %v4592 = vpop.permute.xlu0 %4591
        %4593 = vrot.lane.b32.xlu0 %v4555, 32
        %v4594 = vpop.permute.xlu0 %4593
        %4595 = vrot.lane.b32.xlu0 %v4556, 32
        %v4596 = vpop.permute.xlu0 %4595
        %4597 = vrot.lane.b32.xlu0 %v4557, 32
        %v4598 = vpop.permute.xlu0 %4597
        %4599 = vrot.lane.b32.xlu0 %v4558, 32
        %v4600 = vpop.permute.xlu0 %4599
        %4601 = vrot.lane.b32.xlu0 %v4559, 32
        %v4602 = vpop.permute.xlu0 %4601
        %4603 = vrot.lane.b32.xlu0 %v4560, 32
        %v4604 = vpop.permute.xlu0 %4603
        %4605 = vrot.lane.b32.xlu0 %v4561, 32
        %v4606 = vpop.permute.xlu0 %4605
        %4607 = vrot.lane.b32.xlu0 %v4562, 32
        %v4608 = vpop.permute.xlu0 %4607
        %4609 = vrot.lane.b32.xlu0 %v4563, 32
        %v4610 = vpop.permute.xlu0 %4609
        %4611 = vrot.lane.b32.xlu0 %v4564, 32
        %v4612 = vpop.permute.xlu0 %4611
        %4629 = vmatpush.msra.mxu0 %v4612
        %4630 = vmatpush.msra.mxu0 %v4610
        %4631 = vmatpush.msra.mxu0 %v4608
        %4632 = vmatpush.msra.mxu0 %v4606
        %4633 = vmatpush.msra.mxu0 %v4604
        %4634 = vmatpush.msra.mxu0 %v4602
        %4635 = vmatpush.msra.mxu0 %v4600
        %4636 = vmatpush.msra.mxu0 %v4598
        %4637 = vmatpush.msra.mxu0 %v4596
        %4638 = vmatpush.msra.mxu0 %v4594
        %4639 = vmatpush.msra.mxu0 %v4592
        %4640 = vmatpush.msra.mxu0 %v4590
        %4641 = vmatpush.msra.mxu0 %v4588
        %4642 = vmatpush.msra.mxu0 %v4586
        %4643 = vmatpush.msra.mxu0 %v4584
        %4644 = vmatpush.msra.mxu0 %v4582
        %4645 = vmatmul.f32.gmra.mxu0 %v332
        %v4646 = vpop.f32.mrf.mxu0
        %v4647 = vadd.f32 0.0, %v4646
        %4648 = vmatmul.f32.gmra.mxu0 %v333
        %v4649 = vpop.f32.mrf.mxu0
        %v4650 = vadd.f32 0.0, %v4649
        %4651 = vmatmul.f32.gmra.mxu0 %v334
        %v4652 = vpop.f32.mrf.mxu0
        %v4653 = vadd.f32 0.0, %v4652
        %4654 = vmatmul.f32.gmra.mxu0 %v335
        %v4655 = vpop.f32.mrf.mxu0
        %v4656 = vadd.f32 0.0, %v4655
        %4657 = vmatmul.f32.gmra.mxu0 %v336
        %v4658 = vpop.f32.mrf.mxu0
        %v4659 = vadd.f32 0.0, %v4658
        %4660 = vmatmul.f32.gmra.mxu0 %v337
        %v4661 = vpop.f32.mrf.mxu0
        %v4662 = vadd.f32 0.0, %v4661
        %4663 = vmatmul.f32.gmra.mxu0 %v338
        %v4664 = vpop.f32.mrf.mxu0
        %v4665 = vadd.f32 0.0, %v4664
        %4666 = vmatmul.f32.gmra.mxu0 %v339
        %v4667 = vpop.f32.mrf.mxu0
        %v4668 = vadd.f32 0.0, %v4667
        %4669 = vmatmul.f32.gmra.mxu0 %v340
        %v4670 = vpop.f32.mrf.mxu0
        %v4671 = vadd.f32 0.0, %v4670
        %4672 = vmatmul.f32.gmra.mxu0 %v341
        %v4673 = vpop.f32.mrf.mxu0
        %v4674 = vadd.f32 0.0, %v4673
        %4675 = vmatmul.f32.gmra.mxu0 %v342
        %v4676 = vpop.f32.mrf.mxu0
        %v4677 = vadd.f32 0.0, %v4676
        %4678 = vmatmul.f32.gmra.mxu0 %v343
        %v4679 = vpop.f32.mrf.mxu0
        %v4680 = vadd.f32 0.0, %v4679
        %4681 = vmatmul.f32.gmra.mxu0 %v344
        %v4682 = vpop.f32.mrf.mxu0
        %v4683 = vadd.f32 0.0, %v4682
        %4684 = vmatmul.f32.gmra.mxu0 %v345
        %v4685 = vpop.f32.mrf.mxu0
        %v4686 = vadd.f32 0.0, %v4685
        %4687 = vmatmul.f32.gmra.mxu0 %v346
        %v4688 = vpop.f32.mrf.mxu0
        %v4689 = vadd.f32 0.0, %v4688
        %4690 = vmatmul.f32.gmra.mxu0 %v347
        %v4691 = vpop.f32.mrf.mxu0
        %v4692 = vadd.f32 0.0, %v4691
        %4693 = vdwg.mxu0
        %v4695 = vsel %vm873, %v4647, 0
        %v4698 = vsel %vm873, %v4650, 0
        %v4701 = vsel %vm873, %v4653, 0
        %v4704 = vsel %vm873, %v4656, 0
        %v4707 = vsel %vm873, %v4659, 0
        %v4710 = vsel %vm873, %v4662, 0
        %v4713 = vsel %vm873, %v4665, 0
        %v4716 = vsel %vm873, %v4668, 0
        %v4719 = vsel %vm873, %v4671, 0
        %v4722 = vsel %vm873, %v4674, 0
        %v4725 = vsel %vm873, %v4677, 0
        %v4728 = vsel %vm873, %v4680, 0
        %v4731 = vsel %vm873, %v4683, 0
        %v4734 = vsel %vm873, %v4686, 0
        %v4737 = vsel %vm873, %v4689, 0
        %v4740 = vsel %vm873, %v4692, 0
        %4742 = vmatpush.msra.mxu0 0.0
        %4743 = vmatpush.msra.mxu0 0.0
        %4744 = vmatpush.msra.mxu0 0.0
        %4745 = vmatpush.msra.mxu0 0.0
        %4746 = vmatpush.msra.mxu0 0.0
        %4747 = vmatpush.msra.mxu0 0.0
        %4748 = vmatpush.msra.mxu0 0.0
        %4749 = vmatpush.msra.mxu0 0.0
        %4750 = vmatpush.msra.mxu0 0.0
        %4751 = vmatpush.msra.mxu0 0.0
        %4752 = vmatpush.msra.mxu0 0.0
        %4753 = vmatpush.msra.mxu0 0.0
        %4754 = vmatpush.msra.mxu0 %v353
        %4755 = vmatpush.msra.mxu0 %v352
        %4756 = vmatpush.msra.mxu0 %v351
        %4757 = vmatpush.msra.mxu0 %v350
        %4758 = vmatmul.f32.gmra.mxu0 %v4695
        %v4759 = vpop.f32.mrf.mxu0
        %v4760 = vadd.f32 0.0, %v4759
        %4761 = vmatmul.f32.gmra.mxu0 %v4698
        %v4762 = vpop.f32.mrf.mxu0
        %v4763 = vadd.f32 0.0, %v4762
        %4764 = vmatmul.f32.gmra.mxu0 %v4701
        %v4765 = vpop.f32.mrf.mxu0
        %v4766 = vadd.f32 0.0, %v4765
        %4767 = vmatmul.f32.gmra.mxu0 %v4704
        %v4768 = vpop.f32.mrf.mxu0
        %v4769 = vadd.f32 0.0, %v4768
        %4770 = vmatmul.f32.gmra.mxu0 %v4707
        %v4771 = vpop.f32.mrf.mxu0
        %v4772 = vadd.f32 0.0, %v4771
        %4773 = vmatmul.f32.gmra.mxu0 %v4710
        %v4774 = vpop.f32.mrf.mxu0
        %v4775 = vadd.f32 0.0, %v4774
        %4776 = vmatmul.f32.gmra.mxu0 %v4713
        %v4777 = vpop.f32.mrf.mxu0
        %v4778 = vadd.f32 0.0, %v4777
        %4779 = vmatmul.f32.gmra.mxu0 %v4716
        %v4780 = vpop.f32.mrf.mxu0
        %v4781 = vadd.f32 0.0, %v4780
        %4782 = vmatmul.f32.gmra.mxu0 %v4719
        %v4783 = vpop.f32.mrf.mxu0
        %v4784 = vadd.f32 0.0, %v4783
        %4785 = vmatmul.f32.gmra.mxu0 %v4722
        %v4786 = vpop.f32.mrf.mxu0
        %v4787 = vadd.f32 0.0, %v4786
        %4788 = vmatmul.f32.gmra.mxu0 %v4725
        %v4789 = vpop.f32.mrf.mxu0
        %v4790 = vadd.f32 0.0, %v4789
        %4791 = vmatmul.f32.gmra.mxu0 %v4728
        %v4792 = vpop.f32.mrf.mxu0
        %v4793 = vadd.f32 0.0, %v4792
        %4794 = vmatmul.f32.gmra.mxu0 %v4731
        %v4795 = vpop.f32.mrf.mxu0
        %v4796 = vadd.f32 0.0, %v4795
        %4797 = vmatmul.f32.gmra.mxu0 %v4734
        %v4798 = vpop.f32.mrf.mxu0
        %v4799 = vadd.f32 0.0, %v4798
        %4800 = vmatmul.f32.gmra.mxu0 %v4737
        %v4801 = vpop.f32.mrf.mxu0
        %v4802 = vadd.f32 0.0, %v4801
        %4803 = vmatmul.f32.gmra.mxu0 %v4740
        %v4804 = vpop.f32.mrf.mxu0
        %v4805 = vadd.f32 0.0, %v4804
        %4806 = vdwg.mxu0
        %v4807 = vadd.f32 %v425, %v4760
        %v4808 = vadd.f32 %v428, %v4763
        %v4809 = vadd.f32 %v431, %v4766
        %v4810 = vadd.f32 %v434, %v4769
        %v4811 = vadd.f32 %v437, %v4772
        %v4812 = vadd.f32 %v440, %v4775
        %v4813 = vadd.f32 %v443, %v4778
        %v4814 = vadd.f32 %v446, %v4781
        %v4815 = vadd.f32 %v449, %v4784
        %v4816 = vadd.f32 %v452, %v4787
        %v4817 = vadd.f32 %v455, %v4790
        %v4818 = vadd.f32 %v458, %v4793
        %v4819 = vadd.f32 %v461, %v4796
        %v4820 = vadd.f32 %v464, %v4799
        %v4821 = vadd.f32 %v467, %v4802
        %v4822 = vadd.f32 %v470, %v4805
        %v4823 = vmul.f32 %v4807, 0.5
        %v4824 = vmul.f32 %v4808, 0.5
        %v4825 = vmul.f32 %v4809, 0.5
        %v4826 = vmul.f32 %v4810, 0.5
        %v4827 = vmul.f32 %v4811, 0.5
        %v4828 = vmul.f32 %v4812, 0.5
        %v4829 = vmul.f32 %v4813, 0.5
        %v4830 = vmul.f32 %v4814, 0.5
        %v4831 = vmul.f32 %v4815, 0.5
        %v4832 = vmul.f32 %v4816, 0.5
        %v4833 = vmul.f32 %v4817, 0.5
        %v4834 = vmul.f32 %v4818, 0.5
        %v4835 = vmul.f32 %v4819, 0.5
        %v4836 = vmul.f32 %v4820, 0.5
        %v4837 = vmul.f32 %v4821, 0.5
        %v4838 = vmul.f32 %v4822, 0.5
        %v4839 = vtanh.pop %v4823
        %v4840 = vtanh.pop %v4824
        %v4841 = vtanh.pop %v4825
        %v4842 = vtanh.pop %v4826
        %v4843 = vtanh.pop %v4827
        %v4844 = vtanh.pop %v4828
        %v4845 = vtanh.pop %v4829
        %v4846 = vtanh.pop %v4830
        %v4847 = vtanh.pop %v4831
        %v4848 = vtanh.pop %v4832
        %v4849 = vtanh.pop %v4833
        %v4850 = vtanh.pop %v4834
        %v4851 = vtanh.pop %v4835
        %v4852 = vtanh.pop %v4836
        %v4853 = vtanh.pop %v4837
        %v4854 = vtanh.pop %v4838
        %v4855 = vmul.f32 %v4839, 0.5
        %v4856 = vmul.f32 %v4840, 0.5
        %v4857 = vmul.f32 %v4841, 0.5
        %v4858 = vmul.f32 %v4842, 0.5
        %v4859 = vmul.f32 %v4843, 0.5
        %v4860 = vmul.f32 %v4844, 0.5
        %v4861 = vmul.f32 %v4845, 0.5
        %v4862 = vmul.f32 %v4846, 0.5
        %v4863 = vmul.f32 %v4847, 0.5
        %v4864 = vmul.f32 %v4848, 0.5
        %v4865 = vmul.f32 %v4849, 0.5
        %v4866 = vmul.f32 %v4850, 0.5
        %v4867 = vmul.f32 %v4851, 0.5
        %v4868 = vmul.f32 %v4852, 0.5
        %v4869 = vmul.f32 %v4853, 0.5
        %v4870 = vmul.f32 %v4854, 0.5
        %v4871 = vadd.f32 %v4855, 0.5
        %v4872 = vadd.f32 %v4856, 0.5
        %v4873 = vadd.f32 %v4857, 0.5
        %v4874 = vadd.f32 %v4858, 0.5
        %v4875 = vadd.f32 %v4859, 0.5
        %v4876 = vadd.f32 %v4860, 0.5
        %v4877 = vadd.f32 %v4861, 0.5
        %v4878 = vadd.f32 %v4862, 0.5
        %v4879 = vadd.f32 %v4863, 0.5
        %v4880 = vadd.f32 %v4864, 0.5
        %v4881 = vadd.f32 %v4865, 0.5
        %v4882 = vadd.f32 %v4866, 0.5
        %v4883 = vadd.f32 %v4867, 0.5
        %v4884 = vadd.f32 %v4868, 0.5
        %v4885 = vadd.f32 %v4869, 0.5
        %v4886 = vadd.f32 %v4870, 0.5
        %v4887 = vmul.f32 %v4871, 2.0
        %v4888 = vmul.f32 %v4872, 2.0
        %v4889 = vmul.f32 %v4873, 2.0
        %v4890 = vmul.f32 %v4874, 2.0
        %v4891 = vmul.f32 %v4875, 2.0
        %v4892 = vmul.f32 %v4876, 2.0
        %v4893 = vmul.f32 %v4877, 2.0
        %v4894 = vmul.f32 %v4878, 2.0
        %v4895 = vmul.f32 %v4879, 2.0
        %v4896 = vmul.f32 %v4880, 2.0
        %v4897 = vmul.f32 %v4881, 2.0
        %v4898 = vmul.f32 %v4882, 2.0
        %v4899 = vmul.f32 %v4883, 2.0
        %v4900 = vmul.f32 %v4884, 2.0
        %v4901 = vmul.f32 %v4885, 2.0
        %v4902 = vmul.f32 %v4886, 2.0
        %v4903 = vsub.f32 %v4887, 1.0
        %v4904 = vsub.f32 %v4888, 1.0
        %v4905 = vsub.f32 %v4889, 1.0
        %v4906 = vsub.f32 %v4890, 1.0
        %v4907 = vsub.f32 %v4891, 1.0
        %v4908 = vsub.f32 %v4892, 1.0
        %v4909 = vsub.f32 %v4893, 1.0
        %v4910 = vsub.f32 %v4894, 1.0
        %v4911 = vsub.f32 %v4895, 1.0
        %v4912 = vsub.f32 %v4896, 1.0
        %v4913 = vsub.f32 %v4897, 1.0
        %v4914 = vsub.f32 %v4898, 1.0
        %v4915 = vsub.f32 %v4899, 1.0
        %v4916 = vsub.f32 %v4900, 1.0
        %v4917 = vsub.f32 %v4901, 1.0
        %v4918 = vsub.f32 %v4902, 1.0
        %v4919 = vmul.f32 %v4871, %v4453
        %v4920 = vmul.f32 %v4872, %v4454
        %v4921 = vmul.f32 %v4873, %v4455
        %v4922 = vmul.f32 %v4874, %v4456
        %v4923 = vmul.f32 %v4875, %v4457
        %v4924 = vmul.f32 %v4876, %v4458
        %v4925 = vmul.f32 %v4877, %v4459
        %v4926 = vmul.f32 %v4878, %v4460
        %v4927 = vmul.f32 %v4879, %v4461
        %v4928 = vmul.f32 %v4880, %v4462
        %v4929 = vmul.f32 %v4881, %v4463
        %v4930 = vmul.f32 %v4882, %v4464
        %v4931 = vmul.f32 %v4883, %v4465
        %v4932 = vmul.f32 %v4884, %v4466
        %v4933 = vmul.f32 %v4885, %v4467
        %v4934 = vmul.f32 %v4886, %v4468
        %4951 = vrot.lane.b32.xlu0 %v4903, 64
        %v4952 = vpop.permute.xlu0 %4951
        %4953 = vrot.lane.b32.xlu0 %v4904, 64
        %v4954 = vpop.permute.xlu0 %4953
        %4955 = vrot.lane.b32.xlu0 %v4905, 64
        %v4956 = vpop.permute.xlu0 %4955
        %4957 = vrot.lane.b32.xlu0 %v4906, 64
        %v4958 = vpop.permute.xlu0 %4957
        %4959 = vrot.lane.b32.xlu0 %v4907, 64
        %v4960 = vpop.permute.xlu0 %4959
        %4961 = vrot.lane.b32.xlu0 %v4908, 64
        %v4962 = vpop.permute.xlu0 %4961
        %4963 = vrot.lane.b32.xlu0 %v4909, 64
        %v4964 = vpop.permute.xlu0 %4963
        %4965 = vrot.lane.b32.xlu0 %v4910, 64
        %v4966 = vpop.permute.xlu0 %4965
        %4967 = vrot.lane.b32.xlu0 %v4911, 64
        %v4968 = vpop.permute.xlu0 %4967
        %4969 = vrot.lane.b32.xlu0 %v4912, 64
        %v4970 = vpop.permute.xlu0 %4969
        %4971 = vrot.lane.b32.xlu0 %v4913, 64
        %v4972 = vpop.permute.xlu0 %4971
        %4973 = vrot.lane.b32.xlu0 %v4914, 64
        %v4974 = vpop.permute.xlu0 %4973
        %4975 = vrot.lane.b32.xlu0 %v4915, 64
        %v4976 = vpop.permute.xlu0 %4975
        %4977 = vrot.lane.b32.xlu0 %v4916, 64
        %v4978 = vpop.permute.xlu0 %4977
        %4979 = vrot.lane.b32.xlu0 %v4917, 64
        %v4980 = vpop.permute.xlu0 %4979
        %4981 = vrot.lane.b32.xlu0 %v4918, 64
        %v4982 = vpop.permute.xlu0 %4981
        %v4999 = vmul.f32 %v4871, %v4952
        %v5000 = vmul.f32 %v4872, %v4954
        %v5001 = vmul.f32 %v4873, %v4956
        %v5002 = vmul.f32 %v4874, %v4958
        %v5003 = vmul.f32 %v4875, %v4960
        %v5004 = vmul.f32 %v4876, %v4962
        %v5005 = vmul.f32 %v4877, %v4964
        %v5006 = vmul.f32 %v4878, %v4966
        %v5007 = vmul.f32 %v4879, %v4968
        %v5008 = vmul.f32 %v4880, %v4970
        %v5009 = vmul.f32 %v4881, %v4972
        %v5010 = vmul.f32 %v4882, %v4974
        %v5011 = vmul.f32 %v4883, %v4976
        %v5012 = vmul.f32 %v4884, %v4978
        %v5013 = vmul.f32 %v4885, %v4980
        %v5014 = vmul.f32 %v4886, %v4982
        %5031 = vrot.lane.b32.xlu0 %v4999, 32
        %v5032 = vpop.permute.xlu0 %5031
        %5033 = vrot.lane.b32.xlu0 %v5000, 32
        %v5034 = vpop.permute.xlu0 %5033
        %5035 = vrot.lane.b32.xlu0 %v5001, 32
        %v5036 = vpop.permute.xlu0 %5035
        %5037 = vrot.lane.b32.xlu0 %v5002, 32
        %v5038 = vpop.permute.xlu0 %5037
        %5039 = vrot.lane.b32.xlu0 %v5003, 32
        %v5040 = vpop.permute.xlu0 %5039
        %5041 = vrot.lane.b32.xlu0 %v5004, 32
        %v5042 = vpop.permute.xlu0 %5041
        %5043 = vrot.lane.b32.xlu0 %v5005, 32
        %v5044 = vpop.permute.xlu0 %5043
        %5045 = vrot.lane.b32.xlu0 %v5006, 32
        %v5046 = vpop.permute.xlu0 %5045
        %5047 = vrot.lane.b32.xlu0 %v5007, 32
        %v5048 = vpop.permute.xlu0 %5047
        %5049 = vrot.lane.b32.xlu0 %v5008, 32
        %v5050 = vpop.permute.xlu0 %5049
        %5051 = vrot.lane.b32.xlu0 %v5009, 32
        %v5052 = vpop.permute.xlu0 %5051
        %5053 = vrot.lane.b32.xlu0 %v5010, 32
        %v5054 = vpop.permute.xlu0 %5053
        %5055 = vrot.lane.b32.xlu0 %v5011, 32
        %v5056 = vpop.permute.xlu0 %5055
        %5057 = vrot.lane.b32.xlu0 %v5012, 32
        %v5058 = vpop.permute.xlu0 %5057
        %5059 = vrot.lane.b32.xlu0 %v5013, 32
        %v5060 = vpop.permute.xlu0 %5059
        %5061 = vrot.lane.b32.xlu0 %v5014, 32
        %v5062 = vpop.permute.xlu0 %5061
        %v5079 = vadd.f32 %v4919, %v5032
        %v5080 = vadd.f32 %v4920, %v5034
        %v5081 = vadd.f32 %v4921, %v5036
        %v5082 = vadd.f32 %v4922, %v5038
        %v5083 = vadd.f32 %v4923, %v5040
        %v5084 = vadd.f32 %v4924, %v5042
        %v5085 = vadd.f32 %v4925, %v5044
        %v5086 = vadd.f32 %v4926, %v5046
        %v5087 = vadd.f32 %v4927, %v5048
        %v5088 = vadd.f32 %v4928, %v5050
        %v5089 = vadd.f32 %v4929, %v5052
        %v5090 = vadd.f32 %v4930, %v5054
        %v5091 = vadd.f32 %v4931, %v5056
        %v5092 = vadd.f32 %v4932, %v5058
        %v5093 = vadd.f32 %v4933, %v5060
        %v5094 = vadd.f32 %v4934, %v5062
        %v5095 = vtanh.pop %v5079
        %v5096 = vtanh.pop %v5080
        %v5097 = vtanh.pop %v5081
        %v5098 = vtanh.pop %v5082
        %v5099 = vtanh.pop %v5083
        %v5100 = vtanh.pop %v5084
        %v5101 = vtanh.pop %v5085
        %v5102 = vtanh.pop %v5086
        %v5103 = vtanh.pop %v5087
        %v5104 = vtanh.pop %v5088
        %v5105 = vtanh.pop %v5089
        %v5106 = vtanh.pop %v5090
        %v5107 = vtanh.pop %v5091
        %v5108 = vtanh.pop %v5092
        %v5109 = vtanh.pop %v5093
        %v5110 = vtanh.pop %v5094
        %5127 = vrot.lane.b32.xlu0 %v5095, 64
        %v5128 = vpop.permute.xlu0 %5127
        %5129 = vrot.lane.b32.xlu0 %v5096, 64
        %v5130 = vpop.permute.xlu0 %5129
        %5131 = vrot.lane.b32.xlu0 %v5097, 64
        %v5132 = vpop.permute.xlu0 %5131
        %5133 = vrot.lane.b32.xlu0 %v5098, 64
        %v5134 = vpop.permute.xlu0 %5133
        %5135 = vrot.lane.b32.xlu0 %v5099, 64
        %v5136 = vpop.permute.xlu0 %5135
        %5137 = vrot.lane.b32.xlu0 %v5100, 64
        %v5138 = vpop.permute.xlu0 %5137
        %5139 = vrot.lane.b32.xlu0 %v5101, 64
        %v5140 = vpop.permute.xlu0 %5139
        %5141 = vrot.lane.b32.xlu0 %v5102, 64
        %v5142 = vpop.permute.xlu0 %5141
        %5143 = vrot.lane.b32.xlu0 %v5103, 64
        %v5144 = vpop.permute.xlu0 %5143
        %5145 = vrot.lane.b32.xlu0 %v5104, 64
        %v5146 = vpop.permute.xlu0 %5145
        %5147 = vrot.lane.b32.xlu0 %v5105, 64
        %v5148 = vpop.permute.xlu0 %5147
        %5149 = vrot.lane.b32.xlu0 %v5106, 64
        %v5150 = vpop.permute.xlu0 %5149
        %5151 = vrot.lane.b32.xlu0 %v5107, 64
        %v5152 = vpop.permute.xlu0 %5151
        %5153 = vrot.lane.b32.xlu0 %v5108, 64
        %v5154 = vpop.permute.xlu0 %5153
        %5155 = vrot.lane.b32.xlu0 %v5109, 64
        %v5156 = vpop.permute.xlu0 %5155
        %5157 = vrot.lane.b32.xlu0 %v5110, 64
        %v5158 = vpop.permute.xlu0 %5157
        %v5175 = vmul.f32 %v4871, %v5128
        %v5176 = vmul.f32 %v4872, %v5130
        %v5177 = vmul.f32 %v4873, %v5132
        %v5178 = vmul.f32 %v4874, %v5134
        %v5179 = vmul.f32 %v4875, %v5136
        %v5180 = vmul.f32 %v4876, %v5138
        %v5181 = vmul.f32 %v4877, %v5140
        %v5182 = vmul.f32 %v4878, %v5142
        %v5183 = vmul.f32 %v4879, %v5144
        %v5184 = vmul.f32 %v4880, %v5146
        %v5185 = vmul.f32 %v4881, %v5148
        %v5186 = vmul.f32 %v4882, %v5150
        %v5187 = vmul.f32 %v4883, %v5152
        %v5188 = vmul.f32 %v4884, %v5154
        %v5189 = vmul.f32 %v4885, %v5156
        %v5190 = vmul.f32 %v4886, %v5158
        %5207 = vrot.lane.b32.xlu0 %v5175, 32
        %v5208 = vpop.permute.xlu0 %5207
        %5209 = vrot.lane.b32.xlu0 %v5176, 32
        %v5210 = vpop.permute.xlu0 %5209
        %5211 = vrot.lane.b32.xlu0 %v5177, 32
        %v5212 = vpop.permute.xlu0 %5211
        %5213 = vrot.lane.b32.xlu0 %v5178, 32
        %v5214 = vpop.permute.xlu0 %5213
        %5215 = vrot.lane.b32.xlu0 %v5179, 32
        %v5216 = vpop.permute.xlu0 %5215
        %5217 = vrot.lane.b32.xlu0 %v5180, 32
        %v5218 = vpop.permute.xlu0 %5217
        %5219 = vrot.lane.b32.xlu0 %v5181, 32
        %v5220 = vpop.permute.xlu0 %5219
        %5221 = vrot.lane.b32.xlu0 %v5182, 32
        %v5222 = vpop.permute.xlu0 %5221
        %5223 = vrot.lane.b32.xlu0 %v5183, 32
        %v5224 = vpop.permute.xlu0 %5223
        %5225 = vrot.lane.b32.xlu0 %v5184, 32
        %v5226 = vpop.permute.xlu0 %5225
        %5227 = vrot.lane.b32.xlu0 %v5185, 32
        %v5228 = vpop.permute.xlu0 %5227
        %5229 = vrot.lane.b32.xlu0 %v5186, 32
        %v5230 = vpop.permute.xlu0 %5229
        %5231 = vrot.lane.b32.xlu0 %v5187, 32
        %v5232 = vpop.permute.xlu0 %5231
        %5233 = vrot.lane.b32.xlu0 %v5188, 32
        %v5234 = vpop.permute.xlu0 %5233
        %5235 = vrot.lane.b32.xlu0 %v5189, 32
        %v5236 = vpop.permute.xlu0 %5235
        %5237 = vrot.lane.b32.xlu0 %v5190, 32
        %v5238 = vpop.permute.xlu0 %5237
        %5255 = vmatpush.msra.mxu0 %v5238
        %5256 = vmatpush.msra.mxu0 %v5236
        %5257 = vmatpush.msra.mxu0 %v5234
        %5258 = vmatpush.msra.mxu0 %v5232
        %5259 = vmatpush.msra.mxu0 %v5230
        %5260 = vmatpush.msra.mxu0 %v5228
        %5261 = vmatpush.msra.mxu0 %v5226
        %5262 = vmatpush.msra.mxu0 %v5224
        %5263 = vmatpush.msra.mxu0 %v5222
        %5264 = vmatpush.msra.mxu0 %v5220
        %5265 = vmatpush.msra.mxu0 %v5218
        %5266 = vmatpush.msra.mxu0 %v5216
        %5267 = vmatpush.msra.mxu0 %v5214
        %5268 = vmatpush.msra.mxu0 %v5212
        %5269 = vmatpush.msra.mxu0 %v5210
        %5270 = vmatpush.msra.mxu0 %v5208
        %5271 = vmatmul.f32.gmra.mxu0 %v332
        %v5272 = vpop.f32.mrf.mxu0
        %v5273 = vadd.f32 0.0, %v5272
        %5274 = vmatmul.f32.gmra.mxu0 %v333
        %v5275 = vpop.f32.mrf.mxu0
        %v5276 = vadd.f32 0.0, %v5275
        %5277 = vmatmul.f32.gmra.mxu0 %v334
        %v5278 = vpop.f32.mrf.mxu0
        %v5279 = vadd.f32 0.0, %v5278
        %5280 = vmatmul.f32.gmra.mxu0 %v335
        %v5281 = vpop.f32.mrf.mxu0
        %v5282 = vadd.f32 0.0, %v5281
        %5283 = vmatmul.f32.gmra.mxu0 %v336
        %v5284 = vpop.f32.mrf.mxu0
        %v5285 = vadd.f32 0.0, %v5284
        %5286 = vmatmul.f32.gmra.mxu0 %v337
        %v5287 = vpop.f32.mrf.mxu0
        %v5288 = vadd.f32 0.0, %v5287
        %5289 = vmatmul.f32.gmra.mxu0 %v338
        %v5290 = vpop.f32.mrf.mxu0
        %v5291 = vadd.f32 0.0, %v5290
        %5292 = vmatmul.f32.gmra.mxu0 %v339
        %v5293 = vpop.f32.mrf.mxu0
        %v5294 = vadd.f32 0.0, %v5293
        %5295 = vmatmul.f32.gmra.mxu0 %v340
        %v5296 = vpop.f32.mrf.mxu0
        %v5297 = vadd.f32 0.0, %v5296
        %5298 = vmatmul.f32.gmra.mxu0 %v341
        %v5299 = vpop.f32.mrf.mxu0
        %v5300 = vadd.f32 0.0, %v5299
        %5301 = vmatmul.f32.gmra.mxu0 %v342
        %v5302 = vpop.f32.mrf.mxu0
        %v5303 = vadd.f32 0.0, %v5302
        %5304 = vmatmul.f32.gmra.mxu0 %v343
        %v5305 = vpop.f32.mrf.mxu0
        %v5306 = vadd.f32 0.0, %v5305
        %5307 = vmatmul.f32.gmra.mxu0 %v344
        %v5308 = vpop.f32.mrf.mxu0
        %v5309 = vadd.f32 0.0, %v5308
        %5310 = vmatmul.f32.gmra.mxu0 %v345
        %v5311 = vpop.f32.mrf.mxu0
        %v5312 = vadd.f32 0.0, %v5311
        %5313 = vmatmul.f32.gmra.mxu0 %v346
        %v5314 = vpop.f32.mrf.mxu0
        %v5315 = vadd.f32 0.0, %v5314
        %5316 = vmatmul.f32.gmra.mxu0 %v347
        %v5317 = vpop.f32.mrf.mxu0
        %v5318 = vadd.f32 0.0, %v5317
        %5319 = vdwg.mxu0
        %v5321 = vsel %vm873, %v5273, 0
        %v5324 = vsel %vm873, %v5276, 0
        %v5327 = vsel %vm873, %v5279, 0
        %v5330 = vsel %vm873, %v5282, 0
        %v5333 = vsel %vm873, %v5285, 0
        %v5336 = vsel %vm873, %v5288, 0
        %v5339 = vsel %vm873, %v5291, 0
        %v5342 = vsel %vm873, %v5294, 0
        %v5345 = vsel %vm873, %v5297, 0
        %v5348 = vsel %vm873, %v5300, 0
        %v5351 = vsel %vm873, %v5303, 0
        %v5354 = vsel %vm873, %v5306, 0
        %v5357 = vsel %vm873, %v5309, 0
        %v5360 = vsel %vm873, %v5312, 0
        %v5363 = vsel %vm873, %v5315, 0
        %v5366 = vsel %vm873, %v5318, 0
        %5368 = vmatpush.msra.mxu0 0.0
        %5369 = vmatpush.msra.mxu0 0.0
        %5370 = vmatpush.msra.mxu0 0.0
        %5371 = vmatpush.msra.mxu0 0.0
        %5372 = vmatpush.msra.mxu0 0.0
        %5373 = vmatpush.msra.mxu0 0.0
        %5374 = vmatpush.msra.mxu0 0.0
        %5375 = vmatpush.msra.mxu0 0.0
        %5376 = vmatpush.msra.mxu0 0.0
        %5377 = vmatpush.msra.mxu0 0.0
        %5378 = vmatpush.msra.mxu0 0.0
        %5379 = vmatpush.msra.mxu0 0.0
        %5380 = vmatpush.msra.mxu0 %v353
        %5381 = vmatpush.msra.mxu0 %v352
        %5382 = vmatpush.msra.mxu0 %v351
        %5383 = vmatpush.msra.mxu0 %v350
        %5384 = vmatmul.f32.gmra.mxu0 %v5321
        %v5385 = vpop.f32.mrf.mxu0
        %v5386 = vadd.f32 0.0, %v5385
        %5387 = vmatmul.f32.gmra.mxu0 %v5324
        %v5388 = vpop.f32.mrf.mxu0
        %v5389 = vadd.f32 0.0, %v5388
        %5390 = vmatmul.f32.gmra.mxu0 %v5327
        %v5391 = vpop.f32.mrf.mxu0
        %v5392 = vadd.f32 0.0, %v5391
        %5393 = vmatmul.f32.gmra.mxu0 %v5330
        %v5394 = vpop.f32.mrf.mxu0
        %v5395 = vadd.f32 0.0, %v5394
        %5396 = vmatmul.f32.gmra.mxu0 %v5333
        %v5397 = vpop.f32.mrf.mxu0
        %v5398 = vadd.f32 0.0, %v5397
        %5399 = vmatmul.f32.gmra.mxu0 %v5336
        %v5400 = vpop.f32.mrf.mxu0
        %v5401 = vadd.f32 0.0, %v5400
        %5402 = vmatmul.f32.gmra.mxu0 %v5339
        %v5403 = vpop.f32.mrf.mxu0
        %v5404 = vadd.f32 0.0, %v5403
        %5405 = vmatmul.f32.gmra.mxu0 %v5342
        %v5406 = vpop.f32.mrf.mxu0
        %v5407 = vadd.f32 0.0, %v5406
        %5408 = vmatmul.f32.gmra.mxu0 %v5345
        %v5409 = vpop.f32.mrf.mxu0
        %v5410 = vadd.f32 0.0, %v5409
        %5411 = vmatmul.f32.gmra.mxu0 %v5348
        %v5412 = vpop.f32.mrf.mxu0
        %v5413 = vadd.f32 0.0, %v5412
        %5414 = vmatmul.f32.gmra.mxu0 %v5351
        %v5415 = vpop.f32.mrf.mxu0
        %v5416 = vadd.f32 0.0, %v5415
        %5417 = vmatmul.f32.gmra.mxu0 %v5354
        %v5418 = vpop.f32.mrf.mxu0
        %v5419 = vadd.f32 0.0, %v5418
        %5420 = vmatmul.f32.gmra.mxu0 %v5357
        %v5421 = vpop.f32.mrf.mxu0
        %v5422 = vadd.f32 0.0, %v5421
        %5423 = vmatmul.f32.gmra.mxu0 %v5360
        %v5424 = vpop.f32.mrf.mxu0
        %v5425 = vadd.f32 0.0, %v5424
        %5426 = vmatmul.f32.gmra.mxu0 %v5363
        %v5427 = vpop.f32.mrf.mxu0
        %v5428 = vadd.f32 0.0, %v5427
        %5429 = vmatmul.f32.gmra.mxu0 %v5366
        %v5430 = vpop.f32.mrf.mxu0
        %v5431 = vadd.f32 0.0, %v5430
        %5432 = vdwg.mxu0
        %v5433 = vadd.f32 %v425, %v5386
        %v5434 = vadd.f32 %v428, %v5389
        %v5435 = vadd.f32 %v431, %v5392
        %v5436 = vadd.f32 %v434, %v5395
        %v5437 = vadd.f32 %v437, %v5398
        %v5438 = vadd.f32 %v440, %v5401
        %v5439 = vadd.f32 %v443, %v5404
        %v5440 = vadd.f32 %v446, %v5407
        %v5441 = vadd.f32 %v449, %v5410
        %v5442 = vadd.f32 %v452, %v5413
        %v5443 = vadd.f32 %v455, %v5416
        %v5444 = vadd.f32 %v458, %v5419
        %v5445 = vadd.f32 %v461, %v5422
        %v5446 = vadd.f32 %v464, %v5425
        %v5447 = vadd.f32 %v467, %v5428
        %v5448 = vadd.f32 %v470, %v5431
        %v5449 = vmul.f32 %v5433, 0.5
        %v5450 = vmul.f32 %v5434, 0.5
        %v5451 = vmul.f32 %v5435, 0.5
        %v5452 = vmul.f32 %v5436, 0.5
        %v5453 = vmul.f32 %v5437, 0.5
        %v5454 = vmul.f32 %v5438, 0.5
        %v5455 = vmul.f32 %v5439, 0.5
        %v5456 = vmul.f32 %v5440, 0.5
        %v5457 = vmul.f32 %v5441, 0.5
        %v5458 = vmul.f32 %v5442, 0.5
        %v5459 = vmul.f32 %v5443, 0.5
        %v5460 = vmul.f32 %v5444, 0.5
        %v5461 = vmul.f32 %v5445, 0.5
        %v5462 = vmul.f32 %v5446, 0.5
        %v5463 = vmul.f32 %v5447, 0.5
        %v5464 = vmul.f32 %v5448, 0.5
        %v5465 = vtanh.pop %v5449
        %v5466 = vtanh.pop %v5450
        %v5467 = vtanh.pop %v5451
        %v5468 = vtanh.pop %v5452
        %v5469 = vtanh.pop %v5453
        %v5470 = vtanh.pop %v5454
        %v5471 = vtanh.pop %v5455
        %v5472 = vtanh.pop %v5456
        %v5473 = vtanh.pop %v5457
        %v5474 = vtanh.pop %v5458
        %v5475 = vtanh.pop %v5459
        %v5476 = vtanh.pop %v5460
        %v5477 = vtanh.pop %v5461
        %v5478 = vtanh.pop %v5462
        %v5479 = vtanh.pop %v5463
        %v5480 = vtanh.pop %v5464
        %v5481 = vmul.f32 %v5465, 0.5
        %v5482 = vmul.f32 %v5466, 0.5
        %v5483 = vmul.f32 %v5467, 0.5
        %v5484 = vmul.f32 %v5468, 0.5
        %v5485 = vmul.f32 %v5469, 0.5
        %v5486 = vmul.f32 %v5470, 0.5
        %v5487 = vmul.f32 %v5471, 0.5
        %v5488 = vmul.f32 %v5472, 0.5
        %v5489 = vmul.f32 %v5473, 0.5
        %v5490 = vmul.f32 %v5474, 0.5
        %v5491 = vmul.f32 %v5475, 0.5
        %v5492 = vmul.f32 %v5476, 0.5
        %v5493 = vmul.f32 %v5477, 0.5
        %v5494 = vmul.f32 %v5478, 0.5
        %v5495 = vmul.f32 %v5479, 0.5
        %v5496 = vmul.f32 %v5480, 0.5
        %v5497 = vadd.f32 %v5481, 0.5
        %v5498 = vadd.f32 %v5482, 0.5
        %v5499 = vadd.f32 %v5483, 0.5
        %v5500 = vadd.f32 %v5484, 0.5
        %v5501 = vadd.f32 %v5485, 0.5
        %v5502 = vadd.f32 %v5486, 0.5
        %v5503 = vadd.f32 %v5487, 0.5
        %v5504 = vadd.f32 %v5488, 0.5
        %v5505 = vadd.f32 %v5489, 0.5
        %v5506 = vadd.f32 %v5490, 0.5
        %v5507 = vadd.f32 %v5491, 0.5
        %v5508 = vadd.f32 %v5492, 0.5
        %v5509 = vadd.f32 %v5493, 0.5
        %v5510 = vadd.f32 %v5494, 0.5
        %v5511 = vadd.f32 %v5495, 0.5
        %v5512 = vadd.f32 %v5496, 0.5
        %v5513 = vmul.f32 %v5497, 2.0
        %v5514 = vmul.f32 %v5498, 2.0
        %v5515 = vmul.f32 %v5499, 2.0
        %v5516 = vmul.f32 %v5500, 2.0
        %v5517 = vmul.f32 %v5501, 2.0
        %v5518 = vmul.f32 %v5502, 2.0
        %v5519 = vmul.f32 %v5503, 2.0
        %v5520 = vmul.f32 %v5504, 2.0
        %v5521 = vmul.f32 %v5505, 2.0
        %v5522 = vmul.f32 %v5506, 2.0
        %v5523 = vmul.f32 %v5507, 2.0
        %v5524 = vmul.f32 %v5508, 2.0
        %v5525 = vmul.f32 %v5509, 2.0
        %v5526 = vmul.f32 %v5510, 2.0
        %v5527 = vmul.f32 %v5511, 2.0
        %v5528 = vmul.f32 %v5512, 2.0
        %v5529 = vsub.f32 %v5513, 1.0
        %v5530 = vsub.f32 %v5514, 1.0
        %v5531 = vsub.f32 %v5515, 1.0
        %v5532 = vsub.f32 %v5516, 1.0
        %v5533 = vsub.f32 %v5517, 1.0
        %v5534 = vsub.f32 %v5518, 1.0
        %v5535 = vsub.f32 %v5519, 1.0
        %v5536 = vsub.f32 %v5520, 1.0
        %v5537 = vsub.f32 %v5521, 1.0
        %v5538 = vsub.f32 %v5522, 1.0
        %v5539 = vsub.f32 %v5523, 1.0
        %v5540 = vsub.f32 %v5524, 1.0
        %v5541 = vsub.f32 %v5525, 1.0
        %v5542 = vsub.f32 %v5526, 1.0
        %v5543 = vsub.f32 %v5527, 1.0
        %v5544 = vsub.f32 %v5528, 1.0
        %v5545 = vmul.f32 %v5497, %v5079
        %v5546 = vmul.f32 %v5498, %v5080
        %v5547 = vmul.f32 %v5499, %v5081
        %v5548 = vmul.f32 %v5500, %v5082
        %v5549 = vmul.f32 %v5501, %v5083
        %v5550 = vmul.f32 %v5502, %v5084
        %v5551 = vmul.f32 %v5503, %v5085
        %v5552 = vmul.f32 %v5504, %v5086
        %v5553 = vmul.f32 %v5505, %v5087
        %v5554 = vmul.f32 %v5506, %v5088
        %v5555 = vmul.f32 %v5507, %v5089
        %v5556 = vmul.f32 %v5508, %v5090
        %v5557 = vmul.f32 %v5509, %v5091
        %v5558 = vmul.f32 %v5510, %v5092
        %v5559 = vmul.f32 %v5511, %v5093
        %v5560 = vmul.f32 %v5512, %v5094
        %5577 = vrot.lane.b32.xlu0 %v5529, 64
        %v5578 = vpop.permute.xlu0 %5577
        %5579 = vrot.lane.b32.xlu0 %v5530, 64
        %v5580 = vpop.permute.xlu0 %5579
        %5581 = vrot.lane.b32.xlu0 %v5531, 64
        %v5582 = vpop.permute.xlu0 %5581
        %5583 = vrot.lane.b32.xlu0 %v5532, 64
        %v5584 = vpop.permute.xlu0 %5583
        %5585 = vrot.lane.b32.xlu0 %v5533, 64
        %v5586 = vpop.permute.xlu0 %5585
        %5587 = vrot.lane.b32.xlu0 %v5534, 64
        %v5588 = vpop.permute.xlu0 %5587
        %5589 = vrot.lane.b32.xlu0 %v5535, 64
        %v5590 = vpop.permute.xlu0 %5589
        %5591 = vrot.lane.b32.xlu0 %v5536, 64
        %v5592 = vpop.permute.xlu0 %5591
        %5593 = vrot.lane.b32.xlu0 %v5537, 64
        %v5594 = vpop.permute.xlu0 %5593
        %5595 = vrot.lane.b32.xlu0 %v5538, 64
        %v5596 = vpop.permute.xlu0 %5595
        %5597 = vrot.lane.b32.xlu0 %v5539, 64
        %v5598 = vpop.permute.xlu0 %5597
        %5599 = vrot.lane.b32.xlu0 %v5540, 64
        %v5600 = vpop.permute.xlu0 %5599
        %5601 = vrot.lane.b32.xlu0 %v5541, 64
        %v5602 = vpop.permute.xlu0 %5601
        %5603 = vrot.lane.b32.xlu0 %v5542, 64
        %v5604 = vpop.permute.xlu0 %5603
        %5605 = vrot.lane.b32.xlu0 %v5543, 64
        %v5606 = vpop.permute.xlu0 %5605
        %5607 = vrot.lane.b32.xlu0 %v5544, 64
        %v5608 = vpop.permute.xlu0 %5607
        %v5625 = vmul.f32 %v5497, %v5578
        %v5626 = vmul.f32 %v5498, %v5580
        %v5627 = vmul.f32 %v5499, %v5582
        %v5628 = vmul.f32 %v5500, %v5584
        %v5629 = vmul.f32 %v5501, %v5586
        %v5630 = vmul.f32 %v5502, %v5588
        %v5631 = vmul.f32 %v5503, %v5590
        %v5632 = vmul.f32 %v5504, %v5592
        %v5633 = vmul.f32 %v5505, %v5594
        %v5634 = vmul.f32 %v5506, %v5596
        %v5635 = vmul.f32 %v5507, %v5598
        %v5636 = vmul.f32 %v5508, %v5600
        %v5637 = vmul.f32 %v5509, %v5602
        %v5638 = vmul.f32 %v5510, %v5604
        %v5639 = vmul.f32 %v5511, %v5606
        %v5640 = vmul.f32 %v5512, %v5608
        %5657 = vrot.lane.b32.xlu0 %v5625, 32
        %v5658 = vpop.permute.xlu0 %5657
        %5659 = vrot.lane.b32.xlu0 %v5626, 32
        %v5660 = vpop.permute.xlu0 %5659
        %5661 = vrot.lane.b32.xlu0 %v5627, 32
        %v5662 = vpop.permute.xlu0 %5661
        %5663 = vrot.lane.b32.xlu0 %v5628, 32
        %v5664 = vpop.permute.xlu0 %5663
        %5665 = vrot.lane.b32.xlu0 %v5629, 32
        %v5666 = vpop.permute.xlu0 %5665
        %5667 = vrot.lane.b32.xlu0 %v5630, 32
        %v5668 = vpop.permute.xlu0 %5667
        %5669 = vrot.lane.b32.xlu0 %v5631, 32
        %v5670 = vpop.permute.xlu0 %5669
        %5671 = vrot.lane.b32.xlu0 %v5632, 32
        %v5672 = vpop.permute.xlu0 %5671
        %5673 = vrot.lane.b32.xlu0 %v5633, 32
        %v5674 = vpop.permute.xlu0 %5673
        %5675 = vrot.lane.b32.xlu0 %v5634, 32
        %v5676 = vpop.permute.xlu0 %5675
        %5677 = vrot.lane.b32.xlu0 %v5635, 32
        %v5678 = vpop.permute.xlu0 %5677
        %5679 = vrot.lane.b32.xlu0 %v5636, 32
        %v5680 = vpop.permute.xlu0 %5679
        %5681 = vrot.lane.b32.xlu0 %v5637, 32
        %v5682 = vpop.permute.xlu0 %5681
        %5683 = vrot.lane.b32.xlu0 %v5638, 32
        %v5684 = vpop.permute.xlu0 %5683
        %5685 = vrot.lane.b32.xlu0 %v5639, 32
        %v5686 = vpop.permute.xlu0 %5685
        %5687 = vrot.lane.b32.xlu0 %v5640, 32
        %v5688 = vpop.permute.xlu0 %5687
        %v5705 = vadd.f32 %v5545, %v5658
        %v5706 = vadd.f32 %v5546, %v5660
        %v5707 = vadd.f32 %v5547, %v5662
        %v5708 = vadd.f32 %v5548, %v5664
        %v5709 = vadd.f32 %v5549, %v5666
        %v5710 = vadd.f32 %v5550, %v5668
        %v5711 = vadd.f32 %v5551, %v5670
        %v5712 = vadd.f32 %v5552, %v5672
        %v5713 = vadd.f32 %v5553, %v5674
        %v5714 = vadd.f32 %v5554, %v5676
        %v5715 = vadd.f32 %v5555, %v5678
        %v5716 = vadd.f32 %v5556, %v5680
        %v5717 = vadd.f32 %v5557, %v5682
        %v5718 = vadd.f32 %v5558, %v5684
        %v5719 = vadd.f32 %v5559, %v5686
        %v5720 = vadd.f32 %v5560, %v5688
        %v5721 = vtanh.pop %v5705
        %v5722 = vtanh.pop %v5706
        %v5723 = vtanh.pop %v5707
        %v5724 = vtanh.pop %v5708
        %v5725 = vtanh.pop %v5709
        %v5726 = vtanh.pop %v5710
        %v5727 = vtanh.pop %v5711
        %v5728 = vtanh.pop %v5712
        %v5729 = vtanh.pop %v5713
        %v5730 = vtanh.pop %v5714
        %v5731 = vtanh.pop %v5715
        %v5732 = vtanh.pop %v5716
        %v5733 = vtanh.pop %v5717
        %v5734 = vtanh.pop %v5718
        %v5735 = vtanh.pop %v5719
        %v5736 = vtanh.pop %v5720
        %5753 = vrot.lane.b32.xlu0 %v5721, 64
        %v5754 = vpop.permute.xlu0 %5753
        %5755 = vrot.lane.b32.xlu0 %v5722, 64
        %v5756 = vpop.permute.xlu0 %5755
        %5757 = vrot.lane.b32.xlu0 %v5723, 64
        %v5758 = vpop.permute.xlu0 %5757
        %5759 = vrot.lane.b32.xlu0 %v5724, 64
        %v5760 = vpop.permute.xlu0 %5759
        %5761 = vrot.lane.b32.xlu0 %v5725, 64
        %v5762 = vpop.permute.xlu0 %5761
        %5763 = vrot.lane.b32.xlu0 %v5726, 64
        %v5764 = vpop.permute.xlu0 %5763
        %5765 = vrot.lane.b32.xlu0 %v5727, 64
        %v5766 = vpop.permute.xlu0 %5765
        %5767 = vrot.lane.b32.xlu0 %v5728, 64
        %v5768 = vpop.permute.xlu0 %5767
        %5769 = vrot.lane.b32.xlu0 %v5729, 64
        %v5770 = vpop.permute.xlu0 %5769
        %5771 = vrot.lane.b32.xlu0 %v5730, 64
        %v5772 = vpop.permute.xlu0 %5771
        %5773 = vrot.lane.b32.xlu0 %v5731, 64
        %v5774 = vpop.permute.xlu0 %5773
        %5775 = vrot.lane.b32.xlu0 %v5732, 64
        %v5776 = vpop.permute.xlu0 %5775
        %5777 = vrot.lane.b32.xlu0 %v5733, 64
        %v5778 = vpop.permute.xlu0 %5777
        %5779 = vrot.lane.b32.xlu0 %v5734, 64
        %v5780 = vpop.permute.xlu0 %5779
        %5781 = vrot.lane.b32.xlu0 %v5735, 64
        %v5782 = vpop.permute.xlu0 %5781
        %5783 = vrot.lane.b32.xlu0 %v5736, 64
        %v5784 = vpop.permute.xlu0 %5783
        %v5801 = vmul.f32 %v5497, %v5754
        %v5802 = vmul.f32 %v5498, %v5756
        %v5803 = vmul.f32 %v5499, %v5758
        %v5804 = vmul.f32 %v5500, %v5760
        %v5805 = vmul.f32 %v5501, %v5762
        %v5806 = vmul.f32 %v5502, %v5764
        %v5807 = vmul.f32 %v5503, %v5766
        %v5808 = vmul.f32 %v5504, %v5768
        %v5809 = vmul.f32 %v5505, %v5770
        %v5810 = vmul.f32 %v5506, %v5772
        %v5811 = vmul.f32 %v5507, %v5774
        %v5812 = vmul.f32 %v5508, %v5776
        %v5813 = vmul.f32 %v5509, %v5778
        %v5814 = vmul.f32 %v5510, %v5780
        %v5815 = vmul.f32 %v5511, %v5782
        %v5816 = vmul.f32 %v5512, %v5784
        %5833 = vrot.lane.b32.xlu0 %v5801, 32
        %v5834 = vpop.permute.xlu0 %5833
        %5835 = vrot.lane.b32.xlu0 %v5802, 32
        %v5836 = vpop.permute.xlu0 %5835
        %5837 = vrot.lane.b32.xlu0 %v5803, 32
        %v5838 = vpop.permute.xlu0 %5837
        %5839 = vrot.lane.b32.xlu0 %v5804, 32
        %v5840 = vpop.permute.xlu0 %5839
        %5841 = vrot.lane.b32.xlu0 %v5805, 32
        %v5842 = vpop.permute.xlu0 %5841
        %5843 = vrot.lane.b32.xlu0 %v5806, 32
        %v5844 = vpop.permute.xlu0 %5843
        %5845 = vrot.lane.b32.xlu0 %v5807, 32
        %v5846 = vpop.permute.xlu0 %5845
        %5847 = vrot.lane.b32.xlu0 %v5808, 32
        %v5848 = vpop.permute.xlu0 %5847
        %5849 = vrot.lane.b32.xlu0 %v5809, 32
        %v5850 = vpop.permute.xlu0 %5849
        %5851 = vrot.lane.b32.xlu0 %v5810, 32
        %v5852 = vpop.permute.xlu0 %5851
        %5853 = vrot.lane.b32.xlu0 %v5811, 32
        %v5854 = vpop.permute.xlu0 %5853
        %5855 = vrot.lane.b32.xlu0 %v5812, 32
        %v5856 = vpop.permute.xlu0 %5855
        %5857 = vrot.lane.b32.xlu0 %v5813, 32
        %v5858 = vpop.permute.xlu0 %5857
        %5859 = vrot.lane.b32.xlu0 %v5814, 32
        %v5860 = vpop.permute.xlu0 %5859
        %5861 = vrot.lane.b32.xlu0 %v5815, 32
        %v5862 = vpop.permute.xlu0 %5861
        %5863 = vrot.lane.b32.xlu0 %v5816, 32
        %v5864 = vpop.permute.xlu0 %5863
        %5881 = vmatpush.msra.mxu0 %v5864
        %5882 = vmatpush.msra.mxu0 %v5862
        %5883 = vmatpush.msra.mxu0 %v5860
        %5884 = vmatpush.msra.mxu0 %v5858
        %5885 = vmatpush.msra.mxu0 %v5856
        %5886 = vmatpush.msra.mxu0 %v5854
        %5887 = vmatpush.msra.mxu0 %v5852
        %5888 = vmatpush.msra.mxu0 %v5850
        %5889 = vmatpush.msra.mxu0 %v5848
        %5890 = vmatpush.msra.mxu0 %v5846
        %5891 = vmatpush.msra.mxu0 %v5844
        %5892 = vmatpush.msra.mxu0 %v5842
        %5893 = vmatpush.msra.mxu0 %v5840
        %5894 = vmatpush.msra.mxu0 %v5838
        %5895 = vmatpush.msra.mxu0 %v5836
        %5896 = vmatpush.msra.mxu0 %v5834
        %5897 = vmatmul.f32.gmra.mxu0 %v332
        %v5898 = vpop.f32.mrf.mxu0
        %v5899 = vadd.f32 0.0, %v5898
        %5900 = vmatmul.f32.gmra.mxu0 %v333
        %v5901 = vpop.f32.mrf.mxu0
        %v5902 = vadd.f32 0.0, %v5901
        %5903 = vmatmul.f32.gmra.mxu0 %v334
        %v5904 = vpop.f32.mrf.mxu0
        %v5905 = vadd.f32 0.0, %v5904
        %5906 = vmatmul.f32.gmra.mxu0 %v335
        %v5907 = vpop.f32.mrf.mxu0
        %v5908 = vadd.f32 0.0, %v5907
        %5909 = vmatmul.f32.gmra.mxu0 %v336
        %v5910 = vpop.f32.mrf.mxu0
        %v5911 = vadd.f32 0.0, %v5910
        %5912 = vmatmul.f32.gmra.mxu0 %v337
        %v5913 = vpop.f32.mrf.mxu0
        %v5914 = vadd.f32 0.0, %v5913
        %5915 = vmatmul.f32.gmra.mxu0 %v338
        %v5916 = vpop.f32.mrf.mxu0
        %v5917 = vadd.f32 0.0, %v5916
        %5918 = vmatmul.f32.gmra.mxu0 %v339
        %v5919 = vpop.f32.mrf.mxu0
        %v5920 = vadd.f32 0.0, %v5919
        %5921 = vmatmul.f32.gmra.mxu0 %v340
        %v5922 = vpop.f32.mrf.mxu0
        %v5923 = vadd.f32 0.0, %v5922
        %5924 = vmatmul.f32.gmra.mxu0 %v341
        %v5925 = vpop.f32.mrf.mxu0
        %v5926 = vadd.f32 0.0, %v5925
        %5927 = vmatmul.f32.gmra.mxu0 %v342
        %v5928 = vpop.f32.mrf.mxu0
        %v5929 = vadd.f32 0.0, %v5928
        %5930 = vmatmul.f32.gmra.mxu0 %v343
        %v5931 = vpop.f32.mrf.mxu0
        %v5932 = vadd.f32 0.0, %v5931
        %5933 = vmatmul.f32.gmra.mxu0 %v344
        %v5934 = vpop.f32.mrf.mxu0
        %v5935 = vadd.f32 0.0, %v5934
        %5936 = vmatmul.f32.gmra.mxu0 %v345
        %v5937 = vpop.f32.mrf.mxu0
        %v5938 = vadd.f32 0.0, %v5937
        %5939 = vmatmul.f32.gmra.mxu0 %v346
        %v5940 = vpop.f32.mrf.mxu0
        %v5941 = vadd.f32 0.0, %v5940
        %5942 = vmatmul.f32.gmra.mxu0 %v347
        %v5943 = vpop.f32.mrf.mxu0
        %v5944 = vadd.f32 0.0, %v5943
        %5945 = vdwg.mxu0
        %v5947 = vsel %vm873, %v5899, 0
        %v5950 = vsel %vm873, %v5902, 0
        %v5953 = vsel %vm873, %v5905, 0
        %v5956 = vsel %vm873, %v5908, 0
        %v5959 = vsel %vm873, %v5911, 0
        %v5962 = vsel %vm873, %v5914, 0
        %v5965 = vsel %vm873, %v5917, 0
        %v5968 = vsel %vm873, %v5920, 0
        %v5971 = vsel %vm873, %v5923, 0
        %v5974 = vsel %vm873, %v5926, 0
        %v5977 = vsel %vm873, %v5929, 0
        %v5980 = vsel %vm873, %v5932, 0
        %v5983 = vsel %vm873, %v5935, 0
        %v5986 = vsel %vm873, %v5938, 0
        %v5989 = vsel %vm873, %v5941, 0
        %v5992 = vsel %vm873, %v5944, 0
        %5994 = vmatpush.msra.mxu0 0.0
        %5995 = vmatpush.msra.mxu0 0.0
        %5996 = vmatpush.msra.mxu0 0.0
        %5997 = vmatpush.msra.mxu0 0.0
        %5998 = vmatpush.msra.mxu0 0.0
        %5999 = vmatpush.msra.mxu0 0.0
        %6000 = vmatpush.msra.mxu0 0.0
        %6001 = vmatpush.msra.mxu0 0.0
        %6002 = vmatpush.msra.mxu0 0.0
        %6003 = vmatpush.msra.mxu0 0.0
        %6004 = vmatpush.msra.mxu0 0.0
        %6005 = vmatpush.msra.mxu0 0.0
        %6006 = vmatpush.msra.mxu0 %v353
        %6007 = vmatpush.msra.mxu0 %v352
        %6008 = vmatpush.msra.mxu0 %v351
        %6009 = vmatpush.msra.mxu0 %v350
        %6010 = vmatmul.f32.gmra.mxu0 %v5947
        %v6011 = vpop.f32.mrf.mxu0
        %v6012 = vadd.f32 0.0, %v6011
        %6013 = vmatmul.f32.gmra.mxu0 %v5950
        %v6014 = vpop.f32.mrf.mxu0
        %v6015 = vadd.f32 0.0, %v6014
        %6016 = vmatmul.f32.gmra.mxu0 %v5953
        %v6017 = vpop.f32.mrf.mxu0
        %v6018 = vadd.f32 0.0, %v6017
        %6019 = vmatmul.f32.gmra.mxu0 %v5956
        %v6020 = vpop.f32.mrf.mxu0
        %v6021 = vadd.f32 0.0, %v6020
        %6022 = vmatmul.f32.gmra.mxu0 %v5959
        %v6023 = vpop.f32.mrf.mxu0
        %v6024 = vadd.f32 0.0, %v6023
        %6025 = vmatmul.f32.gmra.mxu0 %v5962
        %v6026 = vpop.f32.mrf.mxu0
        %v6027 = vadd.f32 0.0, %v6026
        %6028 = vmatmul.f32.gmra.mxu0 %v5965
        %v6029 = vpop.f32.mrf.mxu0
        %v6030 = vadd.f32 0.0, %v6029
        %6031 = vmatmul.f32.gmra.mxu0 %v5968
        %v6032 = vpop.f32.mrf.mxu0
        %v6033 = vadd.f32 0.0, %v6032
        %6034 = vmatmul.f32.gmra.mxu0 %v5971
        %v6035 = vpop.f32.mrf.mxu0
        %v6036 = vadd.f32 0.0, %v6035
        %6037 = vmatmul.f32.gmra.mxu0 %v5974
        %v6038 = vpop.f32.mrf.mxu0
        %v6039 = vadd.f32 0.0, %v6038
        %6040 = vmatmul.f32.gmra.mxu0 %v5977
        %v6041 = vpop.f32.mrf.mxu0
        %v6042 = vadd.f32 0.0, %v6041
        %6043 = vmatmul.f32.gmra.mxu0 %v5980
        %v6044 = vpop.f32.mrf.mxu0
        %v6045 = vadd.f32 0.0, %v6044
        %6046 = vmatmul.f32.gmra.mxu0 %v5983
        %v6047 = vpop.f32.mrf.mxu0
        %v6048 = vadd.f32 0.0, %v6047
        %6049 = vmatmul.f32.gmra.mxu0 %v5986
        %v6050 = vpop.f32.mrf.mxu0
        %v6051 = vadd.f32 0.0, %v6050
        %6052 = vmatmul.f32.gmra.mxu0 %v5989
        %v6053 = vpop.f32.mrf.mxu0
        %v6054 = vadd.f32 0.0, %v6053
        %6055 = vmatmul.f32.gmra.mxu0 %v5992
        %v6056 = vpop.f32.mrf.mxu0
        %v6057 = vadd.f32 0.0, %v6056
        %6058 = vdwg.mxu0
        %v6059 = vadd.f32 %v425, %v6012
        %v6060 = vadd.f32 %v428, %v6015
        %v6061 = vadd.f32 %v431, %v6018
        %v6062 = vadd.f32 %v434, %v6021
        %v6063 = vadd.f32 %v437, %v6024
        %v6064 = vadd.f32 %v440, %v6027
        %v6065 = vadd.f32 %v443, %v6030
        %v6066 = vadd.f32 %v446, %v6033
        %v6067 = vadd.f32 %v449, %v6036
        %v6068 = vadd.f32 %v452, %v6039
        %v6069 = vadd.f32 %v455, %v6042
        %v6070 = vadd.f32 %v458, %v6045
        %v6071 = vadd.f32 %v461, %v6048
        %v6072 = vadd.f32 %v464, %v6051
        %v6073 = vadd.f32 %v467, %v6054
        %v6074 = vadd.f32 %v470, %v6057
        %v6075 = vmul.f32 %v6059, 0.5
        %v6076 = vmul.f32 %v6060, 0.5
        %v6077 = vmul.f32 %v6061, 0.5
        %v6078 = vmul.f32 %v6062, 0.5
        %v6079 = vmul.f32 %v6063, 0.5
        %v6080 = vmul.f32 %v6064, 0.5
        %v6081 = vmul.f32 %v6065, 0.5
        %v6082 = vmul.f32 %v6066, 0.5
        %v6083 = vmul.f32 %v6067, 0.5
        %v6084 = vmul.f32 %v6068, 0.5
        %v6085 = vmul.f32 %v6069, 0.5
        %v6086 = vmul.f32 %v6070, 0.5
        %v6087 = vmul.f32 %v6071, 0.5
        %v6088 = vmul.f32 %v6072, 0.5
        %v6089 = vmul.f32 %v6073, 0.5
        %v6090 = vmul.f32 %v6074, 0.5
        %v6091 = vtanh.pop %v6075
        %v6092 = vtanh.pop %v6076
        %v6093 = vtanh.pop %v6077
        %v6094 = vtanh.pop %v6078
        %v6095 = vtanh.pop %v6079
        %v6096 = vtanh.pop %v6080
        %v6097 = vtanh.pop %v6081
        %v6098 = vtanh.pop %v6082
        %v6099 = vtanh.pop %v6083
        %v6100 = vtanh.pop %v6084
        %v6101 = vtanh.pop %v6085
        %v6102 = vtanh.pop %v6086
        %v6103 = vtanh.pop %v6087
        %v6104 = vtanh.pop %v6088
        %v6105 = vtanh.pop %v6089
        %v6106 = vtanh.pop %v6090
        %v6107 = vmul.f32 %v6091, 0.5
        %v6108 = vmul.f32 %v6092, 0.5
        %v6109 = vmul.f32 %v6093, 0.5
        %v6110 = vmul.f32 %v6094, 0.5
        %v6111 = vmul.f32 %v6095, 0.5
        %v6112 = vmul.f32 %v6096, 0.5
        %v6113 = vmul.f32 %v6097, 0.5
        %v6114 = vmul.f32 %v6098, 0.5
        %v6115 = vmul.f32 %v6099, 0.5
        %v6116 = vmul.f32 %v6100, 0.5
        %v6117 = vmul.f32 %v6101, 0.5
        %v6118 = vmul.f32 %v6102, 0.5
        %v6119 = vmul.f32 %v6103, 0.5
        %v6120 = vmul.f32 %v6104, 0.5
        %v6121 = vmul.f32 %v6105, 0.5
        %v6122 = vmul.f32 %v6106, 0.5
        %v6123 = vadd.f32 %v6107, 0.5
        %v6124 = vadd.f32 %v6108, 0.5
        %v6125 = vadd.f32 %v6109, 0.5
        %v6126 = vadd.f32 %v6110, 0.5
        %v6127 = vadd.f32 %v6111, 0.5
        %v6128 = vadd.f32 %v6112, 0.5
        %v6129 = vadd.f32 %v6113, 0.5
        %v6130 = vadd.f32 %v6114, 0.5
        %v6131 = vadd.f32 %v6115, 0.5
        %v6132 = vadd.f32 %v6116, 0.5
        %v6133 = vadd.f32 %v6117, 0.5
        %v6134 = vadd.f32 %v6118, 0.5
        %v6135 = vadd.f32 %v6119, 0.5
        %v6136 = vadd.f32 %v6120, 0.5
        %v6137 = vadd.f32 %v6121, 0.5
        %v6138 = vadd.f32 %v6122, 0.5
        %v6139 = vmul.f32 %v6123, 2.0
        %v6140 = vmul.f32 %v6124, 2.0
        %v6141 = vmul.f32 %v6125, 2.0
        %v6142 = vmul.f32 %v6126, 2.0
        %v6143 = vmul.f32 %v6127, 2.0
        %v6144 = vmul.f32 %v6128, 2.0
        %v6145 = vmul.f32 %v6129, 2.0
        %v6146 = vmul.f32 %v6130, 2.0
        %v6147 = vmul.f32 %v6131, 2.0
        %v6148 = vmul.f32 %v6132, 2.0
        %v6149 = vmul.f32 %v6133, 2.0
        %v6150 = vmul.f32 %v6134, 2.0
        %v6151 = vmul.f32 %v6135, 2.0
        %v6152 = vmul.f32 %v6136, 2.0
        %v6153 = vmul.f32 %v6137, 2.0
        %v6154 = vmul.f32 %v6138, 2.0
        %v6155 = vsub.f32 %v6139, 1.0
        %v6156 = vsub.f32 %v6140, 1.0
        %v6157 = vsub.f32 %v6141, 1.0
        %v6158 = vsub.f32 %v6142, 1.0
        %v6159 = vsub.f32 %v6143, 1.0
        %v6160 = vsub.f32 %v6144, 1.0
        %v6161 = vsub.f32 %v6145, 1.0
        %v6162 = vsub.f32 %v6146, 1.0
        %v6163 = vsub.f32 %v6147, 1.0
        %v6164 = vsub.f32 %v6148, 1.0
        %v6165 = vsub.f32 %v6149, 1.0
        %v6166 = vsub.f32 %v6150, 1.0
        %v6167 = vsub.f32 %v6151, 1.0
        %v6168 = vsub.f32 %v6152, 1.0
        %v6169 = vsub.f32 %v6153, 1.0
        %v6170 = vsub.f32 %v6154, 1.0
        %v6171 = vmul.f32 %v6123, %v5705
        %v6172 = vmul.f32 %v6124, %v5706
        %v6173 = vmul.f32 %v6125, %v5707
        %v6174 = vmul.f32 %v6126, %v5708
        %v6175 = vmul.f32 %v6127, %v5709
        %v6176 = vmul.f32 %v6128, %v5710
        %v6177 = vmul.f32 %v6129, %v5711
        %v6178 = vmul.f32 %v6130, %v5712
        %v6179 = vmul.f32 %v6131, %v5713
        %v6180 = vmul.f32 %v6132, %v5714
        %v6181 = vmul.f32 %v6133, %v5715
        %v6182 = vmul.f32 %v6134, %v5716
        %v6183 = vmul.f32 %v6135, %v5717
        %v6184 = vmul.f32 %v6136, %v5718
        %v6185 = vmul.f32 %v6137, %v5719
        %v6186 = vmul.f32 %v6138, %v5720
        %6203 = vrot.lane.b32.xlu0 %v6155, 64
        %v6204 = vpop.permute.xlu0 %6203
        %6205 = vrot.lane.b32.xlu0 %v6156, 64
        %v6206 = vpop.permute.xlu0 %6205
        %6207 = vrot.lane.b32.xlu0 %v6157, 64
        %v6208 = vpop.permute.xlu0 %6207
        %6209 = vrot.lane.b32.xlu0 %v6158, 64
        %v6210 = vpop.permute.xlu0 %6209
        %6211 = vrot.lane.b32.xlu0 %v6159, 64
        %v6212 = vpop.permute.xlu0 %6211
        %6213 = vrot.lane.b32.xlu0 %v6160, 64
        %v6214 = vpop.permute.xlu0 %6213
        %6215 = vrot.lane.b32.xlu0 %v6161, 64
        %v6216 = vpop.permute.xlu0 %6215
        %6217 = vrot.lane.b32.xlu0 %v6162, 64
        %v6218 = vpop.permute.xlu0 %6217
        %6219 = vrot.lane.b32.xlu0 %v6163, 64
        %v6220 = vpop.permute.xlu0 %6219
        %6221 = vrot.lane.b32.xlu0 %v6164, 64
        %v6222 = vpop.permute.xlu0 %6221
        %6223 = vrot.lane.b32.xlu0 %v6165, 64
        %v6224 = vpop.permute.xlu0 %6223
        %6225 = vrot.lane.b32.xlu0 %v6166, 64
        %v6226 = vpop.permute.xlu0 %6225
        %6227 = vrot.lane.b32.xlu0 %v6167, 64
        %v6228 = vpop.permute.xlu0 %6227
        %6229 = vrot.lane.b32.xlu0 %v6168, 64
        %v6230 = vpop.permute.xlu0 %6229
        %6231 = vrot.lane.b32.xlu0 %v6169, 64
        %v6232 = vpop.permute.xlu0 %6231
        %6233 = vrot.lane.b32.xlu0 %v6170, 64
        %v6234 = vpop.permute.xlu0 %6233
        %v6251 = vmul.f32 %v6123, %v6204
        %v6252 = vmul.f32 %v6124, %v6206
        %v6253 = vmul.f32 %v6125, %v6208
        %v6254 = vmul.f32 %v6126, %v6210
        %v6255 = vmul.f32 %v6127, %v6212
        %v6256 = vmul.f32 %v6128, %v6214
        %v6257 = vmul.f32 %v6129, %v6216
        %v6258 = vmul.f32 %v6130, %v6218
        %v6259 = vmul.f32 %v6131, %v6220
        %v6260 = vmul.f32 %v6132, %v6222
        %v6261 = vmul.f32 %v6133, %v6224
        %v6262 = vmul.f32 %v6134, %v6226
        %v6263 = vmul.f32 %v6135, %v6228
        %v6264 = vmul.f32 %v6136, %v6230
        %v6265 = vmul.f32 %v6137, %v6232
        %v6266 = vmul.f32 %v6138, %v6234
        %6283 = vrot.lane.b32.xlu0 %v6251, 32
        %v6284 = vpop.permute.xlu0 %6283
        %6285 = vrot.lane.b32.xlu0 %v6252, 32
        %v6286 = vpop.permute.xlu0 %6285
        %6287 = vrot.lane.b32.xlu0 %v6253, 32
        %v6288 = vpop.permute.xlu0 %6287
        %6289 = vrot.lane.b32.xlu0 %v6254, 32
        %v6290 = vpop.permute.xlu0 %6289
        %6291 = vrot.lane.b32.xlu0 %v6255, 32
        %v6292 = vpop.permute.xlu0 %6291
        %6293 = vrot.lane.b32.xlu0 %v6256, 32
        %v6294 = vpop.permute.xlu0 %6293
        %6295 = vrot.lane.b32.xlu0 %v6257, 32
        %v6296 = vpop.permute.xlu0 %6295
        %6297 = vrot.lane.b32.xlu0 %v6258, 32
        %v6298 = vpop.permute.xlu0 %6297
        %6299 = vrot.lane.b32.xlu0 %v6259, 32
        %v6300 = vpop.permute.xlu0 %6299
        %6301 = vrot.lane.b32.xlu0 %v6260, 32
        %v6302 = vpop.permute.xlu0 %6301
        %6303 = vrot.lane.b32.xlu0 %v6261, 32
        %v6304 = vpop.permute.xlu0 %6303
        %6305 = vrot.lane.b32.xlu0 %v6262, 32
        %v6306 = vpop.permute.xlu0 %6305
        %6307 = vrot.lane.b32.xlu0 %v6263, 32
        %v6308 = vpop.permute.xlu0 %6307
        %6309 = vrot.lane.b32.xlu0 %v6264, 32
        %v6310 = vpop.permute.xlu0 %6309
        %6311 = vrot.lane.b32.xlu0 %v6265, 32
        %v6312 = vpop.permute.xlu0 %6311
        %6313 = vrot.lane.b32.xlu0 %v6266, 32
        %v6314 = vpop.permute.xlu0 %6313
        %v6331 = vadd.f32 %v6171, %v6284
        %v6332 = vadd.f32 %v6172, %v6286
        %v6333 = vadd.f32 %v6173, %v6288
        %v6334 = vadd.f32 %v6174, %v6290
        %v6335 = vadd.f32 %v6175, %v6292
        %v6336 = vadd.f32 %v6176, %v6294
        %v6337 = vadd.f32 %v6177, %v6296
        %v6338 = vadd.f32 %v6178, %v6298
        %v6339 = vadd.f32 %v6179, %v6300
        %v6340 = vadd.f32 %v6180, %v6302
        %v6341 = vadd.f32 %v6181, %v6304
        %v6342 = vadd.f32 %v6182, %v6306
        %v6343 = vadd.f32 %v6183, %v6308
        %v6344 = vadd.f32 %v6184, %v6310
        %v6345 = vadd.f32 %v6185, %v6312
        %v6346 = vadd.f32 %v6186, %v6314
        %v6347 = vtanh.pop %v6331
        %v6348 = vtanh.pop %v6332
        %v6349 = vtanh.pop %v6333
        %v6350 = vtanh.pop %v6334
        %v6351 = vtanh.pop %v6335
        %v6352 = vtanh.pop %v6336
        %v6353 = vtanh.pop %v6337
        %v6354 = vtanh.pop %v6338
        %v6355 = vtanh.pop %v6339
        %v6356 = vtanh.pop %v6340
        %v6357 = vtanh.pop %v6341
        %v6358 = vtanh.pop %v6342
        %v6359 = vtanh.pop %v6343
        %v6360 = vtanh.pop %v6344
        %v6361 = vtanh.pop %v6345
        %v6362 = vtanh.pop %v6346
        %6379 = vrot.lane.b32.xlu0 %v6347, 64
        %v6380 = vpop.permute.xlu0 %6379
        %6381 = vrot.lane.b32.xlu0 %v6348, 64
        %v6382 = vpop.permute.xlu0 %6381
        %6383 = vrot.lane.b32.xlu0 %v6349, 64
        %v6384 = vpop.permute.xlu0 %6383
        %6385 = vrot.lane.b32.xlu0 %v6350, 64
        %v6386 = vpop.permute.xlu0 %6385
        %6387 = vrot.lane.b32.xlu0 %v6351, 64
        %v6388 = vpop.permute.xlu0 %6387
        %6389 = vrot.lane.b32.xlu0 %v6352, 64
        %v6390 = vpop.permute.xlu0 %6389
        %6391 = vrot.lane.b32.xlu0 %v6353, 64
        %v6392 = vpop.permute.xlu0 %6391
        %6393 = vrot.lane.b32.xlu0 %v6354, 64
        %v6394 = vpop.permute.xlu0 %6393
        %6395 = vrot.lane.b32.xlu0 %v6355, 64
        %v6396 = vpop.permute.xlu0 %6395
        %6397 = vrot.lane.b32.xlu0 %v6356, 64
        %v6398 = vpop.permute.xlu0 %6397
        %6399 = vrot.lane.b32.xlu0 %v6357, 64
        %v6400 = vpop.permute.xlu0 %6399
        %6401 = vrot.lane.b32.xlu0 %v6358, 64
        %v6402 = vpop.permute.xlu0 %6401
        %6403 = vrot.lane.b32.xlu0 %v6359, 64
        %v6404 = vpop.permute.xlu0 %6403
        %6405 = vrot.lane.b32.xlu0 %v6360, 64
        %v6406 = vpop.permute.xlu0 %6405
        %6407 = vrot.lane.b32.xlu0 %v6361, 64
        %v6408 = vpop.permute.xlu0 %6407
        %6409 = vrot.lane.b32.xlu0 %v6362, 64
        %v6410 = vpop.permute.xlu0 %6409
        %v6427 = vmul.f32 %v6123, %v6380
        %v6428 = vmul.f32 %v6124, %v6382
        %v6429 = vmul.f32 %v6125, %v6384
        %v6430 = vmul.f32 %v6126, %v6386
        %v6431 = vmul.f32 %v6127, %v6388
        %v6432 = vmul.f32 %v6128, %v6390
        %v6433 = vmul.f32 %v6129, %v6392
        %v6434 = vmul.f32 %v6130, %v6394
        %v6435 = vmul.f32 %v6131, %v6396
        %v6436 = vmul.f32 %v6132, %v6398
        %v6437 = vmul.f32 %v6133, %v6400
        %v6438 = vmul.f32 %v6134, %v6402
        %v6439 = vmul.f32 %v6135, %v6404
        %v6440 = vmul.f32 %v6136, %v6406
        %v6441 = vmul.f32 %v6137, %v6408
        %v6442 = vmul.f32 %v6138, %v6410
        %6459 = vrot.lane.b32.xlu0 %v6427, 32
        %v6460 = vpop.permute.xlu0 %6459
        %6461 = vrot.lane.b32.xlu0 %v6428, 32
        %v6462 = vpop.permute.xlu0 %6461
        %6463 = vrot.lane.b32.xlu0 %v6429, 32
        %v6464 = vpop.permute.xlu0 %6463
        %6465 = vrot.lane.b32.xlu0 %v6430, 32
        %v6466 = vpop.permute.xlu0 %6465
        %6467 = vrot.lane.b32.xlu0 %v6431, 32
        %v6468 = vpop.permute.xlu0 %6467
        %6469 = vrot.lane.b32.xlu0 %v6432, 32
        %v6470 = vpop.permute.xlu0 %6469
        %6471 = vrot.lane.b32.xlu0 %v6433, 32
        %v6472 = vpop.permute.xlu0 %6471
        %6473 = vrot.lane.b32.xlu0 %v6434, 32
        %v6474 = vpop.permute.xlu0 %6473
        %6475 = vrot.lane.b32.xlu0 %v6435, 32
        %v6476 = vpop.permute.xlu0 %6475
        %6477 = vrot.lane.b32.xlu0 %v6436, 32
        %v6478 = vpop.permute.xlu0 %6477
        %6479 = vrot.lane.b32.xlu0 %v6437, 32
        %v6480 = vpop.permute.xlu0 %6479
        %6481 = vrot.lane.b32.xlu0 %v6438, 32
        %v6482 = vpop.permute.xlu0 %6481
        %6483 = vrot.lane.b32.xlu0 %v6439, 32
        %v6484 = vpop.permute.xlu0 %6483
        %6485 = vrot.lane.b32.xlu0 %v6440, 32
        %v6486 = vpop.permute.xlu0 %6485
        %6487 = vrot.lane.b32.xlu0 %v6441, 32
        %v6488 = vpop.permute.xlu0 %6487
        %6489 = vrot.lane.b32.xlu0 %v6442, 32
        %v6490 = vpop.permute.xlu0 %6489
        %6507 = vmatpush.msra.mxu0 %v6490
        %6508 = vmatpush.msra.mxu0 %v6488
        %6509 = vmatpush.msra.mxu0 %v6486
        %6510 = vmatpush.msra.mxu0 %v6484
        %6511 = vmatpush.msra.mxu0 %v6482
        %6512 = vmatpush.msra.mxu0 %v6480
        %6513 = vmatpush.msra.mxu0 %v6478
        %6514 = vmatpush.msra.mxu0 %v6476
        %6515 = vmatpush.msra.mxu0 %v6474
        %6516 = vmatpush.msra.mxu0 %v6472
        %6517 = vmatpush.msra.mxu0 %v6470
        %6518 = vmatpush.msra.mxu0 %v6468
        %6519 = vmatpush.msra.mxu0 %v6466
        %6520 = vmatpush.msra.mxu0 %v6464
        %6521 = vmatpush.msra.mxu0 %v6462
        %6522 = vmatpush.msra.mxu0 %v6460
        %6523 = vmatmul.f32.gmra.mxu0 %v332
        %v6524 = vpop.f32.mrf.mxu0
        %v6525 = vadd.f32 0.0, %v6524
        %6526 = vmatmul.f32.gmra.mxu0 %v333
        %v6527 = vpop.f32.mrf.mxu0
        %v6528 = vadd.f32 0.0, %v6527
        %6529 = vmatmul.f32.gmra.mxu0 %v334
        %v6530 = vpop.f32.mrf.mxu0
        %v6531 = vadd.f32 0.0, %v6530
        %6532 = vmatmul.f32.gmra.mxu0 %v335
        %v6533 = vpop.f32.mrf.mxu0
        %v6534 = vadd.f32 0.0, %v6533
        %6535 = vmatmul.f32.gmra.mxu0 %v336
        %v6536 = vpop.f32.mrf.mxu0
        %v6537 = vadd.f32 0.0, %v6536
        %6538 = vmatmul.f32.gmra.mxu0 %v337
        %v6539 = vpop.f32.mrf.mxu0
        %v6540 = vadd.f32 0.0, %v6539
        %6541 = vmatmul.f32.gmra.mxu0 %v338
        %v6542 = vpop.f32.mrf.mxu0
        %v6543 = vadd.f32 0.0, %v6542
        %6544 = vmatmul.f32.gmra.mxu0 %v339
        %v6545 = vpop.f32.mrf.mxu0
        %v6546 = vadd.f32 0.0, %v6545
        %6547 = vmatmul.f32.gmra.mxu0 %v340
        %v6548 = vpop.f32.mrf.mxu0
        %v6549 = vadd.f32 0.0, %v6548
        %6550 = vmatmul.f32.gmra.mxu0 %v341
        %v6551 = vpop.f32.mrf.mxu0
        %v6552 = vadd.f32 0.0, %v6551
        %6553 = vmatmul.f32.gmra.mxu0 %v342
        %v6554 = vpop.f32.mrf.mxu0
        %v6555 = vadd.f32 0.0, %v6554
        %6556 = vmatmul.f32.gmra.mxu0 %v343
        %v6557 = vpop.f32.mrf.mxu0
        %v6558 = vadd.f32 0.0, %v6557
        %6559 = vmatmul.f32.gmra.mxu0 %v344
        %v6560 = vpop.f32.mrf.mxu0
        %v6561 = vadd.f32 0.0, %v6560
        %6562 = vmatmul.f32.gmra.mxu0 %v345
        %v6563 = vpop.f32.mrf.mxu0
        %v6564 = vadd.f32 0.0, %v6563
        %6565 = vmatmul.f32.gmra.mxu0 %v346
        %v6566 = vpop.f32.mrf.mxu0
        %v6567 = vadd.f32 0.0, %v6566
        %6568 = vmatmul.f32.gmra.mxu0 %v347
        %v6569 = vpop.f32.mrf.mxu0
        %v6570 = vadd.f32 0.0, %v6569
        %6571 = vdwg.mxu0
        %v6572 = vmax.f32 %v6525, 0.0
        %v6573 = vmax.f32 %v6528, 0.0
        %v6574 = vmax.f32 %v6531, 0.0
        %v6575 = vmax.f32 %v6534, 0.0
        %v6576 = vmax.f32 %v6537, 0.0
        %v6577 = vmax.f32 %v6540, 0.0
        %v6578 = vmax.f32 %v6543, 0.0
        %v6579 = vmax.f32 %v6546, 0.0
        %v6580 = vmax.f32 %v6549, 0.0
        %v6581 = vmax.f32 %v6552, 0.0
        %v6582 = vmax.f32 %v6555, 0.0
        %v6583 = vmax.f32 %v6558, 0.0
        %v6584 = vmax.f32 %v6561, 0.0
        %v6585 = vmax.f32 %v6564, 0.0
        %v6586 = vmax.f32 %v6567, 0.0
        %v6587 = vmax.f32 %v6570, 0.0
        %v6588 = vld [vmem:[%s5] sm:$0xff]
        %v6589 = vld [vmem:[%s5 + $0x8] sm:$0xff]
        %v6590 = vld [vmem:[%s5 + $0x10] sm:$0xff]
        %v6591 = vld [vmem:[%s5 + $0x18] sm:$0xff]
        %v6592 = vld [vmem:[%s6] sm:$0x1]
        %v6594 = vperm.slane %v6592, 0
        %v6597 = vsel %vm873, %v6572, 0
        %v6600 = vsel %vm873, %v6573, 0
        %v6603 = vsel %vm873, %v6574, 0
        %v6606 = vsel %vm873, %v6575, 0
        %v6609 = vsel %vm873, %v6576, 0
        %v6612 = vsel %vm873, %v6577, 0
        %v6615 = vsel %vm873, %v6578, 0
        %v6618 = vsel %vm873, %v6579, 0
        %v6621 = vsel %vm873, %v6580, 0
        %v6624 = vsel %vm873, %v6581, 0
        %v6627 = vsel %vm873, %v6582, 0
        %v6630 = vsel %vm873, %v6583, 0
        %v6633 = vsel %vm873, %v6584, 0
        %v6636 = vsel %vm873, %v6585, 0
        %v6639 = vsel %vm873, %v6586, 0
        %v6642 = vsel %vm873, %v6587, 0
        %6644 = vmatpush.msra.mxu0 0.0
        %6645 = vmatpush.msra.mxu0 0.0
        %6646 = vmatpush.msra.mxu0 0.0
        %6647 = vmatpush.msra.mxu0 0.0
        %6648 = vmatpush.msra.mxu0 0.0
        %6649 = vmatpush.msra.mxu0 0.0
        %6650 = vmatpush.msra.mxu0 0.0
        %6651 = vmatpush.msra.mxu0 0.0
        %6652 = vmatpush.msra.mxu0 0.0
        %6653 = vmatpush.msra.mxu0 0.0
        %6654 = vmatpush.msra.mxu0 0.0
        %6655 = vmatpush.msra.mxu0 0.0
        %6656 = vmatpush.msra.mxu0 %v6591
        %6657 = vmatpush.msra.mxu0 %v6590
        %6658 = vmatpush.msra.mxu0 %v6589
        %6659 = vmatpush.msra.mxu0 %v6588
        %6660 = vmatmul.f32.gmra.mxu0 %v6597
        %v6661 = vpop.f32.mrf.mxu0
        %v6662 = vadd.f32 %v6594, %v6661
        %6663 = vmatmul.f32.gmra.mxu0 %v6600
        %v6664 = vpop.f32.mrf.mxu0
        %v6665 = vadd.f32 %v6594, %v6664
        %6666 = vmatmul.f32.gmra.mxu0 %v6603
        %v6667 = vpop.f32.mrf.mxu0
        %v6668 = vadd.f32 %v6594, %v6667
        %6669 = vmatmul.f32.gmra.mxu0 %v6606
        %v6670 = vpop.f32.mrf.mxu0
        %v6671 = vadd.f32 %v6594, %v6670
        %6672 = vmatmul.f32.gmra.mxu0 %v6609
        %v6673 = vpop.f32.mrf.mxu0
        %v6674 = vadd.f32 %v6594, %v6673
        %6675 = vmatmul.f32.gmra.mxu0 %v6612
        %v6676 = vpop.f32.mrf.mxu0
        %v6677 = vadd.f32 %v6594, %v6676
        %6678 = vmatmul.f32.gmra.mxu0 %v6615
        %v6679 = vpop.f32.mrf.mxu0
        %v6680 = vadd.f32 %v6594, %v6679
        %6681 = vmatmul.f32.gmra.mxu0 %v6618
        %v6682 = vpop.f32.mrf.mxu0
        %v6683 = vadd.f32 %v6594, %v6682
        %6684 = vmatmul.f32.gmra.mxu0 %v6621
        %v6685 = vpop.f32.mrf.mxu0
        %v6686 = vadd.f32 %v6594, %v6685
        %6687 = vmatmul.f32.gmra.mxu0 %v6624
        %v6688 = vpop.f32.mrf.mxu0
        %v6689 = vadd.f32 %v6594, %v6688
        %6690 = vmatmul.f32.gmra.mxu0 %v6627
        %v6691 = vpop.f32.mrf.mxu0
        %v6692 = vadd.f32 %v6594, %v6691
        %6693 = vmatmul.f32.gmra.mxu0 %v6630
        %v6694 = vpop.f32.mrf.mxu0
        %v6695 = vadd.f32 %v6594, %v6694
        %6696 = vmatmul.f32.gmra.mxu0 %v6633
        %v6697 = vpop.f32.mrf.mxu0
        %v6698 = vadd.f32 %v6594, %v6697
        %6699 = vmatmul.f32.gmra.mxu0 %v6636
        %v6700 = vpop.f32.mrf.mxu0
        %v6701 = vadd.f32 %v6594, %v6700
        %6702 = vmatmul.f32.gmra.mxu0 %v6639
        %v6703 = vpop.f32.mrf.mxu0
        %v6704 = vadd.f32 %v6594, %v6703
        %6705 = vmatmul.f32.gmra.mxu0 %v6642
        %v6706 = vpop.f32.mrf.mxu0
        %v6707 = vadd.f32 %v6594, %v6706
        %6708 = vdwg.mxu0
        %vm6709 = vcmask 64512
        %6710 = vst.msk [vmem:[%s315] sm:$0xff] %vm6709, %v6662
        %6711 = vst.msk [vmem:[%s315 + $0x8] sm:$0xff] %vm6709, %v6665
        %6712 = vst.msk [vmem:[%s315 + $0x10] sm:$0xff] %vm6709, %v6668
        %6713 = vst.msk [vmem:[%s315 + $0x18] sm:$0xff] %vm6709, %v6671
        %6714 = vst.msk [vmem:[%s315 + $0x20] sm:$0xff] %vm6709, %v6674
        %6715 = vst.msk [vmem:[%s315 + $0x28] sm:$0xff] %vm6709, %v6677
        %6716 = vst.msk [vmem:[%s315 + $0x30] sm:$0xff] %vm6709, %v6680
        %6717 = vst.msk [vmem:[%s315 + $0x38] sm:$0xff] %vm6709, %v6683
        %6718 = vst.msk [vmem:[%s315 + $0x40] sm:$0xff] %vm6709, %v6686
        %6719 = vst.msk [vmem:[%s315 + $0x48] sm:$0xff] %vm6709, %v6689
        %6720 = vst.msk [vmem:[%s315 + $0x50] sm:$0xff] %vm6709, %v6692
        %6721 = vst.msk [vmem:[%s315 + $0x58] sm:$0xff] %vm6709, %v6695
        %6722 = vst.msk [vmem:[%s315 + $0x60] sm:$0xff] %vm6709, %v6698
        %6723 = vst.msk [vmem:[%s315 + $0x68] sm:$0xff] %vm6709, %v6701
        %6724 = vst.msk [vmem:[%s315 + $0x70] sm:$0xff] %vm6709, %v6704
        %6725 = vst.msk [vmem:[%s315 + $0x78] sm:$0xff] %vm6709, %v6707
        %p6726 = scmp.lt.s32.totalorder %s19, 1
        %s6727 = scalar_select %p6726, %s19, 1
        %s6728 = smul.addr %s6727, 16
        %s6729 = smul.addr %s6728, 8
        %s6730 = scalar_lea.vmem %s7, %s6729
        // Predicated region
        $region53: #{tpu_custom_call.1} parent=47 // pred_check
          %p6731 = pneg %p194
        $region54: #{tpu_custom_call.1} parent=47 // pred_check_branch
          %6733 = sbr.rel (%p6731) target = $region56
        $region55: #{tpu_custom_call.1} parent=47 // pred_region
          _
        $region56: #{tpu_custom_call.1} parent=47 // pred_fallthru
          _
      $region48: #{tpu_custom_call.1} parent=5 // pred_fallthru
        _
      %p6734 = scmp.le.s32.totalorder 2, %s14
      // Predicated region
      $region57: #{tpu_custom_call.1} parent=5 // pred_check
        %p6735 = pneg %p6734
      $region58: #{tpu_custom_call.1} parent=5 // pred_check_branch
        %6737 = sbr.rel (%p6735) target = $region60
      $region59: #{tpu_custom_call.1} parent=5 // pred_region
        %s6738 = ssub.s32 %s14, 2
        // Predicated region
        $region61: #{tpu_custom_call.1} parent=59 // pred_check
          %p6739 = pneg %p200
        $region62: #{tpu_custom_call.1} parent=59 // pred_check_branch
          %6741 = sbr.rel (%p6739) target = $region64
        $region63: #{tpu_custom_call.1} parent=59 // pred_region
          %p6742 = scmp.lt.s32.totalorder %s20, 1
          %s6743 = scalar_select %p6742, %s20, 1
          %s6744 = smul.addr %s6743, 16
          %s6745 = smul.addr %s6744, 8
          %s6746 = scalar_lea.vmem %s7, %s6745
        $region64: #{tpu_custom_call.1} parent=59 // pred_fallthru
          _
      $region60: #{tpu_custom_call.1} parent=5 // pred_fallthru
        _
    $region6: #{tpu_custom_call.1} parent=1 // loop_footer
      %s18 = sadd.s32 1, %s14
    $region7: #{tpu_custom_call.1} parent=1 // loop_footer_branch
      %13 = sbr.rel target = $region3
    $region8: #{tpu_custom_call.1} parent=1 // loop_exit
      _
    %6747 = vsyncpa [#allocation3], 1
    %s6748 = scalar_lea.sflag [#allocation3], 1
    %6749 = vsyncpa %s6748, 1

</llo_original>
